<compile_context>
chip_gen: v6e
topology: v6e:2x2x1
jax: 0.10.0
libtpu: 0.0.40
codegen_flags: <defaults>
</compile_context>

<pallas_src>
import jax
import jax.numpy as jnp
from jax.experimental import pallas as pl
from jax.experimental.pallas import tpu as pltpu


def _round_up(x, m):
    return (x + m - 1) // m * m


def _pad_gates(w, h, hp):
    """Zero-pad the trailing 4*h gate axis gate-wise to 4*hp."""
    if h == hp:
        return w
    lead = w.shape[:-1]
    w = w.reshape(*lead, 4, h)
    w = jnp.pad(w, [(0, 0)] * len(lead) + [(0, 0), (0, hp - h)])
    return w.reshape(*lead, 4 * hp)


# ----------------------------------------------------------------------------
# Fused Pallas kernel: LSTM stack (time-major) + Linear + softmax
# ----------------------------------------------------------------------------
def make_rnn_kernel(num_layers):
    def kernel(*refs):
        x_ref = refs[0]                                # (T, BB, D)    f32
        fcw_ref = refs[1 + 3 * num_layers]             # (Hp, O)       bf16
        fcb_ref = refs[2 + 3 * num_layers]             # (1, O)        f32
        out_ref = refs[3 + 3 * num_layers]             # (BB, O)       f32
        hseq_ref = refs[4 + 3 * num_layers]            # (T*BB, Hp)    f32 scratch
        gx_ref = refs[5 + 3 * num_layers]              # (T*BB, 4*Hp)  f32 scratch

        T, BB, D = x_ref.shape

        h = None
        for layer in range(num_layers):
            wih = refs[1 + 3 * layer][...]             # (D_in, 4Hp)   bf16
            whh = refs[2 + 3 * layer][...]             # (Hp, 4Hp)     bf16
            b = refs[3 + 3 * layer][...]               # (1, 4Hp)      f32
            Hp = whh.shape[0]

            # Hoisted time-parallel input projection: ONE big matmul per layer
            # (only the small h @ W_hh stays on the serial critical path).
            if layer == 0:
                x_flat = x_ref[...].reshape(T * BB, D).astype(jnp.bfloat16)
            else:
                x_flat = hseq_ref[...].astype(jnp.bfloat16)
            gx_ref[...] = jnp.dot(x_flat, wih,
                                  preferred_element_type=jnp.float32) + b

            h = jnp.zeros((BB, Hp), jnp.float32)
            c = jnp.zeros((BB, Hp), jnp.float32)
            is_last = layer == num_layers - 1
            # TODO(synk): switch to lax.fori_loop(..., unroll=2..4) with h/c in
            # VMEM scratch if T / num_layers grow beyond toy sizes.
            for t in range(T):                          # unrolled, T static
                gates = gx_ref[pl.ds(t * BB, BB), :] + jnp.dot(
                    h.astype(jnp.bfloat16), whh,
                    preferred_element_type=jnp.float32)           # (BB, 4Hp)
                # Fused activations: one wide sigmoid + one narrow tanh.
                s = jax.nn.sigmoid(gates)
                i = s[:, 0 * Hp:1 * Hp]
                f = s[:, 1 * Hp:2 * Hp]
                o = s[:, 3 * Hp:4 * Hp]
                g = jnp.tanh(gates[:, 2 * Hp:3 * Hp])
                c = f * c + i * g
                h = o * jnp.tanh(c)
                if not is_last:
                    hseq_ref[pl.ds(t * BB, BB), :] = h

        # FC + softmax epilogue on the last timestep of the last layer.
        logits = jnp.dot(h.astype(jnp.bfloat16), fcw_ref[...],
                         preferred_element_type=jnp.float32) + fcb_ref[...]
        m = jnp.max(logits, axis=1, keepdims=True)
        e = jnp.exp(logits - m)
        out_ref[...] = (e / jnp.sum(e, axis=1, keepdims=True)).astype(out_ref.dtype)

    return kernel


# ----------------------------------------------------------------------------
# Wrapper: pad batch / hidden, cast MXU operands to bf16, call the kernel
# ----------------------------------------------------------------------------
@jax.jit
def rnn_forward(x, params):
    """x: (B, T, input_dim) batch-first, like the PyTorch forward()."""
    B, T, D = x.shape
    lstm = params["lstm"]
    num_layers = len(lstm)
    H = lstm[0][1].shape[0]                 # whh_T: (H, 4H)
    Hp = _round_up(H, 128)                  # lane-align gate blocks
    O = params["fc_w_T"].shape[1]

    # Pad batch to a sublane multiple; padded rows sliced off below.
    Bp = _round_up(B, 8)
    if Bp != B:
        x = jnp.pad(x, ((0, Bp - B), (0, 0), (0, 0)))
    x_tm = jnp.transpose(x, (1, 0, 2))      # (T, Bp, D) time-major
    BB = 8 if Bp >= 16 else Bp              # batch block (v7x 2nd TC via grid)
    grid = (Bp // BB,)

    flat_inputs = [x_tm]
    in_specs = [pl.BlockSpec((T, BB, D), lambda b: (0, b, 0))]
    for layer, (wih_T, whh_T, bias) in enumerate(lstm):
        d_in = wih_T.shape[0]
        wih_p = _pad_gates(wih_T, H, Hp)                    # (d_in, 4Hp)
        if layer > 0 and Hp != H:                           # layer>0 input is padded h
            wih_p = jnp.pad(wih_p, ((0, Hp - H), (0, 0)))
            d_in = Hp
        whh_p = _pad_gates(whh_T, H, Hp)
        if Hp != H:
            whh_p = jnp.pad(whh_p, ((0, Hp - H), (0, 0)))   # (Hp, 4Hp)
        bias_p = _pad_gates(bias, H, Hp)                    # (1, 4Hp)
        flat_inputs += [wih_p.astype(jnp.bfloat16),
                        whh_p.astype(jnp.bfloat16),
                        bias_p]
        in_specs += [pl.BlockSpec((d_in, 4 * Hp), lambda b: (0, 0)),
                     pl.BlockSpec((Hp, 4 * Hp), lambda b: (0, 0)),
                     pl.BlockSpec((1, 4 * Hp), lambda b: (0, 0))]

    fcw_p = params["fc_w_T"]
    if Hp != H:
        fcw_p = jnp.pad(fcw_p, ((0, Hp - H), (0, 0)))       # zero rows: no leak
    flat_inputs += [fcw_p.astype(jnp.bfloat16), params["fc_b"]]
    in_specs += [pl.BlockSpec((Hp, O), lambda b: (0, 0)),
                 pl.BlockSpec((1, O), lambda b: (0, 0))]

    out = pl.pallas_call(
        make_rnn_kernel(num_layers),
        out_shape=jax.ShapeDtypeStruct((Bp, O), jnp.float32),
        grid=grid,
        in_specs=in_specs,
        out_specs=pl.BlockSpec((BB, O), lambda b: (b, 0)),
        scratch_shapes=[pltpu.VMEM((T * BB, Hp), jnp.float32),       # h sequence
                        pltpu.VMEM((T * BB, 4 * Hp), jnp.float32)],  # gx
        compiler_params=pltpu.CompilerParams(
            dimension_semantics=("parallel",),
            vmem_limit_bytes=32 * 1024 * 1024),
    )(*flat_inputs)
    return out[:B]


# ----------------------------------------------------------------------------
# Pure-JAX reference (unpadded f32; matches the PyTorch module semantics)
# ----------------------------------------------------------------------------
def rnn_forward_ref(x, params):
    h_seq = jnp.transpose(x, (1, 0, 2))
    for (wih_T, whh_T, b) in params["lstm"]:
        B = h_seq.shape[1]
        H = whh_T.shape[0]

        def step(carry, x_t):
            h, c = carry
            gates = x_t @ wih_T + h @ whh_T + b[0]
            i = jax.nn.sigmoid(gates[:, 0 * H:1 * H])
            f = jax.nn.sigmoid(gates[:, 1 * H:2 * H])
            g = jnp.tanh(gates[:, 2 * H:3 * H])
            o = jax.nn.sigmoid(gates[:, 3 * H:4 * H])
            c = f * c + i * g
            h = o * jnp.tanh(c)
            return (h, c), h

        init = (jnp.zeros((B, H), jnp.float32), jnp.zeros((B, H), jnp.float32))
        _, h_seq = jax.lax.scan(step, init, h_seq)
    logits = h_seq[-1] @ params["fc_w_T"] + params["fc_b"][0]
    return jax.nn.softmax(logits, axis=1)


# ----------------------------------------------------------------------------
# Deterministic parameter init (PyTorch-style uniform(-1/sqrt(H), 1/sqrt(H)))
# ----------------------------------------------------------------------------
def init_params(key, input_dim, hidden_dim, output_dim, layers):
    bound = 1.0 / jnp.sqrt(hidden_dim)
    lstm_params = []
    for layer in range(layers):
        d_in = input_dim if layer == 0 else hidden_dim
        key, k1, k2, k3, k4 = jax.random.split(key, 5)
        w_ih = jax.random.uniform(k1, (4 * hidden_dim, d_in), jnp.float32,
                                  -bound, bound)
        w_hh = jax.random.uniform(k2, (4 * hidden_dim, hidden_dim), jnp.float32,
                                  -bound, bound)
        b_ih = jax.random.uniform(k3, (4 * hidden_dim,), jnp.float32,
                                  -bound, bound)
        b_hh = jax.random.uniform(k4, (4 * hidden_dim,), jnp.float32,
                                  -bound, bound)
        # Gate order [i, f, g, o]; fused bias = b_ih + b_hh (matches nn.LSTM).
        lstm_params.append((w_ih.T, w_hh.T, (b_ih + b_hh)[None, :]))
    key, k5, k6 = jax.random.split(key, 3)
    fc_bound = 1.0 / jnp.sqrt(hidden_dim)
    fc_w = jax.random.uniform(k5, (output_dim, hidden_dim), jnp.float32,
                              -fc_bound, fc_bound)
    fc_b = jax.random.uniform(k6, (output_dim,), jnp.float32,
                              -fc_bound, fc_bound)
    return {"lstm": lstm_params, "fc_w_T": fc_w.T, "fc_b": fc_b[None, :]}


# ----------------------------------------------------------------------------
if __name__ == "__main__":
    B, T = 2, 8
    INPUT_DIM, HIDDEN_DIM, OUTPUT_DIM, LAYERS = 16, 32, 8, 2

    key = jax.random.PRNGKey(0)
    key, xk = jax.random.split(key)
    x = jax.random.normal(xk, (B, T, INPUT_DIM), jnp.float32)
    params = init_params(key, INPUT_DIM, HIDDEN_DIM, OUTPUT_DIM, LAYERS)

    out = rnn_forward(x, params)
    out = jax.block_until_ready(out)

    ref = rnn_forward_ref(x, params)
    assert out.shape == (B, OUTPUT_DIM)
    # Tolerance loosened for bf16 MXU operands (f32 accumulation kept).
    assert jnp.allclose(out, ref, rtol=2e-2, atol=2e-2), "mismatch vs reference"
    assert jnp.allclose(jnp.sum(out, axis=1), 1.0, atol=1e-5)

    print("KERNEL_OK")
</pallas_src>

<mosaic_0001>
module attributes {stable_mosaic.version = 11 : i64} {
  func.func @kernel(%arg0: i32, %arg1: memref<8x8x16xf32, #tpu.memory_space<vmem>>, %arg2: memref<16x512xbf16, #tpu.memory_space<vmem>>, %arg3: memref<128x512xbf16, #tpu.memory_space<vmem>>, %arg4: memref<1x512xf32, #tpu.memory_space<vmem>>, %arg5: memref<128x512xbf16, #tpu.memory_space<vmem>>, %arg6: memref<128x512xbf16, #tpu.memory_space<vmem>>, %arg7: memref<1x512xf32, #tpu.memory_space<vmem>>, %arg8: memref<128x8xbf16, #tpu.memory_space<vmem>>, %arg9: memref<1x8xf32, #tpu.memory_space<vmem>>, %arg10: memref<8x8xf32, #tpu.memory_space<vmem>>, %arg11: memref<64x128xf32, #tpu.memory_space<vmem>>, %arg12: memref<64x512xf32, #tpu.memory_space<vmem>>) attributes {dimension_semantics = [#tpu.dimension_semantics<parallel>], iteration_bounds = array<i64: 1>, scalar_prefetch = 0 : i64, scratch_operands = 2 : i64, tpu.core_type = #tpu.core_type<tc>, window_params = [{transform_indices = @transform_0, window_bounds = array<i64: 8, 8, 16>}, {pipeline_mode = #tpu.pipeline_mode<synchronous>, transform_indices = @transform_1, window_bounds = array<i64: 16, 512>}, {pipeline_mode = #tpu.pipeline_mode<synchronous>, transform_indices = @transform_2, window_bounds = array<i64: 128, 512>}, {pipeline_mode = #tpu.pipeline_mode<synchronous>, transform_indices = @transform_3, window_bounds = array<i64: 1, 512>}, {pipeline_mode = #tpu.pipeline_mode<synchronous>, transform_indices = @transform_4, window_bounds = array<i64: 128, 512>}, {pipeline_mode = #tpu.pipeline_mode<synchronous>, transform_indices = @transform_5, window_bounds = array<i64: 128, 512>}, {pipeline_mode = #tpu.pipeline_mode<synchronous>, transform_indices = @transform_6, window_bounds = array<i64: 1, 512>}, {pipeline_mode = #tpu.pipeline_mode<synchronous>, transform_indices = @transform_7, window_bounds = array<i64: 128, 8>}, {pipeline_mode = #tpu.pipeline_mode<synchronous>, transform_indices = @transform_8, window_bounds = array<i64: 1, 8>}, {transform_indices = @transform_9, window_bounds = array<i64: 8, 8>}]} {
    %c0 = arith.constant 0 : index
    %c0_0 = arith.constant 0 : index
    %0 = vector.load %arg2[%c0, %c0_0] : memref<16x512xbf16, #tpu.memory_space<vmem>>, vector<16x512xbf16>
    %c0_1 = arith.constant 0 : index
    %c0_2 = arith.constant 0 : index
    %1 = vector.load %arg3[%c0_1, %c0_2] : memref<128x512xbf16, #tpu.memory_space<vmem>>, vector<128x512xbf16>
    %c0_3 = arith.constant 0 : index
    %c0_4 = arith.constant 0 : index
    %2 = vector.load %arg4[%c0_3, %c0_4] : memref<1x512xf32, #tpu.memory_space<vmem>>, vector<1x512xf32>
    %c0_5 = arith.constant 0 : index
    %c0_6 = arith.constant 0 : index
    %c0_7 = arith.constant 0 : index
    %3 = vector.load %arg1[%c0_5, %c0_6, %c0_7] : memref<8x8x16xf32, #tpu.memory_space<vmem>>, vector<8x8x16xf32>
    %4 = vector.shape_cast %3 : vector<8x8x16xf32> to vector<64x16xf32>
    %5 = arith.truncf %4 : vector<64x16xf32> to vector<64x16xbf16>
    %cst = arith.constant dense<0.000000e+00> : vector<64x512xf32>
    %6 = tpu.matmul %5, %0, %cst {dimension_numbers = #tpu.dot_dimension_numbers<[1], [0], [0], [1], [0, 0, 1, 1], [], []>} : vector<64x16xbf16>, vector<16x512xbf16>, vector<64x512xf32> -> vector<64x512xf32>
    %7 = vector.broadcast %2 : vector<1x512xf32> to vector<64x512xf32>
    %8 = arith.addf %6, %7 : vector<64x512xf32>
    %c0_8 = arith.constant 0 : index
    %c0_9 = arith.constant 0 : index
    %9 = vector.load %arg12[%c0_8, %c0_9] : memref<64x512xf32, #tpu.memory_space<vmem>>, vector<64x512xf32>
    tpu.vector_store %arg12[%c0_8, %c0_9], %8 {strides = array<i32>} : memref<64x512xf32, #tpu.memory_space<vmem>>, vector<64x512xf32>,
    %cst_10 = arith.constant 0.000000e+00 : f32
    %10 = vector.broadcast %cst_10 : f32 to vector<8x128xf32>
    %cst_11 = arith.constant 0.000000e+00 : f32
    %11 = vector.broadcast %cst_11 : f32 to vector<8x128xf32>
    %c0_12 = arith.constant 0 : index
    %c0_13 = arith.constant 0 : index
    %12 = vector.load %arg12[%c0_12, %c0_13] : memref<64x512xf32, #tpu.memory_space<vmem>>, vector<8x512xf32>
    %13 = arith.truncf %10 : vector<8x128xf32> to vector<8x128xbf16>
    %cst_14 = arith.constant dense<0.000000e+00> : vector<8x512xf32>
    %14 = tpu.matmul %13, %1, %cst_14 {dimension_numbers = #tpu.dot_dimension_numbers<[1], [0], [0], [1], [0, 0, 1, 1], [], []>} : vector<8x128xbf16>, vector<128x512xbf16>, vector<8x512xf32> -> vector<8x512xf32>
    %15 = arith.addf %12, %14 : vector<8x512xf32>
    %16 = arith.negf %15 : vector<8x512xf32>
    %17 = math.exp %16 : vector<8x512xf32>
    %cst_15 = arith.constant 1.000000e+00 : f32
    %18 = vector.broadcast %cst_15 : f32 to vector<8x512xf32>
    %19 = arith.addf %18, %17 : vector<8x512xf32>
    %20 = arith.divf %18, %19 : vector<8x512xf32>
    %21 = vector.extract_strided_slice %20 {offsets = [0, 0], sizes = [8, 128], strides = [1, 1]} : vector<8x512xf32> to vector<8x128xf32>
    %22 = vector.extract_strided_slice %20 {offsets = [0, 128], sizes = [8, 128], strides = [1, 1]} : vector<8x512xf32> to vector<8x128xf32>
    %23 = vector.extract_strided_slice %20 {offsets = [0, 384], sizes = [8, 128], strides = [1, 1]} : vector<8x512xf32> to vector<8x128xf32>
    %24 = vector.extract_strided_slice %15 {offsets = [0, 256], sizes = [8, 128], strides = [1, 1]} : vector<8x512xf32> to vector<8x128xf32>
    %25 = math.tanh %24 : vector<8x128xf32>
    %26 = arith.mulf %22, %11 : vector<8x128xf32>
    %27 = arith.mulf %21, %25 : vector<8x128xf32>
    %28 = arith.addf %26, %27 : vector<8x128xf32>
    %29 = math.tanh %28 : vector<8x128xf32>
    %30 = arith.mulf %23, %29 : vector<8x128xf32>
    %c0_16 = arith.constant 0 : index
    %c0_17 = arith.constant 0 : index
    %31 = vector.load %arg11[%c0_16, %c0_17] : memref<64x128xf32, #tpu.memory_space<vmem>>, vector<8x128xf32>
    tpu.vector_store %arg11[%c0_16, %c0_17], %30 {strides = array<i32>} : memref<64x128xf32, #tpu.memory_space<vmem>>, vector<8x128xf32>,
    %c8 = arith.constant 8 : index
    %c0_18 = arith.constant 0 : index
    %32 = vector.load %arg12[%c8, %c0_18] : memref<64x512xf32, #tpu.memory_space<vmem>>, vector<8x512xf32>
    %33 = arith.truncf %30 : vector<8x128xf32> to vector<8x128xbf16>
    %cst_19 = arith.constant dense<0.000000e+00> : vector<8x512xf32>
    %34 = tpu.matmul %33, %1, %cst_19 {dimension_numbers = #tpu.dot_dimension_numbers<[1], [0], [0], [1], [0, 0, 1, 1], [], []>} : vector<8x128xbf16>, vector<128x512xbf16>, vector<8x512xf32> -> vector<8x512xf32>
    %35 = arith.addf %32, %34 : vector<8x512xf32>
    %36 = arith.negf %35 : vector<8x512xf32>
    %37 = math.exp %36 : vector<8x512xf32>
    %cst_20 = arith.constant 1.000000e+00 : f32
    %38 = vector.broadcast %cst_20 : f32 to vector<8x512xf32>
    %39 = arith.addf %38, %37 : vector<8x512xf32>
    %40 = arith.divf %38, %39 : vector<8x512xf32>
    %41 = vector.extract_strided_slice %40 {offsets = [0, 0], sizes = [8, 128], strides = [1, 1]} : vector<8x512xf32> to vector<8x128xf32>
    %42 = vector.extract_strided_slice %40 {offsets = [0, 128], sizes = [8, 128], strides = [1, 1]} : vector<8x512xf32> to vector<8x128xf32>
    %43 = vector.extract_strided_slice %40 {offsets = [0, 384], sizes = [8, 128], strides = [1, 1]} : vector<8x512xf32> to vector<8x128xf32>
    %44 = vector.extract_strided_slice %35 {offsets = [0, 256], sizes = [8, 128], strides = [1, 1]} : vector<8x512xf32> to vector<8x128xf32>
    %45 = math.tanh %44 : vector<8x128xf32>
    %46 = arith.mulf %42, %28 : vector<8x128xf32>
    %47 = arith.mulf %41, %45 : vector<8x128xf32>
    %48 = arith.addf %46, %47 : vector<8x128xf32>
    %49 = math.tanh %48 : vector<8x128xf32>
    %50 = arith.mulf %43, %49 : vector<8x128xf32>
    %c8_21 = arith.constant 8 : index
    %c0_22 = arith.constant 0 : index
    %51 = vector.load %arg11[%c8_21, %c0_22] : memref<64x128xf32, #tpu.memory_space<vmem>>, vector<8x128xf32>
    tpu.vector_store %arg11[%c8_21, %c0_22], %50 {strides = array<i32>} : memref<64x128xf32, #tpu.memory_space<vmem>>, vector<8x128xf32>,
    %c16 = arith.constant 16 : index
    %c0_23 = arith.constant 0 : index
    %52 = vector.load %arg12[%c16, %c0_23] : memref<64x512xf32, #tpu.memory_space<vmem>>, vector<8x512xf32>
    %53 = arith.truncf %50 : vector<8x128xf32> to vector<8x128xbf16>
    %cst_24 = arith.constant dense<0.000000e+00> : vector<8x512xf32>
    %54 = tpu.matmul %53, %1, %cst_24 {dimension_numbers = #tpu.dot_dimension_numbers<[1], [0], [0], [1], [0, 0, 1, 1], [], []>} : vector<8x128xbf16>, vector<128x512xbf16>, vector<8x512xf32> -> vector<8x512xf32>
    %55 = arith.addf %52, %54 : vector<8x512xf32>
    %56 = arith.negf %55 : vector<8x512xf32>
    %57 = math.exp %56 : vector<8x512xf32>
    %cst_25 = arith.constant 1.000000e+00 : f32
    %58 = vector.broadcast %cst_25 : f32 to vector<8x512xf32>
    %59 = arith.addf %58, %57 : vector<8x512xf32>
    %60 = arith.divf %58, %59 : vector<8x512xf32>
    %61 = vector.extract_strided_slice %60 {offsets = [0, 0], sizes = [8, 128], strides = [1, 1]} : vector<8x512xf32> to vector<8x128xf32>
    %62 = vector.extract_strided_slice %60 {offsets = [0, 128], sizes = [8, 128], strides = [1, 1]} : vector<8x512xf32> to vector<8x128xf32>
    %63 = vector.extract_strided_slice %60 {offsets = [0, 384], sizes = [8, 128], strides = [1, 1]} : vector<8x512xf32> to vector<8x128xf32>
    %64 = vector.extract_strided_slice %55 {offsets = [0, 256], sizes = [8, 128], strides = [1, 1]} : vector<8x512xf32> to vector<8x128xf32>
    %65 = math.tanh %64 : vector<8x128xf32>
    %66 = arith.mulf %62, %48 : vector<8x128xf32>
    %67 = arith.mulf %61, %65 : vector<8x128xf32>
    %68 = arith.addf %66, %67 : vector<8x128xf32>
    %69 = math.tanh %68 : vector<8x128xf32>
    %70 = arith.mulf %63, %69 : vector<8x128xf32>
    %c16_26 = arith.constant 16 : index
    %c0_27 = arith.constant 0 : index
    %71 = vector.load %arg11[%c16_26, %c0_27] : memref<64x128xf32, #tpu.memory_space<vmem>>, vector<8x128xf32>
    tpu.vector_store %arg11[%c16_26, %c0_27], %70 {strides = array<i32>} : memref<64x128xf32, #tpu.memory_space<vmem>>, vector<8x128xf32>,
    %c24 = arith.constant 24 : index
    %c0_28 = arith.constant 0 : index
    %72 = vector.load %arg12[%c24, %c0_28] : memref<64x512xf32, #tpu.memory_space<vmem>>, vector<8x512xf32>
    %73 = arith.truncf %70 : vector<8x128xf32> to vector<8x128xbf16>
    %cst_29 = arith.constant dense<0.000000e+00> : vector<8x512xf32>
    %74 = tpu.matmul %73, %1, %cst_29 {dimension_numbers = #tpu.dot_dimension_numbers<[1], [0], [0], [1], [0, 0, 1, 1], [], []>} : vector<8x128xbf16>, vector<128x512xbf16>, vector<8x512xf32> -> vector<8x512xf32>
    %75 = arith.addf %72, %74 : vector<8x512xf32>
    %76 = arith.negf %75 : vector<8x512xf32>
    %77 = math.exp %76 : vector<8x512xf32>
    %cst_30 = arith.constant 1.000000e+00 : f32
    %78 = vector.broadcast %cst_30 : f32 to vector<8x512xf32>
    %79 = arith.addf %78, %77 : vector<8x512xf32>
    %80 = arith.divf %78, %79 : vector<8x512xf32>
    %81 = vector.extract_strided_slice %80 {offsets = [0, 0], sizes = [8, 128], strides = [1, 1]} : vector<8x512xf32> to vector<8x128xf32>
    %82 = vector.extract_strided_slice %80 {offsets = [0, 128], sizes = [8, 128], strides = [1, 1]} : vector<8x512xf32> to vector<8x128xf32>
    %83 = vector.extract_strided_slice %80 {offsets = [0, 384], sizes = [8, 128], strides = [1, 1]} : vector<8x512xf32> to vector<8x128xf32>
    %84 = vector.extract_strided_slice %75 {offsets = [0, 256], sizes = [8, 128], strides = [1, 1]} : vector<8x512xf32> to vector<8x128xf32>
    %85 = math.tanh %84 : vector<8x128xf32>
    %86 = arith.mulf %82, %68 : vector<8x128xf32>
    %87 = arith.mulf %81, %85 : vector<8x128xf32>
    %88 = arith.addf %86, %87 : vector<8x128xf32>
    %89 = math.tanh %88 : vector<8x128xf32>
    %90 = arith.mulf %83, %89 : vector<8x128xf32>
    %c24_31 = arith.constant 24 : index
    %c0_32 = arith.constant 0 : index
    %91 = vector.load %arg11[%c24_31, %c0_32] : memref<64x128xf32, #tpu.memory_space<vmem>>, vector<8x128xf32>
    tpu.vector_store %arg11[%c24_31, %c0_32], %90 {strides = array<i32>} : memref<64x128xf32, #tpu.memory_space<vmem>>, vector<8x128xf32>,
    %c32 = arith.constant 32 : index
    %c0_33 = arith.constant 0 : index
    %92 = vector.load %arg12[%c32, %c0_33] : memref<64x512xf32, #tpu.memory_space<vmem>>, vector<8x512xf32>
    %93 = arith.truncf %90 : vector<8x128xf32> to vector<8x128xbf16>
    %cst_34 = arith.constant dense<0.000000e+00> : vector<8x512xf32>
    %94 = tpu.matmul %93, %1, %cst_34 {dimension_numbers = #tpu.dot_dimension_numbers<[1], [0], [0], [1], [0, 0, 1, 1], [], []>} : vector<8x128xbf16>, vector<128x512xbf16>, vector<8x512xf32> -> vector<8x512xf32>
    %95 = arith.addf %92, %94 : vector<8x512xf32>
    %96 = arith.negf %95 : vector<8x512xf32>
    %97 = math.exp %96 : vector<8x512xf32>
    %cst_35 = arith.constant 1.000000e+00 : f32
    %98 = vector.broadcast %cst_35 : f32 to vector<8x512xf32>
    %99 = arith.addf %98, %97 : vector<8x512xf32>
    %100 = arith.divf %98, %99 : vector<8x512xf32>
    %101 = vector.extract_strided_slice %100 {offsets = [0, 0], sizes = [8, 128], strides = [1, 1]} : vector<8x512xf32> to vector<8x128xf32>
    %102 = vector.extract_strided_slice %100 {offsets = [0, 128], sizes = [8, 128], strides = [1, 1]} : vector<8x512xf32> to vector<8x128xf32>
    %103 = vector.extract_strided_slice %100 {offsets = [0, 384], sizes = [8, 128], strides = [1, 1]} : vector<8x512xf32> to vector<8x128xf32>
    %104 = vector.extract_strided_slice %95 {offsets = [0, 256], sizes = [8, 128], strides = [1, 1]} : vector<8x512xf32> to vector<8x128xf32>
    %105 = math.tanh %104 : vector<8x128xf32>
    %106 = arith.mulf %102, %88 : vector<8x128xf32>
    %107 = arith.mulf %101, %105 : vector<8x128xf32>
    %108 = arith.addf %106, %107 : vector<8x128xf32>
    %109 = math.tanh %108 : vector<8x128xf32>
    %110 = arith.mulf %103, %109 : vector<8x128xf32>
    %c32_36 = arith.constant 32 : index
    %c0_37 = arith.constant 0 : index
    %111 = vector.load %arg11[%c32_36, %c0_37] : memref<64x128xf32, #tpu.memory_space<vmem>>, vector<8x128xf32>
    tpu.vector_store %arg11[%c32_36, %c0_37], %110 {strides = array<i32>} : memref<64x128xf32, #tpu.memory_space<vmem>>, vector<8x128xf32>,
    %c40 = arith.constant 40 : index
    %c0_38 = arith.constant 0 : index
    %112 = vector.load %arg12[%c40, %c0_38] : memref<64x512xf32, #tpu.memory_space<vmem>>, vector<8x512xf32>
    %113 = arith.truncf %110 : vector<8x128xf32> to vector<8x128xbf16>
    %cst_39 = arith.constant dense<0.000000e+00> : vector<8x512xf32>
    %114 = tpu.matmul %113, %1, %cst_39 {dimension_numbers = #tpu.dot_dimension_numbers<[1], [0], [0], [1], [0, 0, 1, 1], [], []>} : vector<8x128xbf16>, vector<128x512xbf16>, vector<8x512xf32> -> vector<8x512xf32>
    %115 = arith.addf %112, %114 : vector<8x512xf32>
    %116 = arith.negf %115 : vector<8x512xf32>
    %117 = math.exp %116 : vector<8x512xf32>
    %cst_40 = arith.constant 1.000000e+00 : f32
    %118 = vector.broadcast %cst_40 : f32 to vector<8x512xf32>
    %119 = arith.addf %118, %117 : vector<8x512xf32>
    %120 = arith.divf %118, %119 : vector<8x512xf32>
    %121 = vector.extract_strided_slice %120 {offsets = [0, 0], sizes = [8, 128], strides = [1, 1]} : vector<8x512xf32> to vector<8x128xf32>
    %122 = vector.extract_strided_slice %120 {offsets = [0, 128], sizes = [8, 128], strides = [1, 1]} : vector<8x512xf32> to vector<8x128xf32>
    %123 = vector.extract_strided_slice %120 {offsets = [0, 384], sizes = [8, 128], strides = [1, 1]} : vector<8x512xf32> to vector<8x128xf32>
    %124 = vector.extract_strided_slice %115 {offsets = [0, 256], sizes = [8, 128], strides = [1, 1]} : vector<8x512xf32> to vector<8x128xf32>
    %125 = math.tanh %124 : vector<8x128xf32>
    %126 = arith.mulf %122, %108 : vector<8x128xf32>
    %127 = arith.mulf %121, %125 : vector<8x128xf32>
    %128 = arith.addf %126, %127 : vector<8x128xf32>
    %129 = math.tanh %128 : vector<8x128xf32>
    %130 = arith.mulf %123, %129 : vector<8x128xf32>
    %c40_41 = arith.constant 40 : index
    %c0_42 = arith.constant 0 : index
    %131 = vector.load %arg11[%c40_41, %c0_42] : memref<64x128xf32, #tpu.memory_space<vmem>>, vector<8x128xf32>
    tpu.vector_store %arg11[%c40_41, %c0_42], %130 {strides = array<i32>} : memref<64x128xf32, #tpu.memory_space<vmem>>, vector<8x128xf32>,
    %c48 = arith.constant 48 : index
    %c0_43 = arith.constant 0 : index
    %132 = vector.load %arg12[%c48, %c0_43] : memref<64x512xf32, #tpu.memory_space<vmem>>, vector<8x512xf32>
    %133 = arith.truncf %130 : vector<8x128xf32> to vector<8x128xbf16>
    %cst_44 = arith.constant dense<0.000000e+00> : vector<8x512xf32>
    %134 = tpu.matmul %133, %1, %cst_44 {dimension_numbers = #tpu.dot_dimension_numbers<[1], [0], [0], [1], [0, 0, 1, 1], [], []>} : vector<8x128xbf16>, vector<128x512xbf16>, vector<8x512xf32> -> vector<8x512xf32>
    %135 = arith.addf %132, %134 : vector<8x512xf32>
    %136 = arith.negf %135 : vector<8x512xf32>
    %137 = math.exp %136 : vector<8x512xf32>
    %cst_45 = arith.constant 1.000000e+00 : f32
    %138 = vector.broadcast %cst_45 : f32 to vector<8x512xf32>
    %139 = arith.addf %138, %137 : vector<8x512xf32>
    %140 = arith.divf %138, %139 : vector<8x512xf32>
    %141 = vector.extract_strided_slice %140 {offsets = [0, 0], sizes = [8, 128], strides = [1, 1]} : vector<8x512xf32> to vector<8x128xf32>
    %142 = vector.extract_strided_slice %140 {offsets = [0, 128], sizes = [8, 128], strides = [1, 1]} : vector<8x512xf32> to vector<8x128xf32>
    %143 = vector.extract_strided_slice %140 {offsets = [0, 384], sizes = [8, 128], strides = [1, 1]} : vector<8x512xf32> to vector<8x128xf32>
    %144 = vector.extract_strided_slice %135 {offsets = [0, 256], sizes = [8, 128], strides = [1, 1]} : vector<8x512xf32> to vector<8x128xf32>
    %145 = math.tanh %144 : vector<8x128xf32>
    %146 = arith.mulf %142, %128 : vector<8x128xf32>
    %147 = arith.mulf %141, %145 : vector<8x128xf32>
    %148 = arith.addf %146, %147 : vector<8x128xf32>
    %149 = math.tanh %148 : vector<8x128xf32>
    %150 = arith.mulf %143, %149 : vector<8x128xf32>
    %c48_46 = arith.constant 48 : index
    %c0_47 = arith.constant 0 : index
    %151 = vector.load %arg11[%c48_46, %c0_47] : memref<64x128xf32, #tpu.memory_space<vmem>>, vector<8x128xf32>
    tpu.vector_store %arg11[%c48_46, %c0_47], %150 {strides = array<i32>} : memref<64x128xf32, #tpu.memory_space<vmem>>, vector<8x128xf32>,
    %c56 = arith.constant 56 : index
    %c0_48 = arith.constant 0 : index
    %152 = vector.load %arg12[%c56, %c0_48] : memref<64x512xf32, #tpu.memory_space<vmem>>, vector<8x512xf32>
    %153 = arith.truncf %150 : vector<8x128xf32> to vector<8x128xbf16>
    %cst_49 = arith.constant dense<0.000000e+00> : vector<8x512xf32>
    %154 = tpu.matmul %153, %1, %cst_49 {dimension_numbers = #tpu.dot_dimension_numbers<[1], [0], [0], [1], [0, 0, 1, 1], [], []>} : vector<8x128xbf16>, vector<128x512xbf16>, vector<8x512xf32> -> vector<8x512xf32>
    %155 = arith.addf %152, %154 : vector<8x512xf32>
    %156 = arith.negf %155 : vector<8x512xf32>
    %157 = math.exp %156 : vector<8x512xf32>
    %cst_50 = arith.constant 1.000000e+00 : f32
    %158 = vector.broadcast %cst_50 : f32 to vector<8x512xf32>
    %159 = arith.addf %158, %157 : vector<8x512xf32>
    %160 = arith.divf %158, %159 : vector<8x512xf32>
    %161 = vector.extract_strided_slice %160 {offsets = [0, 0], sizes = [8, 128], strides = [1, 1]} : vector<8x512xf32> to vector<8x128xf32>
    %162 = vector.extract_strided_slice %160 {offsets = [0, 128], sizes = [8, 128], strides = [1, 1]} : vector<8x512xf32> to vector<8x128xf32>
    %163 = vector.extract_strided_slice %160 {offsets = [0, 384], sizes = [8, 128], strides = [1, 1]} : vector<8x512xf32> to vector<8x128xf32>
    %164 = vector.extract_strided_slice %155 {offsets = [0, 256], sizes = [8, 128], strides = [1, 1]} : vector<8x512xf32> to vector<8x128xf32>
    %165 = math.tanh %164 : vector<8x128xf32>
    %166 = arith.mulf %162, %148 : vector<8x128xf32>
    %167 = arith.mulf %161, %165 : vector<8x128xf32>
    %168 = arith.addf %166, %167 : vector<8x128xf32>
    %169 = math.tanh %168 : vector<8x128xf32>
    %170 = arith.mulf %163, %169 : vector<8x128xf32>
    %c56_51 = arith.constant 56 : index
    %c0_52 = arith.constant 0 : index
    %171 = vector.load %arg11[%c56_51, %c0_52] : memref<64x128xf32, #tpu.memory_space<vmem>>, vector<8x128xf32>
    tpu.vector_store %arg11[%c56_51, %c0_52], %170 {strides = array<i32>} : memref<64x128xf32, #tpu.memory_space<vmem>>, vector<8x128xf32>,
    %c0_53 = arith.constant 0 : index
    %c0_54 = arith.constant 0 : index
    %172 = vector.load %arg5[%c0_53, %c0_54] : memref<128x512xbf16, #tpu.memory_space<vmem>>, vector<128x512xbf16>
    %c0_55 = arith.constant 0 : index
    %c0_56 = arith.constant 0 : index
    %173 = vector.load %arg6[%c0_55, %c0_56] : memref<128x512xbf16, #tpu.memory_space<vmem>>, vector<128x512xbf16>
    %c0_57 = arith.constant 0 : index
    %c0_58 = arith.constant 0 : index
    %174 = vector.load %arg7[%c0_57, %c0_58] : memref<1x512xf32, #tpu.memory_space<vmem>>, vector<1x512xf32>
    %c0_59 = arith.constant 0 : index
    %c0_60 = arith.constant 0 : index
    %175 = vector.load %arg11[%c0_59, %c0_60] : memref<64x128xf32, #tpu.memory_space<vmem>>, vector<64x128xf32>
    %176 = arith.truncf %175 : vector<64x128xf32> to vector<64x128xbf16>
    %cst_61 = arith.constant dense<0.000000e+00> : vector<64x512xf32>
    %177 = tpu.matmul %176, %172, %cst_61 {dimension_numbers = #tpu.dot_dimension_numbers<[1], [0], [0], [1], [0, 0, 1, 1], [], []>} : vector<64x128xbf16>, vector<128x512xbf16>, vector<64x512xf32> -> vector<64x512xf32>
    %178 = vector.broadcast %174 : vector<1x512xf32> to vector<64x512xf32>
    %179 = arith.addf %177, %178 : vector<64x512xf32>
    %c0_62 = arith.constant 0 : index
    %c0_63 = arith.constant 0 : index
    %180 = vector.load %arg12[%c0_62, %c0_63] : memref<64x512xf32, #tpu.memory_space<vmem>>, vector<64x512xf32>
    tpu.vector_store %arg12[%c0_62, %c0_63], %179 {strides = array<i32>} : memref<64x512xf32, #tpu.memory_space<vmem>>, vector<64x512xf32>,
    %cst_64 = arith.constant 0.000000e+00 : f32
    %181 = vector.broadcast %cst_64 : f32 to vector<8x128xf32>
    %cst_65 = arith.constant 0.000000e+00 : f32
    %182 = vector.broadcast %cst_65 : f32 to vector<8x128xf32>
    %c0_66 = arith.constant 0 : index
    %c0_67 = arith.constant 0 : index
    %183 = vector.load %arg12[%c0_66, %c0_67] : memref<64x512xf32, #tpu.memory_space<vmem>>, vector<8x512xf32>
    %184 = arith.truncf %181 : vector<8x128xf32> to vector<8x128xbf16>
    %cst_68 = arith.constant dense<0.000000e+00> : vector<8x512xf32>
    %185 = tpu.matmul %184, %173, %cst_68 {dimension_numbers = #tpu.dot_dimension_numbers<[1], [0], [0], [1], [0, 0, 1, 1], [], []>} : vector<8x128xbf16>, vector<128x512xbf16>, vector<8x512xf32> -> vector<8x512xf32>
    %186 = arith.addf %183, %185 : vector<8x512xf32>
    %187 = arith.negf %186 : vector<8x512xf32>
    %188 = math.exp %187 : vector<8x512xf32>
    %cst_69 = arith.constant 1.000000e+00 : f32
    %189 = vector.broadcast %cst_69 : f32 to vector<8x512xf32>
    %190 = arith.addf %189, %188 : vector<8x512xf32>
    %191 = arith.divf %189, %190 : vector<8x512xf32>
    %192 = vector.extract_strided_slice %191 {offsets = [0, 0], sizes = [8, 128], strides = [1, 1]} : vector<8x512xf32> to vector<8x128xf32>
    %193 = vector.extract_strided_slice %191 {offsets = [0, 128], sizes = [8, 128], strides = [1, 1]} : vector<8x512xf32> to vector<8x128xf32>
    %194 = vector.extract_strided_slice %191 {offsets = [0, 384], sizes = [8, 128], strides = [1, 1]} : vector<8x512xf32> to vector<8x128xf32>
    %195 = vector.extract_strided_slice %186 {offsets = [0, 256], sizes = [8, 128], strides = [1, 1]} : vector<8x512xf32> to vector<8x128xf32>
    %196 = math.tanh %195 : vector<8x128xf32>
    %197 = arith.mulf %193, %182 : vector<8x128xf32>
    %198 = arith.mulf %192, %196 : vector<8x128xf32>
    %199 = arith.addf %197, %198 : vector<8x128xf32>
    %200 = math.tanh %199 : vector<8x128xf32>
    %201 = arith.mulf %194, %200 : vector<8x128xf32>
    %c8_70 = arith.constant 8 : index
    %c0_71 = arith.constant 0 : index
    %202 = vector.load %arg12[%c8_70, %c0_71] : memref<64x512xf32, #tpu.memory_space<vmem>>, vector<8x512xf32>
    %203 = arith.truncf %201 : vector<8x128xf32> to vector<8x128xbf16>
    %cst_72 = arith.constant dense<0.000000e+00> : vector<8x512xf32>
    %204 = tpu.matmul %203, %173, %cst_72 {dimension_numbers = #tpu.dot_dimension_numbers<[1], [0], [0], [1], [0, 0, 1, 1], [], []>} : vector<8x128xbf16>, vector<128x512xbf16>, vector<8x512xf32> -> vector<8x512xf32>
    %205 = arith.addf %202, %204 : vector<8x512xf32>
    %206 = arith.negf %205 : vector<8x512xf32>
    %207 = math.exp %206 : vector<8x512xf32>
    %cst_73 = arith.constant 1.000000e+00 : f32
    %208 = vector.broadcast %cst_73 : f32 to vector<8x512xf32>
    %209 = arith.addf %208, %207 : vector<8x512xf32>
    %210 = arith.divf %208, %209 : vector<8x512xf32>
    %211 = vector.extract_strided_slice %210 {offsets = [0, 0], sizes = [8, 128], strides = [1, 1]} : vector<8x512xf32> to vector<8x128xf32>
    %212 = vector.extract_strided_slice %210 {offsets = [0, 128], sizes = [8, 128], strides = [1, 1]} : vector<8x512xf32> to vector<8x128xf32>
    %213 = vector.extract_strided_slice %210 {offsets = [0, 384], sizes = [8, 128], strides = [1, 1]} : vector<8x512xf32> to vector<8x128xf32>
    %214 = vector.extract_strided_slice %205 {offsets = [0, 256], sizes = [8, 128], strides = [1, 1]} : vector<8x512xf32> to vector<8x128xf32>
    %215 = math.tanh %214 : vector<8x128xf32>
    %216 = arith.mulf %212, %199 : vector<8x128xf32>
    %217 = arith.mulf %211, %215 : vector<8x128xf32>
    %218 = arith.addf %216, %217 : vector<8x128xf32>
    %219 = math.tanh %218 : vector<8x128xf32>
    %220 = arith.mulf %213, %219 : vector<8x128xf32>
    %c16_74 = arith.constant 16 : index
    %c0_75 = arith.constant 0 : index
    %221 = vector.load %arg12[%c16_74, %c0_75] : memref<64x512xf32, #tpu.memory_space<vmem>>, vector<8x512xf32>
    %222 = arith.truncf %220 : vector<8x128xf32> to vector<8x128xbf16>
    %cst_76 = arith.constant dense<0.000000e+00> : vector<8x512xf32>
    %223 = tpu.matmul %222, %173, %cst_76 {dimension_numbers = #tpu.dot_dimension_numbers<[1], [0], [0], [1], [0, 0, 1, 1], [], []>} : vector<8x128xbf16>, vector<128x512xbf16>, vector<8x512xf32> -> vector<8x512xf32>
    %224 = arith.addf %221, %223 : vector<8x512xf32>
    %225 = arith.negf %224 : vector<8x512xf32>
    %226 = math.exp %225 : vector<8x512xf32>
    %cst_77 = arith.constant 1.000000e+00 : f32
    %227 = vector.broadcast %cst_77 : f32 to vector<8x512xf32>
    %228 = arith.addf %227, %226 : vector<8x512xf32>
    %229 = arith.divf %227, %228 : vector<8x512xf32>
    %230 = vector.extract_strided_slice %229 {offsets = [0, 0], sizes = [8, 128], strides = [1, 1]} : vector<8x512xf32> to vector<8x128xf32>
    %231 = vector.extract_strided_slice %229 {offsets = [0, 128], sizes = [8, 128], strides = [1, 1]} : vector<8x512xf32> to vector<8x128xf32>
    %232 = vector.extract_strided_slice %229 {offsets = [0, 384], sizes = [8, 128], strides = [1, 1]} : vector<8x512xf32> to vector<8x128xf32>
    %233 = vector.extract_strided_slice %224 {offsets = [0, 256], sizes = [8, 128], strides = [1, 1]} : vector<8x512xf32> to vector<8x128xf32>
    %234 = math.tanh %233 : vector<8x128xf32>
    %235 = arith.mulf %231, %218 : vector<8x128xf32>
    %236 = arith.mulf %230, %234 : vector<8x128xf32>
    %237 = arith.addf %235, %236 : vector<8x128xf32>
    %238 = math.tanh %237 : vector<8x128xf32>
    %239 = arith.mulf %232, %238 : vector<8x128xf32>
    %c24_78 = arith.constant 24 : index
    %c0_79 = arith.constant 0 : index
    %240 = vector.load %arg12[%c24_78, %c0_79] : memref<64x512xf32, #tpu.memory_space<vmem>>, vector<8x512xf32>
    %241 = arith.truncf %239 : vector<8x128xf32> to vector<8x128xbf16>
    %cst_80 = arith.constant dense<0.000000e+00> : vector<8x512xf32>
    %242 = tpu.matmul %241, %173, %cst_80 {dimension_numbers = #tpu.dot_dimension_numbers<[1], [0], [0], [1], [0, 0, 1, 1], [], []>} : vector<8x128xbf16>, vector<128x512xbf16>, vector<8x512xf32> -> vector<8x512xf32>
    %243 = arith.addf %240, %242 : vector<8x512xf32>
    %244 = arith.negf %243 : vector<8x512xf32>
    %245 = math.exp %244 : vector<8x512xf32>
    %cst_81 = arith.constant 1.000000e+00 : f32
    %246 = vector.broadcast %cst_81 : f32 to vector<8x512xf32>
    %247 = arith.addf %246, %245 : vector<8x512xf32>
    %248 = arith.divf %246, %247 : vector<8x512xf32>
    %249 = vector.extract_strided_slice %248 {offsets = [0, 0], sizes = [8, 128], strides = [1, 1]} : vector<8x512xf32> to vector<8x128xf32>
    %250 = vector.extract_strided_slice %248 {offsets = [0, 128], sizes = [8, 128], strides = [1, 1]} : vector<8x512xf32> to vector<8x128xf32>
    %251 = vector.extract_strided_slice %248 {offsets = [0, 384], sizes = [8, 128], strides = [1, 1]} : vector<8x512xf32> to vector<8x128xf32>
    %252 = vector.extract_strided_slice %243 {offsets = [0, 256], sizes = [8, 128], strides = [1, 1]} : vector<8x512xf32> to vector<8x128xf32>
    %253 = math.tanh %252 : vector<8x128xf32>
    %254 = arith.mulf %250, %237 : vector<8x128xf32>
    %255 = arith.mulf %249, %253 : vector<8x128xf32>
    %256 = arith.addf %254, %255 : vector<8x128xf32>
    %257 = math.tanh %256 : vector<8x128xf32>
    %258 = arith.mulf %251, %257 : vector<8x128xf32>
    %c32_82 = arith.constant 32 : index
    %c0_83 = arith.constant 0 : index
    %259 = vector.load %arg12[%c32_82, %c0_83] : memref<64x512xf32, #tpu.memory_space<vmem>>, vector<8x512xf32>
    %260 = arith.truncf %258 : vector<8x128xf32> to vector<8x128xbf16>
    %cst_84 = arith.constant dense<0.000000e+00> : vector<8x512xf32>
    %261 = tpu.matmul %260, %173, %cst_84 {dimension_numbers = #tpu.dot_dimension_numbers<[1], [0], [0], [1], [0, 0, 1, 1], [], []>} : vector<8x128xbf16>, vector<128x512xbf16>, vector<8x512xf32> -> vector<8x512xf32>
    %262 = arith.addf %259, %261 : vector<8x512xf32>
    %263 = arith.negf %262 : vector<8x512xf32>
    %264 = math.exp %263 : vector<8x512xf32>
    %cst_85 = arith.constant 1.000000e+00 : f32
    %265 = vector.broadcast %cst_85 : f32 to vector<8x512xf32>
    %266 = arith.addf %265, %264 : vector<8x512xf32>
    %267 = arith.divf %265, %266 : vector<8x512xf32>
    %268 = vector.extract_strided_slice %267 {offsets = [0, 0], sizes = [8, 128], strides = [1, 1]} : vector<8x512xf32> to vector<8x128xf32>
    %269 = vector.extract_strided_slice %267 {offsets = [0, 128], sizes = [8, 128], strides = [1, 1]} : vector<8x512xf32> to vector<8x128xf32>
    %270 = vector.extract_strided_slice %267 {offsets = [0, 384], sizes = [8, 128], strides = [1, 1]} : vector<8x512xf32> to vector<8x128xf32>
    %271 = vector.extract_strided_slice %262 {offsets = [0, 256], sizes = [8, 128], strides = [1, 1]} : vector<8x512xf32> to vector<8x128xf32>
    %272 = math.tanh %271 : vector<8x128xf32>
    %273 = arith.mulf %269, %256 : vector<8x128xf32>
    %274 = arith.mulf %268, %272 : vector<8x128xf32>
    %275 = arith.addf %273, %274 : vector<8x128xf32>
    %276 = math.tanh %275 : vector<8x128xf32>
    %277 = arith.mulf %270, %276 : vector<8x128xf32>
    %c40_86 = arith.constant 40 : index
    %c0_87 = arith.constant 0 : index
    %278 = vector.load %arg12[%c40_86, %c0_87] : memref<64x512xf32, #tpu.memory_space<vmem>>, vector<8x512xf32>
    %279 = arith.truncf %277 : vector<8x128xf32> to vector<8x128xbf16>
    %cst_88 = arith.constant dense<0.000000e+00> : vector<8x512xf32>
    %280 = tpu.matmul %279, %173, %cst_88 {dimension_numbers = #tpu.dot_dimension_numbers<[1], [0], [0], [1], [0, 0, 1, 1], [], []>} : vector<8x128xbf16>, vector<128x512xbf16>, vector<8x512xf32> -> vector<8x512xf32>
    %281 = arith.addf %278, %280 : vector<8x512xf32>
    %282 = arith.negf %281 : vector<8x512xf32>
    %283 = math.exp %282 : vector<8x512xf32>
    %cst_89 = arith.constant 1.000000e+00 : f32
    %284 = vector.broadcast %cst_89 : f32 to vector<8x512xf32>
    %285 = arith.addf %284, %283 : vector<8x512xf32>
    %286 = arith.divf %284, %285 : vector<8x512xf32>
    %287 = vector.extract_strided_slice %286 {offsets = [0, 0], sizes = [8, 128], strides = [1, 1]} : vector<8x512xf32> to vector<8x128xf32>
    %288 = vector.extract_strided_slice %286 {offsets = [0, 128], sizes = [8, 128], strides = [1, 1]} : vector<8x512xf32> to vector<8x128xf32>
    %289 = vector.extract_strided_slice %286 {offsets = [0, 384], sizes = [8, 128], strides = [1, 1]} : vector<8x512xf32> to vector<8x128xf32>
    %290 = vector.extract_strided_slice %281 {offsets = [0, 256], sizes = [8, 128], strides = [1, 1]} : vector<8x512xf32> to vector<8x128xf32>
    %291 = math.tanh %290 : vector<8x128xf32>
    %292 = arith.mulf %288, %275 : vector<8x128xf32>
    %293 = arith.mulf %287, %291 : vector<8x128xf32>
    %294 = arith.addf %292, %293 : vector<8x128xf32>
    %295 = math.tanh %294 : vector<8x128xf32>
    %296 = arith.mulf %289, %295 : vector<8x128xf32>
    %c48_90 = arith.constant 48 : index
    %c0_91 = arith.constant 0 : index
    %297 = vector.load %arg12[%c48_90, %c0_91] : memref<64x512xf32, #tpu.memory_space<vmem>>, vector<8x512xf32>
    %298 = arith.truncf %296 : vector<8x128xf32> to vector<8x128xbf16>
    %cst_92 = arith.constant dense<0.000000e+00> : vector<8x512xf32>
    %299 = tpu.matmul %298, %173, %cst_92 {dimension_numbers = #tpu.dot_dimension_numbers<[1], [0], [0], [1], [0, 0, 1, 1], [], []>} : vector<8x128xbf16>, vector<128x512xbf16>, vector<8x512xf32> -> vector<8x512xf32>
    %300 = arith.addf %297, %299 : vector<8x512xf32>
    %301 = arith.negf %300 : vector<8x512xf32>
    %302 = math.exp %301 : vector<8x512xf32>
    %cst_93 = arith.constant 1.000000e+00 : f32
    %303 = vector.broadcast %cst_93 : f32 to vector<8x512xf32>
    %304 = arith.addf %303, %302 : vector<8x512xf32>
    %305 = arith.divf %303, %304 : vector<8x512xf32>
    %306 = vector.extract_strided_slice %305 {offsets = [0, 0], sizes = [8, 128], strides = [1, 1]} : vector<8x512xf32> to vector<8x128xf32>
    %307 = vector.extract_strided_slice %305 {offsets = [0, 128], sizes = [8, 128], strides = [1, 1]} : vector<8x512xf32> to vector<8x128xf32>
    %308 = vector.extract_strided_slice %305 {offsets = [0, 384], sizes = [8, 128], strides = [1, 1]} : vector<8x512xf32> to vector<8x128xf32>
    %309 = vector.extract_strided_slice %300 {offsets = [0, 256], sizes = [8, 128], strides = [1, 1]} : vector<8x512xf32> to vector<8x128xf32>
    %310 = math.tanh %309 : vector<8x128xf32>
    %311 = arith.mulf %307, %294 : vector<8x128xf32>
    %312 = arith.mulf %306, %310 : vector<8x128xf32>
    %313 = arith.addf %311, %312 : vector<8x128xf32>
    %314 = math.tanh %313 : vector<8x128xf32>
    %315 = arith.mulf %308, %314 : vector<8x128xf32>
    %c56_94 = arith.constant 56 : index
    %c0_95 = arith.constant 0 : index
    %316 = vector.load %arg12[%c56_94, %c0_95] : memref<64x512xf32, #tpu.memory_space<vmem>>, vector<8x512xf32>
    %317 = arith.truncf %315 : vector<8x128xf32> to vector<8x128xbf16>
    %cst_96 = arith.constant dense<0.000000e+00> : vector<8x512xf32>
    %318 = tpu.matmul %317, %173, %cst_96 {dimension_numbers = #tpu.dot_dimension_numbers<[1], [0], [0], [1], [0, 0, 1, 1], [], []>} : vector<8x128xbf16>, vector<128x512xbf16>, vector<8x512xf32> -> vector<8x512xf32>
    %319 = arith.addf %316, %318 : vector<8x512xf32>
    %320 = arith.negf %319 : vector<8x512xf32>
    %321 = math.exp %320 : vector<8x512xf32>
    %cst_97 = arith.constant 1.000000e+00 : f32
    %322 = vector.broadcast %cst_97 : f32 to vector<8x512xf32>
    %323 = arith.addf %322, %321 : vector<8x512xf32>
    %324 = arith.divf %322, %323 : vector<8x512xf32>
    %325 = vector.extract_strided_slice %324 {offsets = [0, 0], sizes = [8, 128], strides = [1, 1]} : vector<8x512xf32> to vector<8x128xf32>
    %326 = vector.extract_strided_slice %324 {offsets = [0, 128], sizes = [8, 128], strides = [1, 1]} : vector<8x512xf32> to vector<8x128xf32>
    %327 = vector.extract_strided_slice %324 {offsets = [0, 384], sizes = [8, 128], strides = [1, 1]} : vector<8x512xf32> to vector<8x128xf32>
    %328 = vector.extract_strided_slice %319 {offsets = [0, 256], sizes = [8, 128], strides = [1, 1]} : vector<8x512xf32> to vector<8x128xf32>
    %329 = math.tanh %328 : vector<8x128xf32>
    %330 = arith.mulf %326, %313 : vector<8x128xf32>
    %331 = arith.mulf %325, %329 : vector<8x128xf32>
    %332 = arith.addf %330, %331 : vector<8x128xf32>
    %333 = math.tanh %332 : vector<8x128xf32>
    %334 = arith.mulf %327, %333 : vector<8x128xf32>
    %335 = arith.truncf %334 : vector<8x128xf32> to vector<8x128xbf16>
    %c0_98 = arith.constant 0 : index
    %c0_99 = arith.constant 0 : index
    %336 = vector.load %arg8[%c0_98, %c0_99] : memref<128x8xbf16, #tpu.memory_space<vmem>>, vector<128x8xbf16>
    %cst_100 = arith.constant dense<0.000000e+00> : vector<8x8xf32>
    %337 = tpu.matmul %335, %336, %cst_100 {dimension_numbers = #tpu.dot_dimension_numbers<[1], [0], [0], [1], [0, 0, 1, 1], [], []>} : vector<8x128xbf16>, vector<128x8xbf16>, vector<8x8xf32> -> vector<8x8xf32>
    %c0_101 = arith.constant 0 : index
    %c0_102 = arith.constant 0 : index
    %338 = vector.load %arg9[%c0_101, %c0_102] : memref<1x8xf32, #tpu.memory_space<vmem>>, vector<1x8xf32>
    %339 = vector.broadcast %338 : vector<1x8xf32> to vector<8x8xf32>
    %340 = arith.addf %337, %339 : vector<8x8xf32>
    %cst_103 = arith.constant dense<0xFF800000> : vector<8xf32>
    %341 = vector.multi_reduction <maximumf>, %340, %cst_103 [1] : vector<8x8xf32> to vector<8xf32>
    %342 = vector.shape_cast %341 : vector<8xf32> to vector<8x1xf32>
    %343 = vector.broadcast %342 : vector<8x1xf32> to vector<8x8xf32>
    %344 = arith.subf %340, %343 : vector<8x8xf32>
    %345 = math.exp %344 : vector<8x8xf32>
    %cst_104 = arith.constant dense<0.000000e+00> : vector<8xf32>
    %346 = vector.multi_reduction <add>, %345, %cst_104 [1] : vector<8x8xf32> to vector<8xf32>
    %347 = vector.shape_cast %346 : vector<8xf32> to vector<8x1xf32>
    %348 = vector.broadcast %347 : vector<8x1xf32> to vector<8x8xf32>
    %349 = arith.divf %345, %348 : vector<8x8xf32>
    %c0_105 = arith.constant 0 : index
    %c0_106 = arith.constant 0 : index
    %350 = vector.load %arg10[%c0_105, %c0_106] : memref<8x8xf32, #tpu.memory_space<vmem>>, vector<8x8xf32>
    tpu.vector_store %arg10[%c0_105, %c0_106], %349 {strides = array<i32>} : memref<8x8xf32, #tpu.memory_space<vmem>>, vector<8x8xf32>,
    return
  }
  func.func @transform_0(%arg0: i32) -> (i32, i32, i32) {
    %c0_i32 = arith.constant 0 : i32
    %c0_i32_0 = arith.constant 0 : i32
    %c0_i32_1 = arith.constant 0 : i32
    return %c0_i32, %arg0, %c0_i32_0 : i32, i32, i32
  }
  func.func @transform_1(%arg0: i32) -> (i32, i32) {
    %c0_i32 = arith.constant 0 : i32
    %c0_i32_0 = arith.constant 0 : i32
    %c0_i32_1 = arith.constant 0 : i32
    return %c0_i32, %c0_i32_0 : i32, i32
  }
  func.func @transform_2(%arg0: i32) -> (i32, i32) {
    %c0_i32 = arith.constant 0 : i32
    %c0_i32_0 = arith.constant 0 : i32
    %c0_i32_1 = arith.constant 0 : i32
    return %c0_i32, %c0_i32_0 : i32, i32
  }
  func.func @transform_3(%arg0: i32) -> (i32, i32) {
    %c0_i32 = arith.constant 0 : i32
    %c0_i32_0 = arith.constant 0 : i32
    %c0_i32_1 = arith.constant 0 : i32
    return %c0_i32, %c0_i32_0 : i32, i32
  }
  func.func @transform_4(%arg0: i32) -> (i32, i32) {
    %c0_i32 = arith.constant 0 : i32
    %c0_i32_0 = arith.constant 0 : i32
    %c0_i32_1 = arith.constant 0 : i32
    return %c0_i32, %c0_i32_0 : i32, i32
  }
  func.func @transform_5(%arg0: i32) -> (i32, i32) {
    %c0_i32 = arith.constant 0 : i32
    %c0_i32_0 = arith.constant 0 : i32
    %c0_i32_1 = arith.constant 0 : i32
    return %c0_i32, %c0_i32_0 : i32, i32
  }
  func.func @transform_6(%arg0: i32) -> (i32, i32) {
    %c0_i32 = arith.constant 0 : i32
    %c0_i32_0 = arith.constant 0 : i32
    %c0_i32_1 = arith.constant 0 : i32
    return %c0_i32, %c0_i32_0 : i32, i32
  }
  func.func @transform_7(%arg0: i32) -> (i32, i32) {
    %c0_i32 = arith.constant 0 : i32
    %c0_i32_0 = arith.constant 0 : i32
    %c0_i32_1 = arith.constant 0 : i32
    return %c0_i32, %c0_i32_0 : i32, i32
  }
  func.func @transform_8(%arg0: i32) -> (i32, i32) {
    %c0_i32 = arith.constant 0 : i32
    %c0_i32_0 = arith.constant 0 : i32
    %c0_i32_1 = arith.constant 0 : i32
    return %c0_i32, %c0_i32_0 : i32, i32
  }
  func.func @transform_9(%arg0: i32) -> (i32, i32) {
    %c0_i32 = arith.constant 0 : i32
    %c0_i32_0 = arith.constant 0 : i32
    return %arg0, %c0_i32 : i32, i32
  }
}

</mosaic_0001>

<llo_original>
// kernel: rnn_forward.1
$region0: #{rnn_forward.1}
  #allocation0 [shape = 'u32[]', space=smem, size = 0x4, offset = 0x4, fixed_abs, tag = 'smem constant byte address 0x4 - core index']
  #allocation1 [shape = 'u32[144,128]{1,0:T(1,128)}', space=vmem, size = 0x12000, scoped, tag = 'internal scratch']
  #allocation2 [shape = 'f32[64,128]{1,0:T(8,128)}', space=vmem, size = 0x8000, scoped, tag = 'scratch operand']
  #allocation3 [shape = 'f32[64,512]{1,0:T(8,128)}', space=vmem, size = 0x20000, scoped, tag = 'scratch operand']
  %s0 = inlined_call_operand.vmem [shape: f32[8,8,16], index: 0, kind: input, shape index: {}]
  %s1 = inlined_call_operand.vmem [shape: bf16[16,512], index: 1, kind: input, shape index: {}]
  %s2 = inlined_call_operand.vmem [shape: bf16[128,512], index: 2, kind: input, shape index: {}]
  %s3 = inlined_call_operand.vmem [shape: f32[1,512], index: 3, kind: input, shape index: {}]
  %s4 = inlined_call_operand.vmem [shape: bf16[128,512], index: 4, kind: input, shape index: {}]
  %s5 = inlined_call_operand.vmem [shape: bf16[128,512], index: 5, kind: input, shape index: {}]
  %s6 = inlined_call_operand.vmem [shape: f32[1,512], index: 6, kind: input, shape index: {}]
  %s7 = inlined_call_operand.vmem [shape: bf16[128,8], index: 7, kind: input, shape index: {}]
  %s8 = inlined_call_operand.vmem [shape: f32[1,8], index: 8, kind: input, shape index: {}]
  %s9 = inlined_call_operand.vmem [shape: f32[8,8], index: 9, kind: output, shape index: {}]
  %s10 = sld [smem:[#allocation0]]
  $region46: #{rnn_forward.1} parent=0
    _
  %s12 = ssub.s32 1, %s10
  %s13 = scalar_select 0, %s12, %s10
  // Predicated region
  $region2: #{rnn_forward.1} parent=0 // pred_check
    _
  $region3: #{rnn_forward.1} parent=0 // pred_check_branch
    %15 = sbr.rel (0) target = $region5
  $region4: #{rnn_forward.1} parent=0 // pred_region
    _
  $region5: #{rnn_forward.1} parent=0 // pred_fallthru
    _
  // Predicated region
  $region6: #{rnn_forward.1} parent=0 // pred_check
    _
  $region7: #{rnn_forward.1} parent=0 // pred_check_branch
    %17 = sbr.rel (0) target = $region9
  $region8: #{rnn_forward.1} parent=0 // pred_region
    _
  $region9: #{rnn_forward.1} parent=0 // pred_fallthru
    _
  // Predicated region
  $region10: #{rnn_forward.1} parent=0 // pred_check
    _
  $region11: #{rnn_forward.1} parent=0 // pred_check_branch
    %19 = sbr.rel (0) target = $region13
  $region12: #{rnn_forward.1} parent=0 // pred_region
    _
  $region13: #{rnn_forward.1} parent=0 // pred_fallthru
    _
  // Predicated region
  $region14: #{rnn_forward.1} parent=0 // pred_check
    _
  $region15: #{rnn_forward.1} parent=0 // pred_check_branch
    %21 = sbr.rel (0) target = $region17
  $region16: #{rnn_forward.1} parent=0 // pred_region
    _
  $region17: #{rnn_forward.1} parent=0 // pred_fallthru
    _
  // Predicated region
  $region18: #{rnn_forward.1} parent=0 // pred_check
    _
  $region19: #{rnn_forward.1} parent=0 // pred_check_branch
    %23 = sbr.rel (0) target = $region21
  $region20: #{rnn_forward.1} parent=0 // pred_region
    _
  $region21: #{rnn_forward.1} parent=0 // pred_fallthru
    _
  // Predicated region
  $region22: #{rnn_forward.1} parent=0 // pred_check
    _
  $region23: #{rnn_forward.1} parent=0 // pred_check_branch
    %25 = sbr.rel (0) target = $region25
  $region24: #{rnn_forward.1} parent=0 // pred_region
    _
  $region25: #{rnn_forward.1} parent=0 // pred_fallthru
    _
  // Predicated region
  $region26: #{rnn_forward.1} parent=0 // pred_check
    _
  $region27: #{rnn_forward.1} parent=0 // pred_check_branch
    %27 = sbr.rel (0) target = $region29
  $region28: #{rnn_forward.1} parent=0 // pred_region
    _
  $region29: #{rnn_forward.1} parent=0 // pred_fallthru
    _
  // Predicated region
  $region30: #{rnn_forward.1} parent=0 // pred_check
    _
  $region31: #{rnn_forward.1} parent=0 // pred_check_branch
    %29 = sbr.rel (0) target = $region33
  $region32: #{rnn_forward.1} parent=0 // pred_region
    _
  $region33: #{rnn_forward.1} parent=0 // pred_fallthru
    _
  // Predicated region
  $region34: #{rnn_forward.1} parent=0 // pred_check
    _
  $region35: #{rnn_forward.1} parent=0 // pred_check_branch
    %31 = sbr.rel (0) target = $region37
  $region36: #{rnn_forward.1} parent=0 // pred_region
    _
  $region37: #{rnn_forward.1} parent=0 // pred_fallthru
    _
  %v33 = vld [vmem:[%s1] sm:$0xff]
  %v34 = vld [vmem:[%s1 + $0x8] sm:$0xff]
  %v35 = vld [vmem:[%s1 + $0x10] sm:$0xff]
  %v36 = vld [vmem:[%s1 + $0x18] sm:$0xff]
  %v37 = vld [vmem:[%s2] sm:$0xff]
  %v38 = vld [vmem:[%s2 + $0x8] sm:$0xff]
  %v39 = vld [vmem:[%s2 + $0x10] sm:$0xff]
  %v40 = vld [vmem:[%s2 + $0x18] sm:$0xff]
  %v41 = vld [vmem:[%s2 + $0x20] sm:$0xff]
  %v42 = vld [vmem:[%s2 + $0x28] sm:$0xff]
  %v43 = vld [vmem:[%s2 + $0x30] sm:$0xff]
  %v44 = vld [vmem:[%s2 + $0x38] sm:$0xff]
  %v45 = vld [vmem:[%s2 + $0x40] sm:$0xff]
  %v46 = vld [vmem:[%s2 + $0x48] sm:$0xff]
  %v47 = vld [vmem:[%s2 + $0x50] sm:$0xff]
  %v48 = vld [vmem:[%s2 + $0x58] sm:$0xff]
  %v49 = vld [vmem:[%s2 + $0x60] sm:$0xff]
  %v50 = vld [vmem:[%s2 + $0x68] sm:$0xff]
  %v51 = vld [vmem:[%s2 + $0x70] sm:$0xff]
  %v52 = vld [vmem:[%s2 + $0x78] sm:$0xff]
  %v53 = vld [vmem:[%s2 + $0x80] sm:$0xff]
  %v54 = vld [vmem:[%s2 + $0x88] sm:$0xff]
  %v55 = vld [vmem:[%s2 + $0x90] sm:$0xff]
  %v56 = vld [vmem:[%s2 + $0x98] sm:$0xff]
  %v57 = vld [vmem:[%s2 + $0xa0] sm:$0xff]
  %v58 = vld [vmem:[%s2 + $0xa8] sm:$0xff]
  %v59 = vld [vmem:[%s2 + $0xb0] sm:$0xff]
  %v60 = vld [vmem:[%s2 + $0xb8] sm:$0xff]
  %v61 = vld [vmem:[%s2 + $0xc0] sm:$0xff]
  %v62 = vld [vmem:[%s2 + $0xc8] sm:$0xff]
  %v63 = vld [vmem:[%s2 + $0xd0] sm:$0xff]
  %v64 = vld [vmem:[%s2 + $0xd8] sm:$0xff]
  %v65 = vld [vmem:[%s2 + $0xe0] sm:$0xff]
  %v66 = vld [vmem:[%s2 + $0xe8] sm:$0xff]
  %v67 = vld [vmem:[%s2 + $0xf0] sm:$0xff]
  %v68 = vld [vmem:[%s2 + $0xf8] sm:$0xff]
  %v69 = vld [vmem:[%s3] sm:$0xf]
  %v70 = vld [vmem:[%s0] sm:$0xff]
  %v71 = vld [vmem:[%s0 + $0x8] sm:$0xff]
  %v72 = vld [vmem:[%s0 + $0x10] sm:$0xff]
  %v73 = vld [vmem:[%s0 + $0x18] sm:$0xff]
  %v74 = vld [vmem:[%s0 + $0x20] sm:$0xff]
  %v75 = vld [vmem:[%s0 + $0x28] sm:$0xff]
  %v76 = vld [vmem:[%s0 + $0x30] sm:$0xff]
  %v77 = vld [vmem:[%s0 + $0x38] sm:$0xff]
  %v78 = vpack.c.bf16 %v71, %v70
  %v79 = vpack.c.bf16 %v73, %v72
  %v80 = vpack.c.bf16 %v75, %v74
  %v81 = vpack.c.bf16 %v77, %v76
  %v83 = vlaneseq
  %v84 = vshrl.u32 %v83, 7
  %v85 = vsub.s32 0, %v84
  %v86 = vrot.slane %v69, %v85
  %v87 = vlaneseq
  %v88 = vshrl.u32 %v87, 7
  %v89 = vsub.s32 1, %v88
  %v90 = vrot.slane %v69, %v89
  %v91 = vlaneseq
  %v92 = vshrl.u32 %v91, 7
  %v93 = vsub.s32 2, %v92
  %v94 = vrot.slane %v69, %v93
  %v95 = vlaneseq
  %v96 = vshrl.u32 %v95, 7
  %v97 = vsub.s32 3, %v96
  %v98 = vrot.slane %v69, %v97
  %v107 = vunpack.c.l.b16 %v33
  %v108 = vunpack.c.h.b16 %v33
  %v109 = vunpack.c.l.b16 %v34
  %v110 = vunpack.c.h.b16 %v34
  %v111 = vunpack.c.l.b16 %v35
  %v112 = vunpack.c.h.b16 %v35
  %v113 = vunpack.c.l.b16 %v36
  %v114 = vunpack.c.h.b16 %v36
  %v115 = vpack.c.b16 %v111, %v107
  %v116 = vpack.c.b16 %v112, %v108
  %v117 = vpack.c.b16 %v113, %v109
  %v118 = vpack.c.b16 %v114, %v110
  %vm123 = vcmask 130048
  %v125 = vsel %vm123, %v78, 0
  %v128 = vsel %vm123, %v79, 0
  %v131 = vsel %vm123, %v80, 0
  %v134 = vsel %vm123, %v81, 0
  %136 = vmatprep.subr.bf16.mxu0 0
  %137 = vmatpush1.bf16.msra.mxu0 0
  %138 = vmatprep.subr.bf16.mxu0 0
  %139 = vmatpush1.bf16.msra.mxu0 0
  %140 = vmatprep.subr.bf16.mxu0 0
  %141 = vmatpush1.bf16.msra.mxu0 0
  %142 = vmatprep.subr.bf16.mxu0 0
  %143 = vmatpush1.bf16.msra.mxu0 0
  %144 = vmatprep.subr.bf16.mxu0 0
  %145 = vmatpush1.bf16.msra.mxu0 0
  %146 = vmatprep.subr.bf16.mxu0 0
  %147 = vmatpush1.bf16.msra.mxu0 0
  %148 = vmatprep.subr.bf16.mxu0 0
  %149 = vmatpush1.bf16.msra.mxu0 0
  %150 = vmatprep.subr.bf16.mxu0 %v116
  %151 = vmatpush1.bf16.msra.mxu0 %v115
  %152 = vmatprep.subr.bf16.mxu0 0
  %153 = vmatpush2.bf16.msra.mxu0 0
  %154 = vmatprep.subr.bf16.mxu0 0
  %155 = vmatpush2.bf16.msra.mxu0 0
  %156 = vmatprep.subr.bf16.mxu0 0
  %157 = vmatpush2.bf16.msra.mxu0 0
  %158 = vmatprep.subr.bf16.mxu0 0
  %159 = vmatpush2.bf16.msra.mxu0 0
  %160 = vmatprep.subr.bf16.mxu0 0
  %161 = vmatpush2.bf16.msra.mxu0 0
  %162 = vmatprep.subr.bf16.mxu0 0
  %163 = vmatpush2.bf16.msra.mxu0 0
  %164 = vmatprep.subr.bf16.mxu0 0
  %165 = vmatpush2.bf16.msra.mxu0 0
  %166 = vmatprep.subr.bf16.mxu0 0
  %167 = vmatpush2.bf16.msra.mxu0 0
  %168 = vmatprep.mubr.bf16.mxu0 0
  %169 = vmatmul.mubr.bf16.gmra.mxu0 %v125
  %v170 = vpop.f32.mrf.mxu0
  %v171 = vadd.f32 %v86, %v170
  %v172 = vpop.f32.mrf.mxu0
  %v173 = vadd.f32 %v90, %v172
  %v174 = vpop.f32.mrf.mxu0
  %v175 = vadd.f32 %v86, %v174
  %v176 = vpop.f32.mrf.mxu0
  %v177 = vadd.f32 %v90, %v176
  %178 = vmatprep.mubr.bf16.mxu0 0
  %179 = vmatmul.mubr.bf16.gmra.mxu0 %v128
  %v180 = vpop.f32.mrf.mxu0
  %v181 = vadd.f32 %v86, %v180
  %v182 = vpop.f32.mrf.mxu0
  %v183 = vadd.f32 %v90, %v182
  %v184 = vpop.f32.mrf.mxu0
  %v185 = vadd.f32 %v86, %v184
  %v186 = vpop.f32.mrf.mxu0
  %v187 = vadd.f32 %v90, %v186
  %188 = vmatprep.mubr.bf16.mxu0 0
  %189 = vmatmul.mubr.bf16.gmra.mxu0 %v131
  %v190 = vpop.f32.mrf.mxu0
  %v191 = vadd.f32 %v86, %v190
  %v192 = vpop.f32.mrf.mxu0
  %v193 = vadd.f32 %v90, %v192
  %v194 = vpop.f32.mrf.mxu0
  %v195 = vadd.f32 %v86, %v194
  %v196 = vpop.f32.mrf.mxu0
  %v197 = vadd.f32 %v90, %v196
  %198 = vmatprep.mubr.bf16.mxu0 0
  %199 = vmatmul.mubr.bf16.gmra.mxu0 %v134
  %v200 = vpop.f32.mrf.mxu0
  %v201 = vadd.f32 %v86, %v200
  %v202 = vpop.f32.mrf.mxu0
  %v203 = vadd.f32 %v90, %v202
  %v204 = vpop.f32.mrf.mxu0
  %v205 = vadd.f32 %v86, %v204
  %v206 = vpop.f32.mrf.mxu0
  %v207 = vadd.f32 %v90, %v206
  %208 = vdwg.mxu0
  %209 = vmatprep.subr.bf16.mxu0 0
  %210 = vmatpush1.bf16.msra.mxu0 0
  %211 = vmatprep.subr.bf16.mxu0 0
  %212 = vmatpush1.bf16.msra.mxu0 0
  %213 = vmatprep.subr.bf16.mxu0 0
  %214 = vmatpush1.bf16.msra.mxu0 0
  %215 = vmatprep.subr.bf16.mxu0 0
  %216 = vmatpush1.bf16.msra.mxu0 0
  %217 = vmatprep.subr.bf16.mxu0 0
  %218 = vmatpush1.bf16.msra.mxu0 0
  %219 = vmatprep.subr.bf16.mxu0 0
  %220 = vmatpush1.bf16.msra.mxu0 0
  %221 = vmatprep.subr.bf16.mxu0 0
  %222 = vmatpush1.bf16.msra.mxu0 0
  %223 = vmatprep.subr.bf16.mxu0 %v118
  %224 = vmatpush1.bf16.msra.mxu0 %v117
  %225 = vmatprep.subr.bf16.mxu0 0
  %226 = vmatpush2.bf16.msra.mxu0 0
  %227 = vmatprep.subr.bf16.mxu0 0
  %228 = vmatpush2.bf16.msra.mxu0 0
  %229 = vmatprep.subr.bf16.mxu0 0
  %230 = vmatpush2.bf16.msra.mxu0 0
  %231 = vmatprep.subr.bf16.mxu0 0
  %232 = vmatpush2.bf16.msra.mxu0 0
  %233 = vmatprep.subr.bf16.mxu0 0
  %234 = vmatpush2.bf16.msra.mxu0 0
  %235 = vmatprep.subr.bf16.mxu0 0
  %236 = vmatpush2.bf16.msra.mxu0 0
  %237 = vmatprep.subr.bf16.mxu0 0
  %238 = vmatpush2.bf16.msra.mxu0 0
  %239 = vmatprep.subr.bf16.mxu0 0
  %240 = vmatpush2.bf16.msra.mxu0 0
  %241 = vmatprep.mubr.bf16.mxu0 0
  %242 = vmatmul.mubr.bf16.gmra.mxu0 %v125
  %v243 = vpop.f32.mrf.mxu0
  %v244 = vadd.f32 %v94, %v243
  %v245 = vpop.f32.mrf.mxu0
  %v246 = vadd.f32 %v98, %v245
  %v247 = vpop.f32.mrf.mxu0
  %v248 = vadd.f32 %v94, %v247
  %v249 = vpop.f32.mrf.mxu0
  %v250 = vadd.f32 %v98, %v249
  %251 = vmatprep.mubr.bf16.mxu0 0
  %252 = vmatmul.mubr.bf16.gmra.mxu0 %v128
  %v253 = vpop.f32.mrf.mxu0
  %v254 = vadd.f32 %v94, %v253
  %v255 = vpop.f32.mrf.mxu0
  %v256 = vadd.f32 %v98, %v255
  %v257 = vpop.f32.mrf.mxu0
  %v258 = vadd.f32 %v94, %v257
  %v259 = vpop.f32.mrf.mxu0
  %v260 = vadd.f32 %v98, %v259
  %261 = vmatprep.mubr.bf16.mxu0 0
  %262 = vmatmul.mubr.bf16.gmra.mxu0 %v131
  %v263 = vpop.f32.mrf.mxu0
  %v264 = vadd.f32 %v94, %v263
  %v265 = vpop.f32.mrf.mxu0
  %v266 = vadd.f32 %v98, %v265
  %v267 = vpop.f32.mrf.mxu0
  %v268 = vadd.f32 %v94, %v267
  %v269 = vpop.f32.mrf.mxu0
  %v270 = vadd.f32 %v98, %v269
  %271 = vmatprep.mubr.bf16.mxu0 0
  %272 = vmatmul.mubr.bf16.gmra.mxu0 %v134
  %v273 = vpop.f32.mrf.mxu0
  %v274 = vadd.f32 %v94, %v273
  %v275 = vpop.f32.mrf.mxu0
  %v276 = vadd.f32 %v98, %v275
  %v277 = vpop.f32.mrf.mxu0
  %v278 = vadd.f32 %v94, %v277
  %v279 = vpop.f32.mrf.mxu0
  %v280 = vadd.f32 %v98, %v279
  %281 = vdwg.mxu0
  %282 = vst [vmem:[#allocation3] sm:$0xff] %v171
  %283 = vst [vmem:[#allocation3 + $0x8] sm:$0xff] %v173
  %284 = vst [vmem:[#allocation3 + $0x10] sm:$0xff] %v244
  %285 = vst [vmem:[#allocation3 + $0x18] sm:$0xff] %v246
  %286 = vst [vmem:[#allocation3 + $0x20] sm:$0xff] %v175
  %287 = vst [vmem:[#allocation3 + $0x28] sm:$0xff] %v177
  %288 = vst [vmem:[#allocation3 + $0x30] sm:$0xff] %v248
  %289 = vst [vmem:[#allocation3 + $0x38] sm:$0xff] %v250
  %290 = vst [vmem:[#allocation3 + $0x40] sm:$0xff] %v181
  %291 = vst [vmem:[#allocation3 + $0x48] sm:$0xff] %v183
  %292 = vst [vmem:[#allocation3 + $0x50] sm:$0xff] %v254
  %293 = vst [vmem:[#allocation3 + $0x58] sm:$0xff] %v256
  %294 = vst [vmem:[#allocation3 + $0x60] sm:$0xff] %v185
  %295 = vst [vmem:[#allocation3 + $0x68] sm:$0xff] %v187
  %296 = vst [vmem:[#allocation3 + $0x70] sm:$0xff] %v258
  %297 = vst [vmem:[#allocation3 + $0x78] sm:$0xff] %v260
  %298 = vst [vmem:[#allocation3 + $0x80] sm:$0xff] %v191
  %299 = vst [vmem:[#allocation3 + $0x88] sm:$0xff] %v193
  %300 = vst [vmem:[#allocation3 + $0x90] sm:$0xff] %v264
  %301 = vst [vmem:[#allocation3 + $0x98] sm:$0xff] %v266
  %302 = vst [vmem:[#allocation3 + $0xa0] sm:$0xff] %v195
  %303 = vst [vmem:[#allocation3 + $0xa8] sm:$0xff] %v197
  %304 = vst [vmem:[#allocation3 + $0xb0] sm:$0xff] %v268
  %305 = vst [vmem:[#allocation3 + $0xb8] sm:$0xff] %v270
  %306 = vst [vmem:[#allocation3 + $0xc0] sm:$0xff] %v201
  %307 = vst [vmem:[#allocation3 + $0xc8] sm:$0xff] %v203
  %308 = vst [vmem:[#allocation3 + $0xd0] sm:$0xff] %v274
  %309 = vst [vmem:[#allocation3 + $0xd8] sm:$0xff] %v276
  %310 = vst [vmem:[#allocation3 + $0xe0] sm:$0xff] %v205
  %311 = vst [vmem:[#allocation3 + $0xe8] sm:$0xff] %v207
  %312 = vst [vmem:[#allocation3 + $0xf0] sm:$0xff] %v278
  %313 = vst [vmem:[#allocation3 + $0xf8] sm:$0xff] %v280
  %v314 = vld [vmem:[#allocation3] sm:$0xff]
  %v315 = vld [vmem:[#allocation3 + $0x8] sm:$0xff]
  %v316 = vld [vmem:[#allocation3 + $0x10] sm:$0xff]
  %v317 = vld [vmem:[#allocation3 + $0x18] sm:$0xff]
  %v350 = vunpack.c.l.b16 %v37
  %v351 = vunpack.c.h.b16 %v37
  %v352 = vunpack.c.l.b16 %v38
  %v353 = vunpack.c.h.b16 %v38
  %v354 = vunpack.c.l.b16 %v39
  %v355 = vunpack.c.h.b16 %v39
  %v356 = vunpack.c.l.b16 %v40
  %v357 = vunpack.c.h.b16 %v40
  %v358 = vunpack.c.l.b16 %v41
  %v359 = vunpack.c.h.b16 %v41
  %v360 = vunpack.c.l.b16 %v42
  %v361 = vunpack.c.h.b16 %v42
  %v362 = vunpack.c.l.b16 %v43
  %v363 = vunpack.c.h.b16 %v43
  %v364 = vunpack.c.l.b16 %v44
  %v365 = vunpack.c.h.b16 %v44
  %v366 = vunpack.c.l.b16 %v45
  %v367 = vunpack.c.h.b16 %v45
  %v368 = vunpack.c.l.b16 %v46
  %v369 = vunpack.c.h.b16 %v46
  %v370 = vunpack.c.l.b16 %v47
  %v371 = vunpack.c.h.b16 %v47
  %v372 = vunpack.c.l.b16 %v48
  %v373 = vunpack.c.h.b16 %v48
  %v374 = vunpack.c.l.b16 %v49
  %v375 = vunpack.c.h.b16 %v49
  %v376 = vunpack.c.l.b16 %v50
  %v377 = vunpack.c.h.b16 %v50
  %v378 = vunpack.c.l.b16 %v51
  %v379 = vunpack.c.h.b16 %v51
  %v380 = vunpack.c.l.b16 %v52
  %v381 = vunpack.c.h.b16 %v52
  %v382 = vunpack.c.l.b16 %v53
  %v383 = vunpack.c.h.b16 %v53
  %v384 = vunpack.c.l.b16 %v54
  %v385 = vunpack.c.h.b16 %v54
  %v386 = vunpack.c.l.b16 %v55
  %v387 = vunpack.c.h.b16 %v55
  %v388 = vunpack.c.l.b16 %v56
  %v389 = vunpack.c.h.b16 %v56
  %v390 = vunpack.c.l.b16 %v57
  %v391 = vunpack.c.h.b16 %v57
  %v392 = vunpack.c.l.b16 %v58
  %v393 = vunpack.c.h.b16 %v58
  %v394 = vunpack.c.l.b16 %v59
  %v395 = vunpack.c.h.b16 %v59
  %v396 = vunpack.c.l.b16 %v60
  %v397 = vunpack.c.h.b16 %v60
  %v398 = vunpack.c.l.b16 %v61
  %v399 = vunpack.c.h.b16 %v61
  %v400 = vunpack.c.l.b16 %v62
  %v401 = vunpack.c.h.b16 %v62
  %v402 = vunpack.c.l.b16 %v63
  %v403 = vunpack.c.h.b16 %v63
  %v404 = vunpack.c.l.b16 %v64
  %v405 = vunpack.c.h.b16 %v64
  %v406 = vunpack.c.l.b16 %v65
  %v407 = vunpack.c.h.b16 %v65
  %v408 = vunpack.c.l.b16 %v66
  %v409 = vunpack.c.h.b16 %v66
  %v410 = vunpack.c.l.b16 %v67
  %v411 = vunpack.c.h.b16 %v67
  %v412 = vunpack.c.l.b16 %v68
  %v413 = vunpack.c.h.b16 %v68
  %v414 = vpack.c.b16 %v354, %v350
  %v415 = vpack.c.b16 %v355, %v351
  %v416 = vpack.c.b16 %v356, %v352
  %v417 = vpack.c.b16 %v357, %v353
  %v418 = vpack.c.b16 %v362, %v358
  %v419 = vpack.c.b16 %v363, %v359
  %v420 = vpack.c.b16 %v364, %v360
  %v421 = vpack.c.b16 %v365, %v361
  %v422 = vpack.c.b16 %v370, %v366
  %v423 = vpack.c.b16 %v371, %v367
  %v424 = vpack.c.b16 %v372, %v368
  %v425 = vpack.c.b16 %v373, %v369
  %v426 = vpack.c.b16 %v378, %v374
  %v427 = vpack.c.b16 %v379, %v375
  %v428 = vpack.c.b16 %v380, %v376
  %v429 = vpack.c.b16 %v381, %v377
  %v430 = vpack.c.b16 %v386, %v382
  %v431 = vpack.c.b16 %v387, %v383
  %v432 = vpack.c.b16 %v388, %v384
  %v433 = vpack.c.b16 %v389, %v385
  %v434 = vpack.c.b16 %v394, %v390
  %v435 = vpack.c.b16 %v395, %v391
  %v436 = vpack.c.b16 %v396, %v392
  %v437 = vpack.c.b16 %v397, %v393
  %v438 = vpack.c.b16 %v402, %v398
  %v439 = vpack.c.b16 %v403, %v399
  %v440 = vpack.c.b16 %v404, %v400
  %v441 = vpack.c.b16 %v405, %v401
  %v442 = vpack.c.b16 %v410, %v406
  %v443 = vpack.c.b16 %v411, %v407
  %v444 = vpack.c.b16 %v412, %v408
  %v445 = vpack.c.b16 %v413, %v409
  %478 = vmatprep.subr.bf16.mxu0 %v443
  %479 = vmatpush1.bf16.msra.mxu0 %v442
  %480 = vmatprep.subr.bf16.mxu0 %v439
  %481 = vmatpush1.bf16.msra.mxu0 %v438
  %482 = vmatprep.subr.bf16.mxu0 %v435
  %483 = vmatpush1.bf16.msra.mxu0 %v434
  %484 = vmatprep.subr.bf16.mxu0 %v431
  %485 = vmatpush1.bf16.msra.mxu0 %v430
  %486 = vmatprep.subr.bf16.mxu0 %v427
  %487 = vmatpush1.bf16.msra.mxu0 %v426
  %488 = vmatprep.subr.bf16.mxu0 %v423
  %489 = vmatpush1.bf16.msra.mxu0 %v422
  %490 = vmatprep.subr.bf16.mxu0 %v419
  %491 = vmatpush1.bf16.msra.mxu0 %v418
  %492 = vmatprep.subr.bf16.mxu0 %v415
  %493 = vmatpush1.bf16.msra.mxu0 %v414
  %494 = vmatprep.subr.bf16.mxu0 0
  %495 = vmatpush2.bf16.msra.mxu0 0
  %496 = vmatprep.subr.bf16.mxu0 0
  %497 = vmatpush2.bf16.msra.mxu0 0
  %498 = vmatprep.subr.bf16.mxu0 0
  %499 = vmatpush2.bf16.msra.mxu0 0
  %500 = vmatprep.subr.bf16.mxu0 0
  %501 = vmatpush2.bf16.msra.mxu0 0
  %502 = vmatprep.subr.bf16.mxu0 0
  %503 = vmatpush2.bf16.msra.mxu0 0
  %504 = vmatprep.subr.bf16.mxu0 0
  %505 = vmatpush2.bf16.msra.mxu0 0
  %506 = vmatprep.subr.bf16.mxu0 0
  %507 = vmatpush2.bf16.msra.mxu0 0
  %508 = vmatprep.subr.bf16.mxu0 0
  %509 = vmatpush2.bf16.msra.mxu0 0
  %510 = vmatprep.mubr.bf16.mxu0 0
  %511 = vmatmul.mubr.bf16.gmra.mxu0 0
  %v512 = vpop.f32.mrf.mxu0
  %v513 = vadd.f32 0.0, %v512
  %v514 = vpop.f32.mrf.mxu0
  %v515 = vadd.f32 0.0, %v514
  %v516 = vpop.f32.mrf.mxu0
  %v517 = vpop.f32.mrf.mxu0
  %518 = vdwg.mxu0
  %519 = vmatprep.subr.bf16.mxu0 %v445
  %520 = vmatpush1.bf16.msra.mxu0 %v444
  %521 = vmatprep.subr.bf16.mxu0 %v441
  %522 = vmatpush1.bf16.msra.mxu0 %v440
  %523 = vmatprep.subr.bf16.mxu0 %v437
  %524 = vmatpush1.bf16.msra.mxu0 %v436
  %525 = vmatprep.subr.bf16.mxu0 %v433
  %526 = vmatpush1.bf16.msra.mxu0 %v432
  %527 = vmatprep.subr.bf16.mxu0 %v429
  %528 = vmatpush1.bf16.msra.mxu0 %v428
  %529 = vmatprep.subr.bf16.mxu0 %v425
  %530 = vmatpush1.bf16.msra.mxu0 %v424
  %531 = vmatprep.subr.bf16.mxu0 %v421
  %532 = vmatpush1.bf16.msra.mxu0 %v420
  %533 = vmatprep.subr.bf16.mxu0 %v417
  %534 = vmatpush1.bf16.msra.mxu0 %v416
  %535 = vmatprep.subr.bf16.mxu0 0
  %536 = vmatpush2.bf16.msra.mxu0 0
  %537 = vmatprep.subr.bf16.mxu0 0
  %538 = vmatpush2.bf16.msra.mxu0 0
  %539 = vmatprep.subr.bf16.mxu0 0
  %540 = vmatpush2.bf16.msra.mxu0 0
  %541 = vmatprep.subr.bf16.mxu0 0
  %542 = vmatpush2.bf16.msra.mxu0 0
  %543 = vmatprep.subr.bf16.mxu0 0
  %544 = vmatpush2.bf16.msra.mxu0 0
  %545 = vmatprep.subr.bf16.mxu0 0
  %546 = vmatpush2.bf16.msra.mxu0 0
  %547 = vmatprep.subr.bf16.mxu0 0
  %548 = vmatpush2.bf16.msra.mxu0 0
  %549 = vmatprep.subr.bf16.mxu0 0
  %550 = vmatpush2.bf16.msra.mxu0 0
  %551 = vmatprep.mubr.bf16.mxu0 0
  %552 = vmatmul.mubr.bf16.gmra.mxu0 0
  %v553 = vpop.f32.mrf.mxu0
  %v554 = vadd.f32 0.0, %v553
  %v555 = vpop.f32.mrf.mxu0
  %v556 = vadd.f32 0.0, %v555
  %v557 = vpop.f32.mrf.mxu0
  %v558 = vpop.f32.mrf.mxu0
  %559 = vdwg.mxu0
  %v560 = vadd.f32 %v314, %v513
  %v561 = vadd.f32 %v315, %v515
  %v562 = vadd.f32 %v316, %v554
  %v563 = vadd.f32 %v317, %v556
  %v564 = vxor.u32 %v560, 2147483648
  %v565 = vxor.u32 %v561, 2147483648
  %v566 = vxor.u32 %v563, 2147483648
  %v567 = vmul.f32 %v564, 1.442695
  %v568 = vpow.pop %v567
  %v569 = vmul.f32 %v565, 1.442695
  %v570 = vpow.pop %v569
  %v571 = vmul.f32 %v566, 1.442695
  %v572 = vpow.pop %v571
  %v573 = vadd.f32 %v568, 1.0
  %v574 = vadd.f32 %v570, 1.0
  %v575 = vadd.f32 %v572, 1.0
  %v576 = vrcp.pop %v573
  %v577 = vmul.f32 1.0, %v576
  %v578 = vrcp.pop %v574
  %v579 = vmul.f32 1.0, %v578
  %v580 = vrcp.pop %v575
  %v581 = vmul.f32 1.0, %v580
  %v582 = vtanh.pop %v562
  %v583 = vmul.f32 %v579, 0.0
  %v584 = vmul.f32 %v577, %v582
  %v585 = vadd.f32 %v583, %v584
  %v586 = vtanh.pop %v585
  %v587 = vmul.f32 %v581, %v586
  %588 = vst [vmem:[#allocation2] sm:$0xff] %v587
  %v589 = vld [vmem:[#allocation3 + $0x20] sm:$0xff]
  %v590 = vld [vmem:[#allocation3 + $0x28] sm:$0xff]
  %v591 = vld [vmem:[#allocation3 + $0x30] sm:$0xff]
  %v592 = vld [vmem:[#allocation3 + $0x38] sm:$0xff]
  %v593 = vpack.c.bf16 %v587, %v587
  %594 = vmatprep.subr.bf16.mxu0 %v443
  %595 = vmatpush1.bf16.msra.mxu0 %v442
  %596 = vmatprep.subr.bf16.mxu0 %v439
  %597 = vmatpush1.bf16.msra.mxu0 %v438
  %598 = vmatprep.subr.bf16.mxu0 %v435
  %599 = vmatpush1.bf16.msra.mxu0 %v434
  %600 = vmatprep.subr.bf16.mxu0 %v431
  %601 = vmatpush1.bf16.msra.mxu0 %v430
  %602 = vmatprep.subr.bf16.mxu0 %v427
  %603 = vmatpush1.bf16.msra.mxu0 %v426
  %604 = vmatprep.subr.bf16.mxu0 %v423
  %605 = vmatpush1.bf16.msra.mxu0 %v422
  %606 = vmatprep.subr.bf16.mxu0 %v419
  %607 = vmatpush1.bf16.msra.mxu0 %v418
  %608 = vmatprep.subr.bf16.mxu0 %v415
  %609 = vmatpush1.bf16.msra.mxu0 %v414
  %610 = vmatprep.subr.bf16.mxu0 0
  %611 = vmatpush2.bf16.msra.mxu0 0
  %612 = vmatprep.subr.bf16.mxu0 0
  %613 = vmatpush2.bf16.msra.mxu0 0
  %614 = vmatprep.subr.bf16.mxu0 0
  %615 = vmatpush2.bf16.msra.mxu0 0
  %616 = vmatprep.subr.bf16.mxu0 0
  %617 = vmatpush2.bf16.msra.mxu0 0
  %618 = vmatprep.subr.bf16.mxu0 0
  %619 = vmatpush2.bf16.msra.mxu0 0
  %620 = vmatprep.subr.bf16.mxu0 0
  %621 = vmatpush2.bf16.msra.mxu0 0
  %622 = vmatprep.subr.bf16.mxu0 0
  %623 = vmatpush2.bf16.msra.mxu0 0
  %624 = vmatprep.subr.bf16.mxu0 0
  %625 = vmatpush2.bf16.msra.mxu0 0
  %626 = vmatprep.mubr.bf16.mxu0 0
  %627 = vmatmul.mubr.bf16.gmra.mxu0 %v593
  %v628 = vpop.f32.mrf.mxu0
  %v629 = vadd.f32 0.0, %v628
  %v630 = vpop.f32.mrf.mxu0
  %v631 = vadd.f32 0.0, %v630
  %v632 = vpop.f32.mrf.mxu0
  %v633 = vpop.f32.mrf.mxu0
  %634 = vdwg.mxu0
  %635 = vmatprep.subr.bf16.mxu0 %v445
  %636 = vmatpush1.bf16.msra.mxu0 %v444
  %637 = vmatprep.subr.bf16.mxu0 %v441
  %638 = vmatpush1.bf16.msra.mxu0 %v440
  %639 = vmatprep.subr.bf16.mxu0 %v437
  %640 = vmatpush1.bf16.msra.mxu0 %v436
  %641 = vmatprep.subr.bf16.mxu0 %v433
  %642 = vmatpush1.bf16.msra.mxu0 %v432
  %643 = vmatprep.subr.bf16.mxu0 %v429
  %644 = vmatpush1.bf16.msra.mxu0 %v428
  %645 = vmatprep.subr.bf16.mxu0 %v425
  %646 = vmatpush1.bf16.msra.mxu0 %v424
  %647 = vmatprep.subr.bf16.mxu0 %v421
  %648 = vmatpush1.bf16.msra.mxu0 %v420
  %649 = vmatprep.subr.bf16.mxu0 %v417
  %650 = vmatpush1.bf16.msra.mxu0 %v416
  %651 = vmatprep.subr.bf16.mxu0 0
  %652 = vmatpush2.bf16.msra.mxu0 0
  %653 = vmatprep.subr.bf16.mxu0 0
  %654 = vmatpush2.bf16.msra.mxu0 0
  %655 = vmatprep.subr.bf16.mxu0 0
  %656 = vmatpush2.bf16.msra.mxu0 0
  %657 = vmatprep.subr.bf16.mxu0 0
  %658 = vmatpush2.bf16.msra.mxu0 0
  %659 = vmatprep.subr.bf16.mxu0 0
  %660 = vmatpush2.bf16.msra.mxu0 0
  %661 = vmatprep.subr.bf16.mxu0 0
  %662 = vmatpush2.bf16.msra.mxu0 0
  %663 = vmatprep.subr.bf16.mxu0 0
  %664 = vmatpush2.bf16.msra.mxu0 0
  %665 = vmatprep.subr.bf16.mxu0 0
  %666 = vmatpush2.bf16.msra.mxu0 0
  %667 = vmatprep.mubr.bf16.mxu0 0
  %668 = vmatmul.mubr.bf16.gmra.mxu0 %v593
  %v669 = vpop.f32.mrf.mxu0
  %v670 = vadd.f32 0.0, %v669
  %v671 = vpop.f32.mrf.mxu0
  %v672 = vadd.f32 0.0, %v671
  %v673 = vpop.f32.mrf.mxu0
  %v674 = vpop.f32.mrf.mxu0
  %675 = vdwg.mxu0
  %v676 = vadd.f32 %v589, %v629
  %v677 = vadd.f32 %v590, %v631
  %v678 = vadd.f32 %v591, %v670
  %v679 = vadd.f32 %v592, %v672
  %v680 = vxor.u32 %v676, 2147483648
  %v681 = vxor.u32 %v677, 2147483648
  %v682 = vxor.u32 %v679, 2147483648
  %v683 = vmul.f32 %v680, 1.442695
  %v684 = vpow.pop %v683
  %v685 = vmul.f32 %v681, 1.442695
  %v686 = vpow.pop %v685
  %v687 = vmul.f32 %v682, 1.442695
  %v688 = vpow.pop %v687
  %v689 = vadd.f32 %v684, 1.0
  %v690 = vadd.f32 %v686, 1.0
  %v691 = vadd.f32 %v688, 1.0
  %v692 = vrcp.pop %v689
  %v693 = vmul.f32 1.0, %v692
  %v694 = vrcp.pop %v690
  %v695 = vmul.f32 1.0, %v694
  %v696 = vrcp.pop %v691
  %v697 = vmul.f32 1.0, %v696
  %v698 = vtanh.pop %v678
  %v699 = vmul.f32 %v695, %v585
  %v700 = vmul.f32 %v693, %v698
  %v701 = vadd.f32 %v699, %v700
  %v702 = vtanh.pop %v701
  %v703 = vmul.f32 %v697, %v702
  %704 = vst [vmem:[#allocation2 + $0x8] sm:$0xff] %v703
  %v705 = vld [vmem:[#allocation3 + $0x40] sm:$0xff]
  %v706 = vld [vmem:[#allocation3 + $0x48] sm:$0xff]
  %v707 = vld [vmem:[#allocation3 + $0x50] sm:$0xff]
  %v708 = vld [vmem:[#allocation3 + $0x58] sm:$0xff]
  %v709 = vpack.c.bf16 %v703, %v703
  %710 = vmatprep.subr.bf16.mxu0 %v443
  %711 = vmatpush1.bf16.msra.mxu0 %v442
  %712 = vmatprep.subr.bf16.mxu0 %v439
  %713 = vmatpush1.bf16.msra.mxu0 %v438
  %714 = vmatprep.subr.bf16.mxu0 %v435
  %715 = vmatpush1.bf16.msra.mxu0 %v434
  %716 = vmatprep.subr.bf16.mxu0 %v431
  %717 = vmatpush1.bf16.msra.mxu0 %v430
  %718 = vmatprep.subr.bf16.mxu0 %v427
  %719 = vmatpush1.bf16.msra.mxu0 %v426
  %720 = vmatprep.subr.bf16.mxu0 %v423
  %721 = vmatpush1.bf16.msra.mxu0 %v422
  %722 = vmatprep.subr.bf16.mxu0 %v419
  %723 = vmatpush1.bf16.msra.mxu0 %v418
  %724 = vmatprep.subr.bf16.mxu0 %v415
  %725 = vmatpush1.bf16.msra.mxu0 %v414
  %726 = vmatprep.subr.bf16.mxu0 0
  %727 = vmatpush2.bf16.msra.mxu0 0
  %728 = vmatprep.subr.bf16.mxu0 0
  %729 = vmatpush2.bf16.msra.mxu0 0
  %730 = vmatprep.subr.bf16.mxu0 0
  %731 = vmatpush2.bf16.msra.mxu0 0
  %732 = vmatprep.subr.bf16.mxu0 0
  %733 = vmatpush2.bf16.msra.mxu0 0
  %734 = vmatprep.subr.bf16.mxu0 0
  %735 = vmatpush2.bf16.msra.mxu0 0
  %736 = vmatprep.subr.bf16.mxu0 0
  %737 = vmatpush2.bf16.msra.mxu0 0
  %738 = vmatprep.subr.bf16.mxu0 0
  %739 = vmatpush2.bf16.msra.mxu0 0
  %740 = vmatprep.subr.bf16.mxu0 0
  %741 = vmatpush2.bf16.msra.mxu0 0
  %742 = vmatprep.mubr.bf16.mxu0 0
  %743 = vmatmul.mubr.bf16.gmra.mxu0 %v709
  %v744 = vpop.f32.mrf.mxu0
  %v745 = vadd.f32 0.0, %v744
  %v746 = vpop.f32.mrf.mxu0
  %v747 = vadd.f32 0.0, %v746
  %v748 = vpop.f32.mrf.mxu0
  %v749 = vpop.f32.mrf.mxu0
  %750 = vdwg.mxu0
  %751 = vmatprep.subr.bf16.mxu0 %v445
  %752 = vmatpush1.bf16.msra.mxu0 %v444
  %753 = vmatprep.subr.bf16.mxu0 %v441
  %754 = vmatpush1.bf16.msra.mxu0 %v440
  %755 = vmatprep.subr.bf16.mxu0 %v437
  %756 = vmatpush1.bf16.msra.mxu0 %v436
  %757 = vmatprep.subr.bf16.mxu0 %v433
  %758 = vmatpush1.bf16.msra.mxu0 %v432
  %759 = vmatprep.subr.bf16.mxu0 %v429
  %760 = vmatpush1.bf16.msra.mxu0 %v428
  %761 = vmatprep.subr.bf16.mxu0 %v425
  %762 = vmatpush1.bf16.msra.mxu0 %v424
  %763 = vmatprep.subr.bf16.mxu0 %v421
  %764 = vmatpush1.bf16.msra.mxu0 %v420
  %765 = vmatprep.subr.bf16.mxu0 %v417
  %766 = vmatpush1.bf16.msra.mxu0 %v416
  %767 = vmatprep.subr.bf16.mxu0 0
  %768 = vmatpush2.bf16.msra.mxu0 0
  %769 = vmatprep.subr.bf16.mxu0 0
  %770 = vmatpush2.bf16.msra.mxu0 0
  %771 = vmatprep.subr.bf16.mxu0 0
  %772 = vmatpush2.bf16.msra.mxu0 0
  %773 = vmatprep.subr.bf16.mxu0 0
  %774 = vmatpush2.bf16.msra.mxu0 0
  %775 = vmatprep.subr.bf16.mxu0 0
  %776 = vmatpush2.bf16.msra.mxu0 0
  %777 = vmatprep.subr.bf16.mxu0 0
  %778 = vmatpush2.bf16.msra.mxu0 0
  %779 = vmatprep.subr.bf16.mxu0 0
  %780 = vmatpush2.bf16.msra.mxu0 0
  %781 = vmatprep.subr.bf16.mxu0 0
  %782 = vmatpush2.bf16.msra.mxu0 0
  %783 = vmatprep.mubr.bf16.mxu0 0
  %784 = vmatmul.mubr.bf16.gmra.mxu0 %v709
  %v785 = vpop.f32.mrf.mxu0
  %v786 = vadd.f32 0.0, %v785
  %v787 = vpop.f32.mrf.mxu0
  %v788 = vadd.f32 0.0, %v787
  %v789 = vpop.f32.mrf.mxu0
  %v790 = vpop.f32.mrf.mxu0
  %791 = vdwg.mxu0
  %v792 = vadd.f32 %v705, %v745
  %v793 = vadd.f32 %v706, %v747
  %v794 = vadd.f32 %v707, %v786
  %v795 = vadd.f32 %v708, %v788
  %v796 = vxor.u32 %v792, 2147483648
  %v797 = vxor.u32 %v793, 2147483648
  %v798 = vxor.u32 %v795, 2147483648
  %v799 = vmul.f32 %v796, 1.442695
  %v800 = vpow.pop %v799
  %v801 = vmul.f32 %v797, 1.442695
  %v802 = vpow.pop %v801
  %v803 = vmul.f32 %v798, 1.442695
  %v804 = vpow.pop %v803
  %v805 = vadd.f32 %v800, 1.0
  %v806 = vadd.f32 %v802, 1.0
  %v807 = vadd.f32 %v804, 1.0
  %v808 = vrcp.pop %v805
  %v809 = vmul.f32 1.0, %v808
  %v810 = vrcp.pop %v806
  %v811 = vmul.f32 1.0, %v810
  %v812 = vrcp.pop %v807
  %v813 = vmul.f32 1.0, %v812
  %v814 = vtanh.pop %v794
  %v815 = vmul.f32 %v811, %v701
  %v816 = vmul.f32 %v809, %v814
  %v817 = vadd.f32 %v815, %v816
  %v818 = vtanh.pop %v817
  %v819 = vmul.f32 %v813, %v818
  %820 = vst [vmem:[#allocation2 + $0x10] sm:$0xff] %v819
  %v821 = vld [vmem:[#allocation3 + $0x60] sm:$0xff]
  %v822 = vld [vmem:[#allocation3 + $0x68] sm:$0xff]
  %v823 = vld [vmem:[#allocation3 + $0x70] sm:$0xff]
  %v824 = vld [vmem:[#allocation3 + $0x78] sm:$0xff]
  %v825 = vpack.c.bf16 %v819, %v819
  %826 = vmatprep.subr.bf16.mxu0 %v443
  %827 = vmatpush1.bf16.msra.mxu0 %v442
  %828 = vmatprep.subr.bf16.mxu0 %v439
  %829 = vmatpush1.bf16.msra.mxu0 %v438
  %830 = vmatprep.subr.bf16.mxu0 %v435
  %831 = vmatpush1.bf16.msra.mxu0 %v434
  %832 = vmatprep.subr.bf16.mxu0 %v431
  %833 = vmatpush1.bf16.msra.mxu0 %v430
  %834 = vmatprep.subr.bf16.mxu0 %v427
  %835 = vmatpush1.bf16.msra.mxu0 %v426
  %836 = vmatprep.subr.bf16.mxu0 %v423
  %837 = vmatpush1.bf16.msra.mxu0 %v422
  %838 = vmatprep.subr.bf16.mxu0 %v419
  %839 = vmatpush1.bf16.msra.mxu0 %v418
  %840 = vmatprep.subr.bf16.mxu0 %v415
  %841 = vmatpush1.bf16.msra.mxu0 %v414
  %842 = vmatprep.subr.bf16.mxu0 0
  %843 = vmatpush2.bf16.msra.mxu0 0
  %844 = vmatprep.subr.bf16.mxu0 0
  %845 = vmatpush2.bf16.msra.mxu0 0
  %846 = vmatprep.subr.bf16.mxu0 0
  %847 = vmatpush2.bf16.msra.mxu0 0
  %848 = vmatprep.subr.bf16.mxu0 0
  %849 = vmatpush2.bf16.msra.mxu0 0
  %850 = vmatprep.subr.bf16.mxu0 0
  %851 = vmatpush2.bf16.msra.mxu0 0
  %852 = vmatprep.subr.bf16.mxu0 0
  %853 = vmatpush2.bf16.msra.mxu0 0
  %854 = vmatprep.subr.bf16.mxu0 0
  %855 = vmatpush2.bf16.msra.mxu0 0
  %856 = vmatprep.subr.bf16.mxu0 0
  %857 = vmatpush2.bf16.msra.mxu0 0
  %858 = vmatprep.mubr.bf16.mxu0 0
  %859 = vmatmul.mubr.bf16.gmra.mxu0 %v825
  %v860 = vpop.f32.mrf.mxu0
  %v861 = vadd.f32 0.0, %v860
  %v862 = vpop.f32.mrf.mxu0
  %v863 = vadd.f32 0.0, %v862
  %v864 = vpop.f32.mrf.mxu0
  %v865 = vpop.f32.mrf.mxu0
  %866 = vdwg.mxu0
  %867 = vmatprep.subr.bf16.mxu0 %v445
  %868 = vmatpush1.bf16.msra.mxu0 %v444
  %869 = vmatprep.subr.bf16.mxu0 %v441
  %870 = vmatpush1.bf16.msra.mxu0 %v440
  %871 = vmatprep.subr.bf16.mxu0 %v437
  %872 = vmatpush1.bf16.msra.mxu0 %v436
  %873 = vmatprep.subr.bf16.mxu0 %v433
  %874 = vmatpush1.bf16.msra.mxu0 %v432
  %875 = vmatprep.subr.bf16.mxu0 %v429
  %876 = vmatpush1.bf16.msra.mxu0 %v428
  %877 = vmatprep.subr.bf16.mxu0 %v425
  %878 = vmatpush1.bf16.msra.mxu0 %v424
  %879 = vmatprep.subr.bf16.mxu0 %v421
  %880 = vmatpush1.bf16.msra.mxu0 %v420
  %881 = vmatprep.subr.bf16.mxu0 %v417
  %882 = vmatpush1.bf16.msra.mxu0 %v416
  %883 = vmatprep.subr.bf16.mxu0 0
  %884 = vmatpush2.bf16.msra.mxu0 0
  %885 = vmatprep.subr.bf16.mxu0 0
  %886 = vmatpush2.bf16.msra.mxu0 0
  %887 = vmatprep.subr.bf16.mxu0 0
  %888 = vmatpush2.bf16.msra.mxu0 0
  %889 = vmatprep.subr.bf16.mxu0 0
  %890 = vmatpush2.bf16.msra.mxu0 0
  %891 = vmatprep.subr.bf16.mxu0 0
  %892 = vmatpush2.bf16.msra.mxu0 0
  %893 = vmatprep.subr.bf16.mxu0 0
  %894 = vmatpush2.bf16.msra.mxu0 0
  %895 = vmatprep.subr.bf16.mxu0 0
  %896 = vmatpush2.bf16.msra.mxu0 0
  %897 = vmatprep.subr.bf16.mxu0 0
  %898 = vmatpush2.bf16.msra.mxu0 0
  %899 = vmatprep.mubr.bf16.mxu0 0
  %900 = vmatmul.mubr.bf16.gmra.mxu0 %v825
  %v901 = vpop.f32.mrf.mxu0
  %v902 = vadd.f32 0.0, %v901
  %v903 = vpop.f32.mrf.mxu0
  %v904 = vadd.f32 0.0, %v903
  %v905 = vpop.f32.mrf.mxu0
  %v906 = vpop.f32.mrf.mxu0
  %907 = vdwg.mxu0
  %v908 = vadd.f32 %v821, %v861
  %v909 = vadd.f32 %v822, %v863
  %v910 = vadd.f32 %v823, %v902
  %v911 = vadd.f32 %v824, %v904
  %v912 = vxor.u32 %v908, 2147483648
  %v913 = vxor.u32 %v909, 2147483648
  %v914 = vxor.u32 %v911, 2147483648
  %v915 = vmul.f32 %v912, 1.442695
  %v916 = vpow.pop %v915
  %v917 = vmul.f32 %v913, 1.442695
  %v918 = vpow.pop %v917
  %v919 = vmul.f32 %v914, 1.442695
  %v920 = vpow.pop %v919
  %v921 = vadd.f32 %v916, 1.0
  %v922 = vadd.f32 %v918, 1.0
  %v923 = vadd.f32 %v920, 1.0
  %v924 = vrcp.pop %v921
  %v925 = vmul.f32 1.0, %v924
  %v926 = vrcp.pop %v922
  %v927 = vmul.f32 1.0, %v926
  %v928 = vrcp.pop %v923
  %v929 = vmul.f32 1.0, %v928
  %v930 = vtanh.pop %v910
  %v931 = vmul.f32 %v927, %v817
  %v932 = vmul.f32 %v925, %v930
  %v933 = vadd.f32 %v931, %v932
  %v934 = vtanh.pop %v933
  %v935 = vmul.f32 %v929, %v934
  %936 = vst [vmem:[#allocation2 + $0x18] sm:$0xff] %v935
  %v937 = vld [vmem:[#allocation3 + $0x80] sm:$0xff]
  %v938 = vld [vmem:[#allocation3 + $0x88] sm:$0xff]
  %v939 = vld [vmem:[#allocation3 + $0x90] sm:$0xff]
  %v940 = vld [vmem:[#allocation3 + $0x98] sm:$0xff]
  %v941 = vpack.c.bf16 %v935, %v935
  %942 = vmatprep.subr.bf16.mxu0 %v443
  %943 = vmatpush1.bf16.msra.mxu0 %v442
  %944 = vmatprep.subr.bf16.mxu0 %v439
  %945 = vmatpush1.bf16.msra.mxu0 %v438
  %946 = vmatprep.subr.bf16.mxu0 %v435
  %947 = vmatpush1.bf16.msra.mxu0 %v434
  %948 = vmatprep.subr.bf16.mxu0 %v431
  %949 = vmatpush1.bf16.msra.mxu0 %v430
  %950 = vmatprep.subr.bf16.mxu0 %v427
  %951 = vmatpush1.bf16.msra.mxu0 %v426
  %952 = vmatprep.subr.bf16.mxu0 %v423
  %953 = vmatpush1.bf16.msra.mxu0 %v422
  %954 = vmatprep.subr.bf16.mxu0 %v419
  %955 = vmatpush1.bf16.msra.mxu0 %v418
  %956 = vmatprep.subr.bf16.mxu0 %v415
  %957 = vmatpush1.bf16.msra.mxu0 %v414
  %958 = vmatprep.subr.bf16.mxu0 0
  %959 = vmatpush2.bf16.msra.mxu0 0
  %960 = vmatprep.subr.bf16.mxu0 0
  %961 = vmatpush2.bf16.msra.mxu0 0
  %962 = vmatprep.subr.bf16.mxu0 0
  %963 = vmatpush2.bf16.msra.mxu0 0
  %964 = vmatprep.subr.bf16.mxu0 0
  %965 = vmatpush2.bf16.msra.mxu0 0
  %966 = vmatprep.subr.bf16.mxu0 0
  %967 = vmatpush2.bf16.msra.mxu0 0
  %968 = vmatprep.subr.bf16.mxu0 0
  %969 = vmatpush2.bf16.msra.mxu0 0
  %970 = vmatprep.subr.bf16.mxu0 0
  %971 = vmatpush2.bf16.msra.mxu0 0
  %972 = vmatprep.subr.bf16.mxu0 0
  %973 = vmatpush2.bf16.msra.mxu0 0
  %974 = vmatprep.mubr.bf16.mxu0 0
  %975 = vmatmul.mubr.bf16.gmra.mxu0 %v941
  %v976 = vpop.f32.mrf.mxu0
  %v977 = vadd.f32 0.0, %v976
  %v978 = vpop.f32.mrf.mxu0
  %v979 = vadd.f32 0.0, %v978
  %v980 = vpop.f32.mrf.mxu0
  %v981 = vpop.f32.mrf.mxu0
  %982 = vdwg.mxu0
  %983 = vmatprep.subr.bf16.mxu0 %v445
  %984 = vmatpush1.bf16.msra.mxu0 %v444
  %985 = vmatprep.subr.bf16.mxu0 %v441
  %986 = vmatpush1.bf16.msra.mxu0 %v440
  %987 = vmatprep.subr.bf16.mxu0 %v437
  %988 = vmatpush1.bf16.msra.mxu0 %v436
  %989 = vmatprep.subr.bf16.mxu0 %v433
  %990 = vmatpush1.bf16.msra.mxu0 %v432
  %991 = vmatprep.subr.bf16.mxu0 %v429
  %992 = vmatpush1.bf16.msra.mxu0 %v428
  %993 = vmatprep.subr.bf16.mxu0 %v425
  %994 = vmatpush1.bf16.msra.mxu0 %v424
  %995 = vmatprep.subr.bf16.mxu0 %v421
  %996 = vmatpush1.bf16.msra.mxu0 %v420
  %997 = vmatprep.subr.bf16.mxu0 %v417
  %998 = vmatpush1.bf16.msra.mxu0 %v416
  %999 = vmatprep.subr.bf16.mxu0 0
  %1000 = vmatpush2.bf16.msra.mxu0 0
  %1001 = vmatprep.subr.bf16.mxu0 0
  %1002 = vmatpush2.bf16.msra.mxu0 0
  %1003 = vmatprep.subr.bf16.mxu0 0
  %1004 = vmatpush2.bf16.msra.mxu0 0
  %1005 = vmatprep.subr.bf16.mxu0 0
  %1006 = vmatpush2.bf16.msra.mxu0 0
  %1007 = vmatprep.subr.bf16.mxu0 0
  %1008 = vmatpush2.bf16.msra.mxu0 0
  %1009 = vmatprep.subr.bf16.mxu0 0
  %1010 = vmatpush2.bf16.msra.mxu0 0
  %1011 = vmatprep.subr.bf16.mxu0 0
  %1012 = vmatpush2.bf16.msra.mxu0 0
  %1013 = vmatprep.subr.bf16.mxu0 0
  %1014 = vmatpush2.bf16.msra.mxu0 0
  %1015 = vmatprep.mubr.bf16.mxu0 0
  %1016 = vmatmul.mubr.bf16.gmra.mxu0 %v941
  %v1017 = vpop.f32.mrf.mxu0
  %v1018 = vadd.f32 0.0, %v1017
  %v1019 = vpop.f32.mrf.mxu0
  %v1020 = vadd.f32 0.0, %v1019
  %v1021 = vpop.f32.mrf.mxu0
  %v1022 = vpop.f32.mrf.mxu0
  %1023 = vdwg.mxu0
  %v1024 = vadd.f32 %v937, %v977
  %v1025 = vadd.f32 %v938, %v979
  %v1026 = vadd.f32 %v939, %v1018
  %v1027 = vadd.f32 %v940, %v1020
  %v1028 = vxor.u32 %v1024, 2147483648
  %v1029 = vxor.u32 %v1025, 2147483648
  %v1030 = vxor.u32 %v1027, 2147483648
  %v1031 = vmul.f32 %v1028, 1.442695
  %v1032 = vpow.pop %v1031
  %v1033 = vmul.f32 %v1029, 1.442695
  %v1034 = vpow.pop %v1033
  %v1035 = vmul.f32 %v1030, 1.442695
  %v1036 = vpow.pop %v1035
  %v1037 = vadd.f32 %v1032, 1.0
  %v1038 = vadd.f32 %v1034, 1.0
  %v1039 = vadd.f32 %v1036, 1.0
  %v1040 = vrcp.pop %v1037
  %v1041 = vmul.f32 1.0, %v1040
  %v1042 = vrcp.pop %v1038
  %v1043 = vmul.f32 1.0, %v1042
  %v1044 = vrcp.pop %v1039
  %v1045 = vmul.f32 1.0, %v1044
  %v1046 = vtanh.pop %v1026
  %v1047 = vmul.f32 %v1043, %v933
  %v1048 = vmul.f32 %v1041, %v1046
  %v1049 = vadd.f32 %v1047, %v1048
  %v1050 = vtanh.pop %v1049
  %v1051 = vmul.f32 %v1045, %v1050
  %1052 = vst [vmem:[#allocation2 + $0x20] sm:$0xff] %v1051
  %v1053 = vld [vmem:[#allocation3 + $0xa0] sm:$0xff]
  %v1054 = vld [vmem:[#allocation3 + $0xa8] sm:$0xff]
  %v1055 = vld [vmem:[#allocation3 + $0xb0] sm:$0xff]
  %v1056 = vld [vmem:[#allocation3 + $0xb8] sm:$0xff]
  %v1057 = vpack.c.bf16 %v1051, %v1051
  %1058 = vmatprep.subr.bf16.mxu0 %v443
  %1059 = vmatpush1.bf16.msra.mxu0 %v442
  %1060 = vmatprep.subr.bf16.mxu0 %v439
  %1061 = vmatpush1.bf16.msra.mxu0 %v438
  %1062 = vmatprep.subr.bf16.mxu0 %v435
  %1063 = vmatpush1.bf16.msra.mxu0 %v434
  %1064 = vmatprep.subr.bf16.mxu0 %v431
  %1065 = vmatpush1.bf16.msra.mxu0 %v430
  %1066 = vmatprep.subr.bf16.mxu0 %v427
  %1067 = vmatpush1.bf16.msra.mxu0 %v426
  %1068 = vmatprep.subr.bf16.mxu0 %v423
  %1069 = vmatpush1.bf16.msra.mxu0 %v422
  %1070 = vmatprep.subr.bf16.mxu0 %v419
  %1071 = vmatpush1.bf16.msra.mxu0 %v418
  %1072 = vmatprep.subr.bf16.mxu0 %v415
  %1073 = vmatpush1.bf16.msra.mxu0 %v414
  %1074 = vmatprep.subr.bf16.mxu0 0
  %1075 = vmatpush2.bf16.msra.mxu0 0
  %1076 = vmatprep.subr.bf16.mxu0 0
  %1077 = vmatpush2.bf16.msra.mxu0 0
  %1078 = vmatprep.subr.bf16.mxu0 0
  %1079 = vmatpush2.bf16.msra.mxu0 0
  %1080 = vmatprep.subr.bf16.mxu0 0
  %1081 = vmatpush2.bf16.msra.mxu0 0
  %1082 = vmatprep.subr.bf16.mxu0 0
  %1083 = vmatpush2.bf16.msra.mxu0 0
  %1084 = vmatprep.subr.bf16.mxu0 0
  %1085 = vmatpush2.bf16.msra.mxu0 0
  %1086 = vmatprep.subr.bf16.mxu0 0
  %1087 = vmatpush2.bf16.msra.mxu0 0
  %1088 = vmatprep.subr.bf16.mxu0 0
  %1089 = vmatpush2.bf16.msra.mxu0 0
  %1090 = vmatprep.mubr.bf16.mxu0 0
  %1091 = vmatmul.mubr.bf16.gmra.mxu0 %v1057
  %v1092 = vpop.f32.mrf.mxu0
  %v1093 = vadd.f32 0.0, %v1092
  %v1094 = vpop.f32.mrf.mxu0
  %v1095 = vadd.f32 0.0, %v1094
  %v1096 = vpop.f32.mrf.mxu0
  %v1097 = vpop.f32.mrf.mxu0
  %1098 = vdwg.mxu0
  %1099 = vmatprep.subr.bf16.mxu0 %v445
  %1100 = vmatpush1.bf16.msra.mxu0 %v444
  %1101 = vmatprep.subr.bf16.mxu0 %v441
  %1102 = vmatpush1.bf16.msra.mxu0 %v440
  %1103 = vmatprep.subr.bf16.mxu0 %v437
  %1104 = vmatpush1.bf16.msra.mxu0 %v436
  %1105 = vmatprep.subr.bf16.mxu0 %v433
  %1106 = vmatpush1.bf16.msra.mxu0 %v432
  %1107 = vmatprep.subr.bf16.mxu0 %v429
  %1108 = vmatpush1.bf16.msra.mxu0 %v428
  %1109 = vmatprep.subr.bf16.mxu0 %v425
  %1110 = vmatpush1.bf16.msra.mxu0 %v424
  %1111 = vmatprep.subr.bf16.mxu0 %v421
  %1112 = vmatpush1.bf16.msra.mxu0 %v420
  %1113 = vmatprep.subr.bf16.mxu0 %v417
  %1114 = vmatpush1.bf16.msra.mxu0 %v416
  %1115 = vmatprep.subr.bf16.mxu0 0
  %1116 = vmatpush2.bf16.msra.mxu0 0
  %1117 = vmatprep.subr.bf16.mxu0 0
  %1118 = vmatpush2.bf16.msra.mxu0 0
  %1119 = vmatprep.subr.bf16.mxu0 0
  %1120 = vmatpush2.bf16.msra.mxu0 0
  %1121 = vmatprep.subr.bf16.mxu0 0
  %1122 = vmatpush2.bf16.msra.mxu0 0
  %1123 = vmatprep.subr.bf16.mxu0 0
  %1124 = vmatpush2.bf16.msra.mxu0 0
  %1125 = vmatprep.subr.bf16.mxu0 0
  %1126 = vmatpush2.bf16.msra.mxu0 0
  %1127 = vmatprep.subr.bf16.mxu0 0
  %1128 = vmatpush2.bf16.msra.mxu0 0
  %1129 = vmatprep.subr.bf16.mxu0 0
  %1130 = vmatpush2.bf16.msra.mxu0 0
  %1131 = vmatprep.mubr.bf16.mxu0 0
  %1132 = vmatmul.mubr.bf16.gmra.mxu0 %v1057
  %v1133 = vpop.f32.mrf.mxu0
  %v1134 = vadd.f32 0.0, %v1133
  %v1135 = vpop.f32.mrf.mxu0
  %v1136 = vadd.f32 0.0, %v1135
  %v1137 = vpop.f32.mrf.mxu0
  %v1138 = vpop.f32.mrf.mxu0
  %1139 = vdwg.mxu0
  %v1140 = vadd.f32 %v1053, %v1093
  %v1141 = vadd.f32 %v1054, %v1095
  %v1142 = vadd.f32 %v1055, %v1134
  %v1143 = vadd.f32 %v1056, %v1136
  %v1144 = vxor.u32 %v1140, 2147483648
  %v1145 = vxor.u32 %v1141, 2147483648
  %v1146 = vxor.u32 %v1143, 2147483648
  %v1147 = vmul.f32 %v1144, 1.442695
  %v1148 = vpow.pop %v1147
  %v1149 = vmul.f32 %v1145, 1.442695
  %v1150 = vpow.pop %v1149
  %v1151 = vmul.f32 %v1146, 1.442695
  %v1152 = vpow.pop %v1151
  %v1153 = vadd.f32 %v1148, 1.0
  %v1154 = vadd.f32 %v1150, 1.0
  %v1155 = vadd.f32 %v1152, 1.0
  %v1156 = vrcp.pop %v1153
  %v1157 = vmul.f32 1.0, %v1156
  %v1158 = vrcp.pop %v1154
  %v1159 = vmul.f32 1.0, %v1158
  %v1160 = vrcp.pop %v1155
  %v1161 = vmul.f32 1.0, %v1160
  %v1162 = vtanh.pop %v1142
  %v1163 = vmul.f32 %v1159, %v1049
  %v1164 = vmul.f32 %v1157, %v1162
  %v1165 = vadd.f32 %v1163, %v1164
  %v1166 = vtanh.pop %v1165
  %v1167 = vmul.f32 %v1161, %v1166
  %1168 = vst [vmem:[#allocation2 + $0x28] sm:$0xff] %v1167
  %v1169 = vld [vmem:[#allocation3 + $0xc0] sm:$0xff]
  %v1170 = vld [vmem:[#allocation3 + $0xc8] sm:$0xff]
  %v1171 = vld [vmem:[#allocation3 + $0xd0] sm:$0xff]
  %v1172 = vld [vmem:[#allocation3 + $0xd8] sm:$0xff]
  %v1173 = vpack.c.bf16 %v1167, %v1167
  %1174 = vmatprep.subr.bf16.mxu0 %v443
  %1175 = vmatpush1.bf16.msra.mxu0 %v442
  %1176 = vmatprep.subr.bf16.mxu0 %v439
  %1177 = vmatpush1.bf16.msra.mxu0 %v438
  %1178 = vmatprep.subr.bf16.mxu0 %v435
  %1179 = vmatpush1.bf16.msra.mxu0 %v434
  %1180 = vmatprep.subr.bf16.mxu0 %v431
  %1181 = vmatpush1.bf16.msra.mxu0 %v430
  %1182 = vmatprep.subr.bf16.mxu0 %v427
  %1183 = vmatpush1.bf16.msra.mxu0 %v426
  %1184 = vmatprep.subr.bf16.mxu0 %v423
  %1185 = vmatpush1.bf16.msra.mxu0 %v422
  %1186 = vmatprep.subr.bf16.mxu0 %v419
  %1187 = vmatpush1.bf16.msra.mxu0 %v418
  %1188 = vmatprep.subr.bf16.mxu0 %v415
  %1189 = vmatpush1.bf16.msra.mxu0 %v414
  %1190 = vmatprep.subr.bf16.mxu0 0
  %1191 = vmatpush2.bf16.msra.mxu0 0
  %1192 = vmatprep.subr.bf16.mxu0 0
  %1193 = vmatpush2.bf16.msra.mxu0 0
  %1194 = vmatprep.subr.bf16.mxu0 0
  %1195 = vmatpush2.bf16.msra.mxu0 0
  %1196 = vmatprep.subr.bf16.mxu0 0
  %1197 = vmatpush2.bf16.msra.mxu0 0
  %1198 = vmatprep.subr.bf16.mxu0 0
  %1199 = vmatpush2.bf16.msra.mxu0 0
  %1200 = vmatprep.subr.bf16.mxu0 0
  %1201 = vmatpush2.bf16.msra.mxu0 0
  %1202 = vmatprep.subr.bf16.mxu0 0
  %1203 = vmatpush2.bf16.msra.mxu0 0
  %1204 = vmatprep.subr.bf16.mxu0 0
  %1205 = vmatpush2.bf16.msra.mxu0 0
  %1206 = vmatprep.mubr.bf16.mxu0 0
  %1207 = vmatmul.mubr.bf16.gmra.mxu0 %v1173
  %v1208 = vpop.f32.mrf.mxu0
  %v1209 = vadd.f32 0.0, %v1208
  %v1210 = vpop.f32.mrf.mxu0
  %v1211 = vadd.f32 0.0, %v1210
  %v1212 = vpop.f32.mrf.mxu0
  %v1213 = vpop.f32.mrf.mxu0
  %1214 = vdwg.mxu0
  %1215 = vmatprep.subr.bf16.mxu0 %v445
  %1216 = vmatpush1.bf16.msra.mxu0 %v444
  %1217 = vmatprep.subr.bf16.mxu0 %v441
  %1218 = vmatpush1.bf16.msra.mxu0 %v440
  %1219 = vmatprep.subr.bf16.mxu0 %v437
  %1220 = vmatpush1.bf16.msra.mxu0 %v436
  %1221 = vmatprep.subr.bf16.mxu0 %v433
  %1222 = vmatpush1.bf16.msra.mxu0 %v432
  %1223 = vmatprep.subr.bf16.mxu0 %v429
  %1224 = vmatpush1.bf16.msra.mxu0 %v428
  %1225 = vmatprep.subr.bf16.mxu0 %v425
  %1226 = vmatpush1.bf16.msra.mxu0 %v424
  %1227 = vmatprep.subr.bf16.mxu0 %v421
  %1228 = vmatpush1.bf16.msra.mxu0 %v420
  %1229 = vmatprep.subr.bf16.mxu0 %v417
  %1230 = vmatpush1.bf16.msra.mxu0 %v416
  %1231 = vmatprep.subr.bf16.mxu0 0
  %1232 = vmatpush2.bf16.msra.mxu0 0
  %1233 = vmatprep.subr.bf16.mxu0 0
  %1234 = vmatpush2.bf16.msra.mxu0 0
  %1235 = vmatprep.subr.bf16.mxu0 0
  %1236 = vmatpush2.bf16.msra.mxu0 0
  %1237 = vmatprep.subr.bf16.mxu0 0
  %1238 = vmatpush2.bf16.msra.mxu0 0
  %1239 = vmatprep.subr.bf16.mxu0 0
  %1240 = vmatpush2.bf16.msra.mxu0 0
  %1241 = vmatprep.subr.bf16.mxu0 0
  %1242 = vmatpush2.bf16.msra.mxu0 0
  %1243 = vmatprep.subr.bf16.mxu0 0
  %1244 = vmatpush2.bf16.msra.mxu0 0
  %1245 = vmatprep.subr.bf16.mxu0 0
  %1246 = vmatpush2.bf16.msra.mxu0 0
  %1247 = vmatprep.mubr.bf16.mxu0 0
  %1248 = vmatmul.mubr.bf16.gmra.mxu0 %v1173
  %v1249 = vpop.f32.mrf.mxu0
  %v1250 = vadd.f32 0.0, %v1249
  %v1251 = vpop.f32.mrf.mxu0
  %v1252 = vadd.f32 0.0, %v1251
  %v1253 = vpop.f32.mrf.mxu0
  %v1254 = vpop.f32.mrf.mxu0
  %1255 = vdwg.mxu0
  %v1256 = vadd.f32 %v1169, %v1209
  %v1257 = vadd.f32 %v1170, %v1211
  %v1258 = vadd.f32 %v1171, %v1250
  %v1259 = vadd.f32 %v1172, %v1252
  %v1260 = vxor.u32 %v1256, 2147483648
  %v1261 = vxor.u32 %v1257, 2147483648
  %v1262 = vxor.u32 %v1259, 2147483648
  %v1263 = vmul.f32 %v1260, 1.442695
  %v1264 = vpow.pop %v1263
  %v1265 = vmul.f32 %v1261, 1.442695
  %v1266 = vpow.pop %v1265
  %v1267 = vmul.f32 %v1262, 1.442695
  %v1268 = vpow.pop %v1267
  %v1269 = vadd.f32 %v1264, 1.0
  %v1270 = vadd.f32 %v1266, 1.0
  %v1271 = vadd.f32 %v1268, 1.0
  %v1272 = vrcp.pop %v1269
  %v1273 = vmul.f32 1.0, %v1272
  %v1274 = vrcp.pop %v1270
  %v1275 = vmul.f32 1.0, %v1274
  %v1276 = vrcp.pop %v1271
  %v1277 = vmul.f32 1.0, %v1276
  %v1278 = vtanh.pop %v1258
  %v1279 = vmul.f32 %v1275, %v1165
  %v1280 = vmul.f32 %v1273, %v1278
  %v1281 = vadd.f32 %v1279, %v1280
  %v1282 = vtanh.pop %v1281
  %v1283 = vmul.f32 %v1277, %v1282
  %1284 = vst [vmem:[#allocation2 + $0x30] sm:$0xff] %v1283
  %v1285 = vld [vmem:[#allocation3 + $0xe0] sm:$0xff]
  %v1286 = vld [vmem:[#allocation3 + $0xe8] sm:$0xff]
  %v1287 = vld [vmem:[#allocation3 + $0xf0] sm:$0xff]
  %v1288 = vld [vmem:[#allocation3 + $0xf8] sm:$0xff]
  %v1289 = vpack.c.bf16 %v1283, %v1283
  %1290 = vmatprep.subr.bf16.mxu0 %v443
  %1291 = vmatpush1.bf16.msra.mxu0 %v442
  %1292 = vmatprep.subr.bf16.mxu0 %v439
  %1293 = vmatpush1.bf16.msra.mxu0 %v438
  %1294 = vmatprep.subr.bf16.mxu0 %v435
  %1295 = vmatpush1.bf16.msra.mxu0 %v434
  %1296 = vmatprep.subr.bf16.mxu0 %v431
  %1297 = vmatpush1.bf16.msra.mxu0 %v430
  %1298 = vmatprep.subr.bf16.mxu0 %v427
  %1299 = vmatpush1.bf16.msra.mxu0 %v426
  %1300 = vmatprep.subr.bf16.mxu0 %v423
  %1301 = vmatpush1.bf16.msra.mxu0 %v422
  %1302 = vmatprep.subr.bf16.mxu0 %v419
  %1303 = vmatpush1.bf16.msra.mxu0 %v418
  %1304 = vmatprep.subr.bf16.mxu0 %v415
  %1305 = vmatpush1.bf16.msra.mxu0 %v414
  %1306 = vmatprep.subr.bf16.mxu0 0
  %1307 = vmatpush2.bf16.msra.mxu0 0
  %1308 = vmatprep.subr.bf16.mxu0 0
  %1309 = vmatpush2.bf16.msra.mxu0 0
  %1310 = vmatprep.subr.bf16.mxu0 0
  %1311 = vmatpush2.bf16.msra.mxu0 0
  %1312 = vmatprep.subr.bf16.mxu0 0
  %1313 = vmatpush2.bf16.msra.mxu0 0
  %1314 = vmatprep.subr.bf16.mxu0 0
  %1315 = vmatpush2.bf16.msra.mxu0 0
  %1316 = vmatprep.subr.bf16.mxu0 0
  %1317 = vmatpush2.bf16.msra.mxu0 0
  %1318 = vmatprep.subr.bf16.mxu0 0
  %1319 = vmatpush2.bf16.msra.mxu0 0
  %1320 = vmatprep.subr.bf16.mxu0 0
  %1321 = vmatpush2.bf16.msra.mxu0 0
  %1322 = vmatprep.mubr.bf16.mxu0 0
  %1323 = vmatmul.mubr.bf16.gmra.mxu0 %v1289
  %v1324 = vpop.f32.mrf.mxu0
  %v1325 = vadd.f32 0.0, %v1324
  %v1326 = vpop.f32.mrf.mxu0
  %v1327 = vadd.f32 0.0, %v1326
  %v1328 = vpop.f32.mrf.mxu0
  %v1329 = vpop.f32.mrf.mxu0
  %1330 = vdwg.mxu0
  %1331 = vmatprep.subr.bf16.mxu0 %v445
  %1332 = vmatpush1.bf16.msra.mxu0 %v444
  %1333 = vmatprep.subr.bf16.mxu0 %v441
  %1334 = vmatpush1.bf16.msra.mxu0 %v440
  %1335 = vmatprep.subr.bf16.mxu0 %v437
  %1336 = vmatpush1.bf16.msra.mxu0 %v436
  %1337 = vmatprep.subr.bf16.mxu0 %v433
  %1338 = vmatpush1.bf16.msra.mxu0 %v432
  %1339 = vmatprep.subr.bf16.mxu0 %v429
  %1340 = vmatpush1.bf16.msra.mxu0 %v428
  %1341 = vmatprep.subr.bf16.mxu0 %v425
  %1342 = vmatpush1.bf16.msra.mxu0 %v424
  %1343 = vmatprep.subr.bf16.mxu0 %v421
  %1344 = vmatpush1.bf16.msra.mxu0 %v420
  %1345 = vmatprep.subr.bf16.mxu0 %v417
  %1346 = vmatpush1.bf16.msra.mxu0 %v416
  %1347 = vmatprep.subr.bf16.mxu0 0
  %1348 = vmatpush2.bf16.msra.mxu0 0
  %1349 = vmatprep.subr.bf16.mxu0 0
  %1350 = vmatpush2.bf16.msra.mxu0 0
  %1351 = vmatprep.subr.bf16.mxu0 0
  %1352 = vmatpush2.bf16.msra.mxu0 0
  %1353 = vmatprep.subr.bf16.mxu0 0
  %1354 = vmatpush2.bf16.msra.mxu0 0
  %1355 = vmatprep.subr.bf16.mxu0 0
  %1356 = vmatpush2.bf16.msra.mxu0 0
  %1357 = vmatprep.subr.bf16.mxu0 0
  %1358 = vmatpush2.bf16.msra.mxu0 0
  %1359 = vmatprep.subr.bf16.mxu0 0
  %1360 = vmatpush2.bf16.msra.mxu0 0
  %1361 = vmatprep.subr.bf16.mxu0 0
  %1362 = vmatpush2.bf16.msra.mxu0 0
  %1363 = vmatprep.mubr.bf16.mxu0 0
  %1364 = vmatmul.mubr.bf16.gmra.mxu0 %v1289
  %v1365 = vpop.f32.mrf.mxu0
  %v1366 = vadd.f32 0.0, %v1365
  %v1367 = vpop.f32.mrf.mxu0
  %v1368 = vadd.f32 0.0, %v1367
  %v1369 = vpop.f32.mrf.mxu0
  %v1370 = vpop.f32.mrf.mxu0
  %1371 = vdwg.mxu0
  %v1372 = vadd.f32 %v1285, %v1325
  %v1373 = vadd.f32 %v1286, %v1327
  %v1374 = vadd.f32 %v1287, %v1366
  %v1375 = vadd.f32 %v1288, %v1368
  %v1376 = vxor.u32 %v1372, 2147483648
  %v1377 = vxor.u32 %v1373, 2147483648
  %v1378 = vxor.u32 %v1375, 2147483648
  %v1379 = vmul.f32 %v1376, 1.442695
  %v1380 = vpow.pop %v1379
  %v1381 = vmul.f32 %v1377, 1.442695
  %v1382 = vpow.pop %v1381
  %v1383 = vmul.f32 %v1378, 1.442695
  %v1384 = vpow.pop %v1383
  %v1385 = vadd.f32 %v1380, 1.0
  %v1386 = vadd.f32 %v1382, 1.0
  %v1387 = vadd.f32 %v1384, 1.0
  %v1388 = vrcp.pop %v1385
  %v1389 = vmul.f32 1.0, %v1388
  %v1390 = vrcp.pop %v1386
  %v1391 = vmul.f32 1.0, %v1390
  %v1392 = vrcp.pop %v1387
  %v1393 = vmul.f32 1.0, %v1392
  %v1394 = vtanh.pop %v1374
  %v1395 = vmul.f32 %v1391, %v1281
  %v1396 = vmul.f32 %v1389, %v1394
  %v1397 = vadd.f32 %v1395, %v1396
  %v1398 = vtanh.pop %v1397
  %v1399 = vmul.f32 %v1393, %v1398
  %1400 = vst [vmem:[#allocation2 + $0x38] sm:$0xff] %v1399
  %v1401 = vld [vmem:[%s4] sm:$0xff]
  %v1402 = vld [vmem:[%s4 + $0x8] sm:$0xff]
  %v1403 = vld [vmem:[%s4 + $0x10] sm:$0xff]
  %v1404 = vld [vmem:[%s4 + $0x18] sm:$0xff]
  %v1405 = vld [vmem:[%s4 + $0x20] sm:$0xff]
  %v1406 = vld [vmem:[%s4 + $0x28] sm:$0xff]
  %v1407 = vld [vmem:[%s4 + $0x30] sm:$0xff]
  %v1408 = vld [vmem:[%s4 + $0x38] sm:$0xff]
  %v1409 = vld [vmem:[%s4 + $0x40] sm:$0xff]
  %v1410 = vld [vmem:[%s4 + $0x48] sm:$0xff]
  %v1411 = vld [vmem:[%s4 + $0x50] sm:$0xff]
  %v1412 = vld [vmem:[%s4 + $0x58] sm:$0xff]
  %v1413 = vld [vmem:[%s4 + $0x60] sm:$0xff]
  %v1414 = vld [vmem:[%s4 + $0x68] sm:$0xff]
  %v1415 = vld [vmem:[%s4 + $0x70] sm:$0xff]
  %v1416 = vld [vmem:[%s4 + $0x78] sm:$0xff]
  %v1417 = vld [vmem:[%s4 + $0x80] sm:$0xff]
  %v1418 = vld [vmem:[%s4 + $0x88] sm:$0xff]
  %v1419 = vld [vmem:[%s4 + $0x90] sm:$0xff]
  %v1420 = vld [vmem:[%s4 + $0x98] sm:$0xff]
  %v1421 = vld [vmem:[%s4 + $0xa0] sm:$0xff]
  %v1422 = vld [vmem:[%s4 + $0xa8] sm:$0xff]
  %v1423 = vld [vmem:[%s4 + $0xb0] sm:$0xff]
  %v1424 = vld [vmem:[%s4 + $0xb8] sm:$0xff]
  %v1425 = vld [vmem:[%s4 + $0xc0] sm:$0xff]
  %v1426 = vld [vmem:[%s4 + $0xc8] sm:$0xff]
  %v1427 = vld [vmem:[%s4 + $0xd0] sm:$0xff]
  %v1428 = vld [vmem:[%s4 + $0xd8] sm:$0xff]
  %v1429 = vld [vmem:[%s4 + $0xe0] sm:$0xff]
  %v1430 = vld [vmem:[%s4 + $0xe8] sm:$0xff]
  %v1431 = vld [vmem:[%s4 + $0xf0] sm:$0xff]
  %v1432 = vld [vmem:[%s4 + $0xf8] sm:$0xff]
  %v1433 = vld [vmem:[%s5] sm:$0xff]
  %v1434 = vld [vmem:[%s5 + $0x8] sm:$0xff]
  %v1435 = vld [vmem:[%s5 + $0x10] sm:$0xff]
  %v1436 = vld [vmem:[%s5 + $0x18] sm:$0xff]
  %v1437 = vld [vmem:[%s5 + $0x20] sm:$0xff]
  %v1438 = vld [vmem:[%s5 + $0x28] sm:$0xff]
  %v1439 = vld [vmem:[%s5 + $0x30] sm:$0xff]
  %v1440 = vld [vmem:[%s5 + $0x38] sm:$0xff]
  %v1441 = vld [vmem:[%s5 + $0x40] sm:$0xff]
  %v1442 = vld [vmem:[%s5 + $0x48] sm:$0xff]
  %v1443 = vld [vmem:[%s5 + $0x50] sm:$0xff]
  %v1444 = vld [vmem:[%s5 + $0x58] sm:$0xff]
  %v1445 = vld [vmem:[%s5 + $0x60] sm:$0xff]
  %v1446 = vld [vmem:[%s5 + $0x68] sm:$0xff]
  %v1447 = vld [vmem:[%s5 + $0x70] sm:$0xff]
  %v1448 = vld [vmem:[%s5 + $0x78] sm:$0xff]
  %v1449 = vld [vmem:[%s5 + $0x80] sm:$0xff]
  %v1450 = vld [vmem:[%s5 + $0x88] sm:$0xff]
  %v1451 = vld [vmem:[%s5 + $0x90] sm:$0xff]
  %v1452 = vld [vmem:[%s5 + $0x98] sm:$0xff]
  %v1453 = vld [vmem:[%s5 + $0xa0] sm:$0xff]
  %v1454 = vld [vmem:[%s5 + $0xa8] sm:$0xff]
  %v1455 = vld [vmem:[%s5 + $0xb0] sm:$0xff]
  %v1456 = vld [vmem:[%s5 + $0xb8] sm:$0xff]
  %v1457 = vld [vmem:[%s5 + $0xc0] sm:$0xff]
  %v1458 = vld [vmem:[%s5 + $0xc8] sm:$0xff]
  %v1459 = vld [vmem:[%s5 + $0xd0] sm:$0xff]
  %v1460 = vld [vmem:[%s5 + $0xd8] sm:$0xff]
  %v1461 = vld [vmem:[%s5 + $0xe0] sm:$0xff]
  %v1462 = vld [vmem:[%s5 + $0xe8] sm:$0xff]
  %v1463 = vld [vmem:[%s5 + $0xf0] sm:$0xff]
  %v1464 = vld [vmem:[%s5 + $0xf8] sm:$0xff]
  %v1465 = vld [vmem:[%s6] sm:$0xf]
  %v1466 = vld [vmem:[#allocation2] sm:$0xff]
  %v1467 = vld [vmem:[#allocation2 + $0x8] sm:$0xff]
  %v1468 = vld [vmem:[#allocation2 + $0x10] sm:$0xff]
  %v1469 = vld [vmem:[#allocation2 + $0x18] sm:$0xff]
  %v1470 = vld [vmem:[#allocation2 + $0x20] sm:$0xff]
  %v1471 = vld [vmem:[#allocation2 + $0x28] sm:$0xff]
  %v1472 = vld [vmem:[#allocation2 + $0x30] sm:$0xff]
  %v1473 = vld [vmem:[#allocation2 + $0x38] sm:$0xff]
  %v1474 = vpack.c.bf16 %v1467, %v1466
  %v1475 = vpack.c.bf16 %v1469, %v1468
  %v1476 = vpack.c.bf16 %v1471, %v1470
  %v1477 = vpack.c.bf16 %v1473, %v1472
  %v1479 = vlaneseq
  %v1480 = vshrl.u32 %v1479, 7
  %v1481 = vsub.s32 0, %v1480
  %v1482 = vrot.slane %v1465, %v1481
  %v1483 = vlaneseq
  %v1484 = vshrl.u32 %v1483, 7
  %v1485 = vsub.s32 1, %v1484
  %v1486 = vrot.slane %v1465, %v1485
  %v1487 = vlaneseq
  %v1488 = vshrl.u32 %v1487, 7
  %v1489 = vsub.s32 2, %v1488
  %v1490 = vrot.slane %v1465, %v1489
  %v1491 = vlaneseq
  %v1492 = vshrl.u32 %v1491, 7
  %v1493 = vsub.s32 3, %v1492
  %v1494 = vrot.slane %v1465, %v1493
  %v1531 = vunpack.c.l.b16 %v1401
  %v1532 = vunpack.c.h.b16 %v1401
  %v1533 = vunpack.c.l.b16 %v1402
  %v1534 = vunpack.c.h.b16 %v1402
  %v1535 = vunpack.c.l.b16 %v1403
  %v1536 = vunpack.c.h.b16 %v1403
  %v1537 = vunpack.c.l.b16 %v1404
  %v1538 = vunpack.c.h.b16 %v1404
  %v1539 = vunpack.c.l.b16 %v1405
  %v1540 = vunpack.c.h.b16 %v1405
  %v1541 = vunpack.c.l.b16 %v1406
  %v1542 = vunpack.c.h.b16 %v1406
  %v1543 = vunpack.c.l.b16 %v1407
  %v1544 = vunpack.c.h.b16 %v1407
  %v1545 = vunpack.c.l.b16 %v1408
  %v1546 = vunpack.c.h.b16 %v1408
  %v1547 = vunpack.c.l.b16 %v1409
  %v1548 = vunpack.c.h.b16 %v1409
  %v1549 = vunpack.c.l.b16 %v1410
  %v1550 = vunpack.c.h.b16 %v1410
  %v1551 = vunpack.c.l.b16 %v1411
  %v1552 = vunpack.c.h.b16 %v1411
  %v1553 = vunpack.c.l.b16 %v1412
  %v1554 = vunpack.c.h.b16 %v1412
  %v1555 = vunpack.c.l.b16 %v1413
  %v1556 = vunpack.c.h.b16 %v1413
  %v1557 = vunpack.c.l.b16 %v1414
  %v1558 = vunpack.c.h.b16 %v1414
  %v1559 = vunpack.c.l.b16 %v1415
  %v1560 = vunpack.c.h.b16 %v1415
  %v1561 = vunpack.c.l.b16 %v1416
  %v1562 = vunpack.c.h.b16 %v1416
  %v1563 = vunpack.c.l.b16 %v1417
  %v1564 = vunpack.c.h.b16 %v1417
  %v1565 = vunpack.c.l.b16 %v1418
  %v1566 = vunpack.c.h.b16 %v1418
  %v1567 = vunpack.c.l.b16 %v1419
  %v1568 = vunpack.c.h.b16 %v1419
  %v1569 = vunpack.c.l.b16 %v1420
  %v1570 = vunpack.c.h.b16 %v1420
  %v1571 = vunpack.c.l.b16 %v1421
  %v1572 = vunpack.c.h.b16 %v1421
  %v1573 = vunpack.c.l.b16 %v1422
  %v1574 = vunpack.c.h.b16 %v1422
  %v1575 = vunpack.c.l.b16 %v1423
  %v1576 = vunpack.c.h.b16 %v1423
  %v1577 = vunpack.c.l.b16 %v1424
  %v1578 = vunpack.c.h.b16 %v1424
  %v1579 = vunpack.c.l.b16 %v1425
  %v1580 = vunpack.c.h.b16 %v1425
  %v1581 = vunpack.c.l.b16 %v1426
  %v1582 = vunpack.c.h.b16 %v1426
  %v1583 = vunpack.c.l.b16 %v1427
  %v1584 = vunpack.c.h.b16 %v1427
  %v1585 = vunpack.c.l.b16 %v1428
  %v1586 = vunpack.c.h.b16 %v1428
  %v1587 = vunpack.c.l.b16 %v1429
  %v1588 = vunpack.c.h.b16 %v1429
  %v1589 = vunpack.c.l.b16 %v1430
  %v1590 = vunpack.c.h.b16 %v1430
  %v1591 = vunpack.c.l.b16 %v1431
  %v1592 = vunpack.c.h.b16 %v1431
  %v1593 = vunpack.c.l.b16 %v1432
  %v1594 = vunpack.c.h.b16 %v1432
  %v1595 = vpack.c.b16 %v1535, %v1531
  %v1596 = vpack.c.b16 %v1536, %v1532
  %v1597 = vpack.c.b16 %v1537, %v1533
  %v1598 = vpack.c.b16 %v1538, %v1534
  %v1599 = vpack.c.b16 %v1543, %v1539
  %v1600 = vpack.c.b16 %v1544, %v1540
  %v1601 = vpack.c.b16 %v1545, %v1541
  %v1602 = vpack.c.b16 %v1546, %v1542
  %v1603 = vpack.c.b16 %v1551, %v1547
  %v1604 = vpack.c.b16 %v1552, %v1548
  %v1605 = vpack.c.b16 %v1553, %v1549
  %v1606 = vpack.c.b16 %v1554, %v1550
  %v1607 = vpack.c.b16 %v1559, %v1555
  %v1608 = vpack.c.b16 %v1560, %v1556
  %v1609 = vpack.c.b16 %v1561, %v1557
  %v1610 = vpack.c.b16 %v1562, %v1558
  %v1611 = vpack.c.b16 %v1567, %v1563
  %v1612 = vpack.c.b16 %v1568, %v1564
  %v1613 = vpack.c.b16 %v1569, %v1565
  %v1614 = vpack.c.b16 %v1570, %v1566
  %v1615 = vpack.c.b16 %v1575, %v1571
  %v1616 = vpack.c.b16 %v1576, %v1572
  %v1617 = vpack.c.b16 %v1577, %v1573
  %v1618 = vpack.c.b16 %v1578, %v1574
  %v1619 = vpack.c.b16 %v1583, %v1579
  %v1620 = vpack.c.b16 %v1584, %v1580
  %v1621 = vpack.c.b16 %v1585, %v1581
  %v1622 = vpack.c.b16 %v1586, %v1582
  %v1623 = vpack.c.b16 %v1591, %v1587
  %v1624 = vpack.c.b16 %v1592, %v1588
  %v1625 = vpack.c.b16 %v1593, %v1589
  %v1626 = vpack.c.b16 %v1594, %v1590
  %1659 = vmatprep.subr.bf16.mxu0 %v1624
  %1660 = vmatpush1.bf16.msra.mxu0 %v1623
  %1661 = vmatprep.subr.bf16.mxu0 %v1620
  %1662 = vmatpush1.bf16.msra.mxu0 %v1619
  %1663 = vmatprep.subr.bf16.mxu0 %v1616
  %1664 = vmatpush1.bf16.msra.mxu0 %v1615
  %1665 = vmatprep.subr.bf16.mxu0 %v1612
  %1666 = vmatpush1.bf16.msra.mxu0 %v1611
  %1667 = vmatprep.subr.bf16.mxu0 %v1608
  %1668 = vmatpush1.bf16.msra.mxu0 %v1607
  %1669 = vmatprep.subr.bf16.mxu0 %v1604
  %1670 = vmatpush1.bf16.msra.mxu0 %v1603
  %1671 = vmatprep.subr.bf16.mxu0 %v1600
  %1672 = vmatpush1.bf16.msra.mxu0 %v1599
  %1673 = vmatprep.subr.bf16.mxu0 %v1596
  %1674 = vmatpush1.bf16.msra.mxu0 %v1595
  %1675 = vmatprep.subr.bf16.mxu0 0
  %1676 = vmatpush2.bf16.msra.mxu0 0
  %1677 = vmatprep.subr.bf16.mxu0 0
  %1678 = vmatpush2.bf16.msra.mxu0 0
  %1679 = vmatprep.subr.bf16.mxu0 0
  %1680 = vmatpush2.bf16.msra.mxu0 0
  %1681 = vmatprep.subr.bf16.mxu0 0
  %1682 = vmatpush2.bf16.msra.mxu0 0
  %1683 = vmatprep.subr.bf16.mxu0 0
  %1684 = vmatpush2.bf16.msra.mxu0 0
  %1685 = vmatprep.subr.bf16.mxu0 0
  %1686 = vmatpush2.bf16.msra.mxu0 0
  %1687 = vmatprep.subr.bf16.mxu0 0
  %1688 = vmatpush2.bf16.msra.mxu0 0
  %1689 = vmatprep.subr.bf16.mxu0 0
  %1690 = vmatpush2.bf16.msra.mxu0 0
  %1691 = vmatprep.mubr.bf16.mxu0 0
  %1692 = vmatmul.mubr.bf16.gmra.mxu0 %v1474
  %v1693 = vpop.f32.mrf.mxu0
  %v1694 = vadd.f32 %v1482, %v1693
  %v1695 = vpop.f32.mrf.mxu0
  %v1696 = vadd.f32 %v1486, %v1695
  %v1697 = vpop.f32.mrf.mxu0
  %v1698 = vadd.f32 %v1482, %v1697
  %v1699 = vpop.f32.mrf.mxu0
  %v1700 = vadd.f32 %v1486, %v1699
  %1701 = vmatprep.mubr.bf16.mxu0 0
  %1702 = vmatmul.mubr.bf16.gmra.mxu0 %v1475
  %v1703 = vpop.f32.mrf.mxu0
  %v1704 = vadd.f32 %v1482, %v1703
  %v1705 = vpop.f32.mrf.mxu0
  %v1706 = vadd.f32 %v1486, %v1705
  %v1707 = vpop.f32.mrf.mxu0
  %v1708 = vadd.f32 %v1482, %v1707
  %v1709 = vpop.f32.mrf.mxu0
  %v1710 = vadd.f32 %v1486, %v1709
  %1711 = vmatprep.mubr.bf16.mxu0 0
  %1712 = vmatmul.mubr.bf16.gmra.mxu0 %v1476
  %v1713 = vpop.f32.mrf.mxu0
  %v1714 = vadd.f32 %v1482, %v1713
  %v1715 = vpop.f32.mrf.mxu0
  %v1716 = vadd.f32 %v1486, %v1715
  %v1717 = vpop.f32.mrf.mxu0
  %v1718 = vadd.f32 %v1482, %v1717
  %v1719 = vpop.f32.mrf.mxu0
  %v1720 = vadd.f32 %v1486, %v1719
  %1721 = vmatprep.mubr.bf16.mxu0 0
  %1722 = vmatmul.mubr.bf16.gmra.mxu0 %v1477
  %v1723 = vpop.f32.mrf.mxu0
  %v1724 = vadd.f32 %v1482, %v1723
  %v1725 = vpop.f32.mrf.mxu0
  %v1726 = vadd.f32 %v1486, %v1725
  %v1727 = vpop.f32.mrf.mxu0
  %v1728 = vadd.f32 %v1482, %v1727
  %v1729 = vpop.f32.mrf.mxu0
  %v1730 = vadd.f32 %v1486, %v1729
  %1731 = vdwg.mxu0
  %1732 = vmatprep.subr.bf16.mxu0 %v1626
  %1733 = vmatpush1.bf16.msra.mxu0 %v1625
  %1734 = vmatprep.subr.bf16.mxu0 %v1622
  %1735 = vmatpush1.bf16.msra.mxu0 %v1621
  %1736 = vmatprep.subr.bf16.mxu0 %v1618
  %1737 = vmatpush1.bf16.msra.mxu0 %v1617
  %1738 = vmatprep.subr.bf16.mxu0 %v1614
  %1739 = vmatpush1.bf16.msra.mxu0 %v1613
  %1740 = vmatprep.subr.bf16.mxu0 %v1610
  %1741 = vmatpush1.bf16.msra.mxu0 %v1609
  %1742 = vmatprep.subr.bf16.mxu0 %v1606
  %1743 = vmatpush1.bf16.msra.mxu0 %v1605
  %1744 = vmatprep.subr.bf16.mxu0 %v1602
  %1745 = vmatpush1.bf16.msra.mxu0 %v1601
  %1746 = vmatprep.subr.bf16.mxu0 %v1598
  %1747 = vmatpush1.bf16.msra.mxu0 %v1597
  %1748 = vmatprep.subr.bf16.mxu0 0
  %1749 = vmatpush2.bf16.msra.mxu0 0
  %1750 = vmatprep.subr.bf16.mxu0 0
  %1751 = vmatpush2.bf16.msra.mxu0 0
  %1752 = vmatprep.subr.bf16.mxu0 0
  %1753 = vmatpush2.bf16.msra.mxu0 0
  %1754 = vmatprep.subr.bf16.mxu0 0
  %1755 = vmatpush2.bf16.msra.mxu0 0
  %1756 = vmatprep.subr.bf16.mxu0 0
  %1757 = vmatpush2.bf16.msra.mxu0 0
  %1758 = vmatprep.subr.bf16.mxu0 0
  %1759 = vmatpush2.bf16.msra.mxu0 0
  %1760 = vmatprep.subr.bf16.mxu0 0
  %1761 = vmatpush2.bf16.msra.mxu0 0
  %1762 = vmatprep.subr.bf16.mxu0 0
  %1763 = vmatpush2.bf16.msra.mxu0 0
  %1764 = vmatprep.mubr.bf16.mxu0 0
  %1765 = vmatmul.mubr.bf16.gmra.mxu0 %v1474
  %v1766 = vpop.f32.mrf.mxu0
  %v1767 = vadd.f32 %v1490, %v1766
  %v1768 = vpop.f32.mrf.mxu0
  %v1769 = vadd.f32 %v1494, %v1768
  %v1770 = vpop.f32.mrf.mxu0
  %v1771 = vadd.f32 %v1490, %v1770
  %v1772 = vpop.f32.mrf.mxu0
  %v1773 = vadd.f32 %v1494, %v1772
  %1774 = vmatprep.mubr.bf16.mxu0 0
  %1775 = vmatmul.mubr.bf16.gmra.mxu0 %v1475
  %v1776 = vpop.f32.mrf.mxu0
  %v1777 = vadd.f32 %v1490, %v1776
  %v1778 = vpop.f32.mrf.mxu0
  %v1779 = vadd.f32 %v1494, %v1778
  %v1780 = vpop.f32.mrf.mxu0
  %v1781 = vadd.f32 %v1490, %v1780
  %v1782 = vpop.f32.mrf.mxu0
  %v1783 = vadd.f32 %v1494, %v1782
  %1784 = vmatprep.mubr.bf16.mxu0 0
  %1785 = vmatmul.mubr.bf16.gmra.mxu0 %v1476
  %v1786 = vpop.f32.mrf.mxu0
  %v1787 = vadd.f32 %v1490, %v1786
  %v1788 = vpop.f32.mrf.mxu0
  %v1789 = vadd.f32 %v1494, %v1788
  %v1790 = vpop.f32.mrf.mxu0
  %v1791 = vadd.f32 %v1490, %v1790
  %v1792 = vpop.f32.mrf.mxu0
  %v1793 = vadd.f32 %v1494, %v1792
  %1794 = vmatprep.mubr.bf16.mxu0 0
  %1795 = vmatmul.mubr.bf16.gmra.mxu0 %v1477
  %v1796 = vpop.f32.mrf.mxu0
  %v1797 = vadd.f32 %v1490, %v1796
  %v1798 = vpop.f32.mrf.mxu0
  %v1799 = vadd.f32 %v1494, %v1798
  %v1800 = vpop.f32.mrf.mxu0
  %v1801 = vadd.f32 %v1490, %v1800
  %v1802 = vpop.f32.mrf.mxu0
  %v1803 = vadd.f32 %v1494, %v1802
  %1804 = vdwg.mxu0
  %1805 = vst [vmem:[#allocation3] sm:$0xff] %v1694
  %1806 = vst [vmem:[#allocation3 + $0x8] sm:$0xff] %v1696
  %1807 = vst [vmem:[#allocation3 + $0x10] sm:$0xff] %v1767
  %1808 = vst [vmem:[#allocation3 + $0x18] sm:$0xff] %v1769
  %1809 = vst [vmem:[#allocation3 + $0x20] sm:$0xff] %v1698
  %1810 = vst [vmem:[#allocation3 + $0x28] sm:$0xff] %v1700
  %1811 = vst [vmem:[#allocation3 + $0x30] sm:$0xff] %v1771
  %1812 = vst [vmem:[#allocation3 + $0x38] sm:$0xff] %v1773
  %1813 = vst [vmem:[#allocation3 + $0x40] sm:$0xff] %v1704
  %1814 = vst [vmem:[#allocation3 + $0x48] sm:$0xff] %v1706
  %1815 = vst [vmem:[#allocation3 + $0x50] sm:$0xff] %v1777
  %1816 = vst [vmem:[#allocation3 + $0x58] sm:$0xff] %v1779
  %1817 = vst [vmem:[#allocation3 + $0x60] sm:$0xff] %v1708
  %1818 = vst [vmem:[#allocation3 + $0x68] sm:$0xff] %v1710
  %1819 = vst [vmem:[#allocation3 + $0x70] sm:$0xff] %v1781
  %1820 = vst [vmem:[#allocation3 + $0x78] sm:$0xff] %v1783
  %1821 = vst [vmem:[#allocation3 + $0x80] sm:$0xff] %v1714
  %1822 = vst [vmem:[#allocation3 + $0x88] sm:$0xff] %v1716
  %1823 = vst [vmem:[#allocation3 + $0x90] sm:$0xff] %v1787
  %1824 = vst [vmem:[#allocation3 + $0x98] sm:$0xff] %v1789
  %1825 = vst [vmem:[#allocation3 + $0xa0] sm:$0xff] %v1718
  %1826 = vst [vmem:[#allocation3 + $0xa8] sm:$0xff] %v1720
  %1827 = vst [vmem:[#allocation3 + $0xb0] sm:$0xff] %v1791
  %1828 = vst [vmem:[#allocation3 + $0xb8] sm:$0xff] %v1793
  %1829 = vst [vmem:[#allocation3 + $0xc0] sm:$0xff] %v1724
  %1830 = vst [vmem:[#allocation3 + $0xc8] sm:$0xff] %v1726
  %1831 = vst [vmem:[#allocation3 + $0xd0] sm:$0xff] %v1797
  %1832 = vst [vmem:[#allocation3 + $0xd8] sm:$0xff] %v1799
  %1833 = vst [vmem:[#allocation3 + $0xe0] sm:$0xff] %v1728
  %1834 = vst [vmem:[#allocation3 + $0xe8] sm:$0xff] %v1730
  %1835 = vst [vmem:[#allocation3 + $0xf0] sm:$0xff] %v1801
  %1836 = vst [vmem:[#allocation3 + $0xf8] sm:$0xff] %v1803
  %v1837 = vld [vmem:[#allocation3] sm:$0xff]
  %v1838 = vld [vmem:[#allocation3 + $0x8] sm:$0xff]
  %v1839 = vld [vmem:[#allocation3 + $0x10] sm:$0xff]
  %v1840 = vld [vmem:[#allocation3 + $0x18] sm:$0xff]
  %v1873 = vunpack.c.l.b16 %v1433
  %v1874 = vunpack.c.h.b16 %v1433
  %v1875 = vunpack.c.l.b16 %v1434
  %v1876 = vunpack.c.h.b16 %v1434
  %v1877 = vunpack.c.l.b16 %v1435
  %v1878 = vunpack.c.h.b16 %v1435
  %v1879 = vunpack.c.l.b16 %v1436
  %v1880 = vunpack.c.h.b16 %v1436
  %v1881 = vunpack.c.l.b16 %v1437
  %v1882 = vunpack.c.h.b16 %v1437
  %v1883 = vunpack.c.l.b16 %v1438
  %v1884 = vunpack.c.h.b16 %v1438
  %v1885 = vunpack.c.l.b16 %v1439
  %v1886 = vunpack.c.h.b16 %v1439
  %v1887 = vunpack.c.l.b16 %v1440
  %v1888 = vunpack.c.h.b16 %v1440
  %v1889 = vunpack.c.l.b16 %v1441
  %v1890 = vunpack.c.h.b16 %v1441
  %v1891 = vunpack.c.l.b16 %v1442
  %v1892 = vunpack.c.h.b16 %v1442
  %v1893 = vunpack.c.l.b16 %v1443
  %v1894 = vunpack.c.h.b16 %v1443
  %v1895 = vunpack.c.l.b16 %v1444
  %v1896 = vunpack.c.h.b16 %v1444
  %v1897 = vunpack.c.l.b16 %v1445
  %v1898 = vunpack.c.h.b16 %v1445
  %v1899 = vunpack.c.l.b16 %v1446
  %v1900 = vunpack.c.h.b16 %v1446
  %v1901 = vunpack.c.l.b16 %v1447
  %v1902 = vunpack.c.h.b16 %v1447
  %v1903 = vunpack.c.l.b16 %v1448
  %v1904 = vunpack.c.h.b16 %v1448
  %v1905 = vunpack.c.l.b16 %v1449
  %v1906 = vunpack.c.h.b16 %v1449
  %v1907 = vunpack.c.l.b16 %v1450
  %v1908 = vunpack.c.h.b16 %v1450
  %v1909 = vunpack.c.l.b16 %v1451
  %v1910 = vunpack.c.h.b16 %v1451
  %v1911 = vunpack.c.l.b16 %v1452
  %v1912 = vunpack.c.h.b16 %v1452
  %v1913 = vunpack.c.l.b16 %v1453
  %v1914 = vunpack.c.h.b16 %v1453
  %v1915 = vunpack.c.l.b16 %v1454
  %v1916 = vunpack.c.h.b16 %v1454
  %v1917 = vunpack.c.l.b16 %v1455
  %v1918 = vunpack.c.h.b16 %v1455
  %v1919 = vunpack.c.l.b16 %v1456
  %v1920 = vunpack.c.h.b16 %v1456
  %v1921 = vunpack.c.l.b16 %v1457
  %v1922 = vunpack.c.h.b16 %v1457
  %v1923 = vunpack.c.l.b16 %v1458
  %v1924 = vunpack.c.h.b16 %v1458
  %v1925 = vunpack.c.l.b16 %v1459
  %v1926 = vunpack.c.h.b16 %v1459
  %v1927 = vunpack.c.l.b16 %v1460
  %v1928 = vunpack.c.h.b16 %v1460
  %v1929 = vunpack.c.l.b16 %v1461
  %v1930 = vunpack.c.h.b16 %v1461
  %v1931 = vunpack.c.l.b16 %v1462
  %v1932 = vunpack.c.h.b16 %v1462
  %v1933 = vunpack.c.l.b16 %v1463
  %v1934 = vunpack.c.h.b16 %v1463
  %v1935 = vunpack.c.l.b16 %v1464
  %v1936 = vunpack.c.h.b16 %v1464
  %v1937 = vpack.c.b16 %v1877, %v1873
  %v1938 = vpack.c.b16 %v1878, %v1874
  %v1939 = vpack.c.b16 %v1879, %v1875
  %v1940 = vpack.c.b16 %v1880, %v1876
  %v1941 = vpack.c.b16 %v1885, %v1881
  %v1942 = vpack.c.b16 %v1886, %v1882
  %v1943 = vpack.c.b16 %v1887, %v1883
  %v1944 = vpack.c.b16 %v1888, %v1884
  %v1945 = vpack.c.b16 %v1893, %v1889
  %v1946 = vpack.c.b16 %v1894, %v1890
  %v1947 = vpack.c.b16 %v1895, %v1891
  %v1948 = vpack.c.b16 %v1896, %v1892
  %v1949 = vpack.c.b16 %v1901, %v1897
  %v1950 = vpack.c.b16 %v1902, %v1898
  %v1951 = vpack.c.b16 %v1903, %v1899
  %v1952 = vpack.c.b16 %v1904, %v1900
  %v1953 = vpack.c.b16 %v1909, %v1905
  %v1954 = vpack.c.b16 %v1910, %v1906
  %v1955 = vpack.c.b16 %v1911, %v1907
  %v1956 = vpack.c.b16 %v1912, %v1908
  %v1957 = vpack.c.b16 %v1917, %v1913
  %v1958 = vpack.c.b16 %v1918, %v1914
  %v1959 = vpack.c.b16 %v1919, %v1915
  %v1960 = vpack.c.b16 %v1920, %v1916
  %v1961 = vpack.c.b16 %v1925, %v1921
  %v1962 = vpack.c.b16 %v1926, %v1922
  %v1963 = vpack.c.b16 %v1927, %v1923
  %v1964 = vpack.c.b16 %v1928, %v1924
  %v1965 = vpack.c.b16 %v1933, %v1929
  %v1966 = vpack.c.b16 %v1934, %v1930
  %v1967 = vpack.c.b16 %v1935, %v1931
  %v1968 = vpack.c.b16 %v1936, %v1932
  %2001 = vmatprep.subr.bf16.mxu0 %v1966
  %2002 = vmatpush1.bf16.msra.mxu0 %v1965
  %2003 = vmatprep.subr.bf16.mxu0 %v1962
  %2004 = vmatpush1.bf16.msra.mxu0 %v1961
  %2005 = vmatprep.subr.bf16.mxu0 %v1958
  %2006 = vmatpush1.bf16.msra.mxu0 %v1957
  %2007 = vmatprep.subr.bf16.mxu0 %v1954
  %2008 = vmatpush1.bf16.msra.mxu0 %v1953
  %2009 = vmatprep.subr.bf16.mxu0 %v1950
  %2010 = vmatpush1.bf16.msra.mxu0 %v1949
  %2011 = vmatprep.subr.bf16.mxu0 %v1946
  %2012 = vmatpush1.bf16.msra.mxu0 %v1945
  %2013 = vmatprep.subr.bf16.mxu0 %v1942
  %2014 = vmatpush1.bf16.msra.mxu0 %v1941
  %2015 = vmatprep.subr.bf16.mxu0 %v1938
  %2016 = vmatpush1.bf16.msra.mxu0 %v1937
  %2017 = vmatprep.subr.bf16.mxu0 0
  %2018 = vmatpush2.bf16.msra.mxu0 0
  %2019 = vmatprep.subr.bf16.mxu0 0
  %2020 = vmatpush2.bf16.msra.mxu0 0
  %2021 = vmatprep.subr.bf16.mxu0 0
  %2022 = vmatpush2.bf16.msra.mxu0 0
  %2023 = vmatprep.subr.bf16.mxu0 0
  %2024 = vmatpush2.bf16.msra.mxu0 0
  %2025 = vmatprep.subr.bf16.mxu0 0
  %2026 = vmatpush2.bf16.msra.mxu0 0
  %2027 = vmatprep.subr.bf16.mxu0 0
  %2028 = vmatpush2.bf16.msra.mxu0 0
  %2029 = vmatprep.subr.bf16.mxu0 0
  %2030 = vmatpush2.bf16.msra.mxu0 0
  %2031 = vmatprep.subr.bf16.mxu0 0
  %2032 = vmatpush2.bf16.msra.mxu0 0
  %2033 = vmatprep.mubr.bf16.mxu0 0
  %2034 = vmatmul.mubr.bf16.gmra.mxu0 0
  %v2035 = vpop.f32.mrf.mxu0
  %v2036 = vadd.f32 0.0, %v2035
  %v2037 = vpop.f32.mrf.mxu0
  %v2038 = vadd.f32 0.0, %v2037
  %v2039 = vpop.f32.mrf.mxu0
  %v2040 = vpop.f32.mrf.mxu0
  %2041 = vdwg.mxu0
  %2042 = vmatprep.subr.bf16.mxu0 %v1968
  %2043 = vmatpush1.bf16.msra.mxu0 %v1967
  %2044 = vmatprep.subr.bf16.mxu0 %v1964
  %2045 = vmatpush1.bf16.msra.mxu0 %v1963
  %2046 = vmatprep.subr.bf16.mxu0 %v1960
  %2047 = vmatpush1.bf16.msra.mxu0 %v1959
  %2048 = vmatprep.subr.bf16.mxu0 %v1956
  %2049 = vmatpush1.bf16.msra.mxu0 %v1955
  %2050 = vmatprep.subr.bf16.mxu0 %v1952
  %2051 = vmatpush1.bf16.msra.mxu0 %v1951
  %2052 = vmatprep.subr.bf16.mxu0 %v1948
  %2053 = vmatpush1.bf16.msra.mxu0 %v1947
  %2054 = vmatprep.subr.bf16.mxu0 %v1944
  %2055 = vmatpush1.bf16.msra.mxu0 %v1943
  %2056 = vmatprep.subr.bf16.mxu0 %v1940
  %2057 = vmatpush1.bf16.msra.mxu0 %v1939
  %2058 = vmatprep.subr.bf16.mxu0 0
  %2059 = vmatpush2.bf16.msra.mxu0 0
  %2060 = vmatprep.subr.bf16.mxu0 0
  %2061 = vmatpush2.bf16.msra.mxu0 0
  %2062 = vmatprep.subr.bf16.mxu0 0
  %2063 = vmatpush2.bf16.msra.mxu0 0
  %2064 = vmatprep.subr.bf16.mxu0 0
  %2065 = vmatpush2.bf16.msra.mxu0 0
  %2066 = vmatprep.subr.bf16.mxu0 0
  %2067 = vmatpush2.bf16.msra.mxu0 0
  %2068 = vmatprep.subr.bf16.mxu0 0
  %2069 = vmatpush2.bf16.msra.mxu0 0
  %2070 = vmatprep.subr.bf16.mxu0 0
  %2071 = vmatpush2.bf16.msra.mxu0 0
  %2072 = vmatprep.subr.bf16.mxu0 0
  %2073 = vmatpush2.bf16.msra.mxu0 0
  %2074 = vmatprep.mubr.bf16.mxu0 0
  %2075 = vmatmul.mubr.bf16.gmra.mxu0 0
  %v2076 = vpop.f32.mrf.mxu0
  %v2077 = vadd.f32 0.0, %v2076
  %v2078 = vpop.f32.mrf.mxu0
  %v2079 = vadd.f32 0.0, %v2078
  %v2080 = vpop.f32.mrf.mxu0
  %v2081 = vpop.f32.mrf.mxu0
  %2082 = vdwg.mxu0
  %v2083 = vadd.f32 %v1837, %v2036
  %v2084 = vadd.f32 %v1838, %v2038
  %v2085 = vadd.f32 %v1839, %v2077
  %v2086 = vadd.f32 %v1840, %v2079
  %v2087 = vxor.u32 %v2083, 2147483648
  %v2088 = vxor.u32 %v2084, 2147483648
  %v2089 = vxor.u32 %v2086, 2147483648
  %v2090 = vmul.f32 %v2087, 1.442695
  %v2091 = vpow.pop %v2090
  %v2092 = vmul.f32 %v2088, 1.442695
  %v2093 = vpow.pop %v2092
  %v2094 = vmul.f32 %v2089, 1.442695
  %v2095 = vpow.pop %v2094
  %v2096 = vadd.f32 %v2091, 1.0
  %v2097 = vadd.f32 %v2093, 1.0
  %v2098 = vadd.f32 %v2095, 1.0
  %v2099 = vrcp.pop %v2096
  %v2100 = vmul.f32 1.0, %v2099
  %v2101 = vrcp.pop %v2097
  %v2102 = vmul.f32 1.0, %v2101
  %v2103 = vrcp.pop %v2098
  %v2104 = vmul.f32 1.0, %v2103
  %v2105 = vtanh.pop %v2085
  %v2106 = vmul.f32 %v2102, 0.0
  %v2107 = vmul.f32 %v2100, %v2105
  %v2108 = vadd.f32 %v2106, %v2107
  %v2109 = vtanh.pop %v2108
  %v2110 = vmul.f32 %v2104, %v2109
  %v2111 = vld [vmem:[#allocation3 + $0x20] sm:$0xff]
  %v2112 = vld [vmem:[#allocation3 + $0x28] sm:$0xff]
  %v2113 = vld [vmem:[#allocation3 + $0x30] sm:$0xff]
  %v2114 = vld [vmem:[#allocation3 + $0x38] sm:$0xff]
  %v2115 = vpack.c.bf16 %v2110, %v2110
  %2116 = vmatprep.subr.bf16.mxu0 %v1966
  %2117 = vmatpush1.bf16.msra.mxu0 %v1965
  %2118 = vmatprep.subr.bf16.mxu0 %v1962
  %2119 = vmatpush1.bf16.msra.mxu0 %v1961
  %2120 = vmatprep.subr.bf16.mxu0 %v1958
  %2121 = vmatpush1.bf16.msra.mxu0 %v1957
  %2122 = vmatprep.subr.bf16.mxu0 %v1954
  %2123 = vmatpush1.bf16.msra.mxu0 %v1953
  %2124 = vmatprep.subr.bf16.mxu0 %v1950
  %2125 = vmatpush1.bf16.msra.mxu0 %v1949
  %2126 = vmatprep.subr.bf16.mxu0 %v1946
  %2127 = vmatpush1.bf16.msra.mxu0 %v1945
  %2128 = vmatprep.subr.bf16.mxu0 %v1942
  %2129 = vmatpush1.bf16.msra.mxu0 %v1941
  %2130 = vmatprep.subr.bf16.mxu0 %v1938
  %2131 = vmatpush1.bf16.msra.mxu0 %v1937
  %2132 = vmatprep.subr.bf16.mxu0 0
  %2133 = vmatpush2.bf16.msra.mxu0 0
  %2134 = vmatprep.subr.bf16.mxu0 0
  %2135 = vmatpush2.bf16.msra.mxu0 0
  %2136 = vmatprep.subr.bf16.mxu0 0
  %2137 = vmatpush2.bf16.msra.mxu0 0
  %2138 = vmatprep.subr.bf16.mxu0 0
  %2139 = vmatpush2.bf16.msra.mxu0 0
  %2140 = vmatprep.subr.bf16.mxu0 0
  %2141 = vmatpush2.bf16.msra.mxu0 0
  %2142 = vmatprep.subr.bf16.mxu0 0
  %2143 = vmatpush2.bf16.msra.mxu0 0
  %2144 = vmatprep.subr.bf16.mxu0 0
  %2145 = vmatpush2.bf16.msra.mxu0 0
  %2146 = vmatprep.subr.bf16.mxu0 0
  %2147 = vmatpush2.bf16.msra.mxu0 0
  %2148 = vmatprep.mubr.bf16.mxu0 0
  %2149 = vmatmul.mubr.bf16.gmra.mxu0 %v2115
  %v2150 = vpop.f32.mrf.mxu0
  %v2151 = vadd.f32 0.0, %v2150
  %v2152 = vpop.f32.mrf.mxu0
  %v2153 = vadd.f32 0.0, %v2152
  %v2154 = vpop.f32.mrf.mxu0
  %v2155 = vpop.f32.mrf.mxu0
  %2156 = vdwg.mxu0
  %2157 = vmatprep.subr.bf16.mxu0 %v1968
  %2158 = vmatpush1.bf16.msra.mxu0 %v1967
  %2159 = vmatprep.subr.bf16.mxu0 %v1964
  %2160 = vmatpush1.bf16.msra.mxu0 %v1963
  %2161 = vmatprep.subr.bf16.mxu0 %v1960
  %2162 = vmatpush1.bf16.msra.mxu0 %v1959
  %2163 = vmatprep.subr.bf16.mxu0 %v1956
  %2164 = vmatpush1.bf16.msra.mxu0 %v1955
  %2165 = vmatprep.subr.bf16.mxu0 %v1952
  %2166 = vmatpush1.bf16.msra.mxu0 %v1951
  %2167 = vmatprep.subr.bf16.mxu0 %v1948
  %2168 = vmatpush1.bf16.msra.mxu0 %v1947
  %2169 = vmatprep.subr.bf16.mxu0 %v1944
  %2170 = vmatpush1.bf16.msra.mxu0 %v1943
  %2171 = vmatprep.subr.bf16.mxu0 %v1940
  %2172 = vmatpush1.bf16.msra.mxu0 %v1939
  %2173 = vmatprep.subr.bf16.mxu0 0
  %2174 = vmatpush2.bf16.msra.mxu0 0
  %2175 = vmatprep.subr.bf16.mxu0 0
  %2176 = vmatpush2.bf16.msra.mxu0 0
  %2177 = vmatprep.subr.bf16.mxu0 0
  %2178 = vmatpush2.bf16.msra.mxu0 0
  %2179 = vmatprep.subr.bf16.mxu0 0
  %2180 = vmatpush2.bf16.msra.mxu0 0
  %2181 = vmatprep.subr.bf16.mxu0 0
  %2182 = vmatpush2.bf16.msra.mxu0 0
  %2183 = vmatprep.subr.bf16.mxu0 0
  %2184 = vmatpush2.bf16.msra.mxu0 0
  %2185 = vmatprep.subr.bf16.mxu0 0
  %2186 = vmatpush2.bf16.msra.mxu0 0
  %2187 = vmatprep.subr.bf16.mxu0 0
  %2188 = vmatpush2.bf16.msra.mxu0 0
  %2189 = vmatprep.mubr.bf16.mxu0 0
  %2190 = vmatmul.mubr.bf16.gmra.mxu0 %v2115
  %v2191 = vpop.f32.mrf.mxu0
  %v2192 = vadd.f32 0.0, %v2191
  %v2193 = vpop.f32.mrf.mxu0
  %v2194 = vadd.f32 0.0, %v2193
  %v2195 = vpop.f32.mrf.mxu0
  %v2196 = vpop.f32.mrf.mxu0
  %2197 = vdwg.mxu0
  %v2198 = vadd.f32 %v2111, %v2151
  %v2199 = vadd.f32 %v2112, %v2153
  %v2200 = vadd.f32 %v2113, %v2192
  %v2201 = vadd.f32 %v2114, %v2194
  %v2202 = vxor.u32 %v2198, 2147483648
  %v2203 = vxor.u32 %v2199, 2147483648
  %v2204 = vxor.u32 %v2201, 2147483648
  %v2205 = vmul.f32 %v2202, 1.442695
  %v2206 = vpow.pop %v2205
  %v2207 = vmul.f32 %v2203, 1.442695
  %v2208 = vpow.pop %v2207
  %v2209 = vmul.f32 %v2204, 1.442695
  %v2210 = vpow.pop %v2209
  %v2211 = vadd.f32 %v2206, 1.0
  %v2212 = vadd.f32 %v2208, 1.0
  %v2213 = vadd.f32 %v2210, 1.0
  %v2214 = vrcp.pop %v2211
  %v2215 = vmul.f32 1.0, %v2214
  %v2216 = vrcp.pop %v2212
  %v2217 = vmul.f32 1.0, %v2216
  %v2218 = vrcp.pop %v2213
  %v2219 = vmul.f32 1.0, %v2218
  %v2220 = vtanh.pop %v2200
  %v2221 = vmul.f32 %v2217, %v2108
  %v2222 = vmul.f32 %v2215, %v2220
  %v2223 = vadd.f32 %v2221, %v2222
  %v2224 = vtanh.pop %v2223
  %v2225 = vmul.f32 %v2219, %v2224
  %v2226 = vld [vmem:[#allocation3 + $0x40] sm:$0xff]
  %v2227 = vld [vmem:[#allocation3 + $0x48] sm:$0xff]
  %v2228 = vld [vmem:[#allocation3 + $0x50] sm:$0xff]
  %v2229 = vld [vmem:[#allocation3 + $0x58] sm:$0xff]
  %v2230 = vpack.c.bf16 %v2225, %v2225
  %2231 = vmatprep.subr.bf16.mxu0 %v1966
  %2232 = vmatpush1.bf16.msra.mxu0 %v1965
  %2233 = vmatprep.subr.bf16.mxu0 %v1962
  %2234 = vmatpush1.bf16.msra.mxu0 %v1961
  %2235 = vmatprep.subr.bf16.mxu0 %v1958
  %2236 = vmatpush1.bf16.msra.mxu0 %v1957
  %2237 = vmatprep.subr.bf16.mxu0 %v1954
  %2238 = vmatpush1.bf16.msra.mxu0 %v1953
  %2239 = vmatprep.subr.bf16.mxu0 %v1950
  %2240 = vmatpush1.bf16.msra.mxu0 %v1949
  %2241 = vmatprep.subr.bf16.mxu0 %v1946
  %2242 = vmatpush1.bf16.msra.mxu0 %v1945
  %2243 = vmatprep.subr.bf16.mxu0 %v1942
  %2244 = vmatpush1.bf16.msra.mxu0 %v1941
  %2245 = vmatprep.subr.bf16.mxu0 %v1938
  %2246 = vmatpush1.bf16.msra.mxu0 %v1937
  %2247 = vmatprep.subr.bf16.mxu0 0
  %2248 = vmatpush2.bf16.msra.mxu0 0
  %2249 = vmatprep.subr.bf16.mxu0 0
  %2250 = vmatpush2.bf16.msra.mxu0 0
  %2251 = vmatprep.subr.bf16.mxu0 0
  %2252 = vmatpush2.bf16.msra.mxu0 0
  %2253 = vmatprep.subr.bf16.mxu0 0
  %2254 = vmatpush2.bf16.msra.mxu0 0
  %2255 = vmatprep.subr.bf16.mxu0 0
  %2256 = vmatpush2.bf16.msra.mxu0 0
  %2257 = vmatprep.subr.bf16.mxu0 0
  %2258 = vmatpush2.bf16.msra.mxu0 0
  %2259 = vmatprep.subr.bf16.mxu0 0
  %2260 = vmatpush2.bf16.msra.mxu0 0
  %2261 = vmatprep.subr.bf16.mxu0 0
  %2262 = vmatpush2.bf16.msra.mxu0 0
  %2263 = vmatprep.mubr.bf16.mxu0 0
  %2264 = vmatmul.mubr.bf16.gmra.mxu0 %v2230
  %v2265 = vpop.f32.mrf.mxu0
  %v2266 = vadd.f32 0.0, %v2265
  %v2267 = vpop.f32.mrf.mxu0
  %v2268 = vadd.f32 0.0, %v2267
  %v2269 = vpop.f32.mrf.mxu0
  %v2270 = vpop.f32.mrf.mxu0
  %2271 = vdwg.mxu0
  %2272 = vmatprep.subr.bf16.mxu0 %v1968
  %2273 = vmatpush1.bf16.msra.mxu0 %v1967
  %2274 = vmatprep.subr.bf16.mxu0 %v1964
  %2275 = vmatpush1.bf16.msra.mxu0 %v1963
  %2276 = vmatprep.subr.bf16.mxu0 %v1960
  %2277 = vmatpush1.bf16.msra.mxu0 %v1959
  %2278 = vmatprep.subr.bf16.mxu0 %v1956
  %2279 = vmatpush1.bf16.msra.mxu0 %v1955
  %2280 = vmatprep.subr.bf16.mxu0 %v1952
  %2281 = vmatpush1.bf16.msra.mxu0 %v1951
  %2282 = vmatprep.subr.bf16.mxu0 %v1948
  %2283 = vmatpush1.bf16.msra.mxu0 %v1947
  %2284 = vmatprep.subr.bf16.mxu0 %v1944
  %2285 = vmatpush1.bf16.msra.mxu0 %v1943
  %2286 = vmatprep.subr.bf16.mxu0 %v1940
  %2287 = vmatpush1.bf16.msra.mxu0 %v1939
  %2288 = vmatprep.subr.bf16.mxu0 0
  %2289 = vmatpush2.bf16.msra.mxu0 0
  %2290 = vmatprep.subr.bf16.mxu0 0
  %2291 = vmatpush2.bf16.msra.mxu0 0
  %2292 = vmatprep.subr.bf16.mxu0 0
  %2293 = vmatpush2.bf16.msra.mxu0 0
  %2294 = vmatprep.subr.bf16.mxu0 0
  %2295 = vmatpush2.bf16.msra.mxu0 0
  %2296 = vmatprep.subr.bf16.mxu0 0
  %2297 = vmatpush2.bf16.msra.mxu0 0
  %2298 = vmatprep.subr.bf16.mxu0 0
  %2299 = vmatpush2.bf16.msra.mxu0 0
  %2300 = vmatprep.subr.bf16.mxu0 0
  %2301 = vmatpush2.bf16.msra.mxu0 0
  %2302 = vmatprep.subr.bf16.mxu0 0
  %2303 = vmatpush2.bf16.msra.mxu0 0
  %2304 = vmatprep.mubr.bf16.mxu0 0
  %2305 = vmatmul.mubr.bf16.gmra.mxu0 %v2230
  %v2306 = vpop.f32.mrf.mxu0
  %v2307 = vadd.f32 0.0, %v2306
  %v2308 = vpop.f32.mrf.mxu0
  %v2309 = vadd.f32 0.0, %v2308
  %v2310 = vpop.f32.mrf.mxu0
  %v2311 = vpop.f32.mrf.mxu0
  %2312 = vdwg.mxu0
  %v2313 = vadd.f32 %v2226, %v2266
  %v2314 = vadd.f32 %v2227, %v2268
  %v2315 = vadd.f32 %v2228, %v2307
  %v2316 = vadd.f32 %v2229, %v2309
  %v2317 = vxor.u32 %v2313, 2147483648
  %v2318 = vxor.u32 %v2314, 2147483648
  %v2319 = vxor.u32 %v2316, 2147483648
  %v2320 = vmul.f32 %v2317, 1.442695
  %v2321 = vpow.pop %v2320
  %v2322 = vmul.f32 %v2318, 1.442695
  %v2323 = vpow.pop %v2322
  %v2324 = vmul.f32 %v2319, 1.442695
  %v2325 = vpow.pop %v2324
  %v2326 = vadd.f32 %v2321, 1.0
  %v2327 = vadd.f32 %v2323, 1.0
  %v2328 = vadd.f32 %v2325, 1.0
  %v2329 = vrcp.pop %v2326
  %v2330 = vmul.f32 1.0, %v2329
  %v2331 = vrcp.pop %v2327
  %v2332 = vmul.f32 1.0, %v2331
  %v2333 = vrcp.pop %v2328
  %v2334 = vmul.f32 1.0, %v2333
  %v2335 = vtanh.pop %v2315
  %v2336 = vmul.f32 %v2332, %v2223
  %v2337 = vmul.f32 %v2330, %v2335
  %v2338 = vadd.f32 %v2336, %v2337
  %v2339 = vtanh.pop %v2338
  %v2340 = vmul.f32 %v2334, %v2339
  %v2341 = vld [vmem:[#allocation3 + $0x60] sm:$0xff]
  %v2342 = vld [vmem:[#allocation3 + $0x68] sm:$0xff]
  %v2343 = vld [vmem:[#allocation3 + $0x70] sm:$0xff]
  %v2344 = vld [vmem:[#allocation3 + $0x78] sm:$0xff]
  %v2345 = vpack.c.bf16 %v2340, %v2340
  %2346 = vmatprep.subr.bf16.mxu0 %v1966
  %2347 = vmatpush1.bf16.msra.mxu0 %v1965
  %2348 = vmatprep.subr.bf16.mxu0 %v1962
  %2349 = vmatpush1.bf16.msra.mxu0 %v1961
  %2350 = vmatprep.subr.bf16.mxu0 %v1958
  %2351 = vmatpush1.bf16.msra.mxu0 %v1957
  %2352 = vmatprep.subr.bf16.mxu0 %v1954
  %2353 = vmatpush1.bf16.msra.mxu0 %v1953
  %2354 = vmatprep.subr.bf16.mxu0 %v1950
  %2355 = vmatpush1.bf16.msra.mxu0 %v1949
  %2356 = vmatprep.subr.bf16.mxu0 %v1946
  %2357 = vmatpush1.bf16.msra.mxu0 %v1945
  %2358 = vmatprep.subr.bf16.mxu0 %v1942
  %2359 = vmatpush1.bf16.msra.mxu0 %v1941
  %2360 = vmatprep.subr.bf16.mxu0 %v1938
  %2361 = vmatpush1.bf16.msra.mxu0 %v1937
  %2362 = vmatprep.subr.bf16.mxu0 0
  %2363 = vmatpush2.bf16.msra.mxu0 0
  %2364 = vmatprep.subr.bf16.mxu0 0
  %2365 = vmatpush2.bf16.msra.mxu0 0
  %2366 = vmatprep.subr.bf16.mxu0 0
  %2367 = vmatpush2.bf16.msra.mxu0 0
  %2368 = vmatprep.subr.bf16.mxu0 0
  %2369 = vmatpush2.bf16.msra.mxu0 0
  %2370 = vmatprep.subr.bf16.mxu0 0
  %2371 = vmatpush2.bf16.msra.mxu0 0
  %2372 = vmatprep.subr.bf16.mxu0 0
  %2373 = vmatpush2.bf16.msra.mxu0 0
  %2374 = vmatprep.subr.bf16.mxu0 0
  %2375 = vmatpush2.bf16.msra.mxu0 0
  %2376 = vmatprep.subr.bf16.mxu0 0
  %2377 = vmatpush2.bf16.msra.mxu0 0
  %2378 = vmatprep.mubr.bf16.mxu0 0
  %2379 = vmatmul.mubr.bf16.gmra.mxu0 %v2345
  %v2380 = vpop.f32.mrf.mxu0
  %v2381 = vadd.f32 0.0, %v2380
  %v2382 = vpop.f32.mrf.mxu0
  %v2383 = vadd.f32 0.0, %v2382
  %v2384 = vpop.f32.mrf.mxu0
  %v2385 = vpop.f32.mrf.mxu0
  %2386 = vdwg.mxu0
  %2387 = vmatprep.subr.bf16.mxu0 %v1968
  %2388 = vmatpush1.bf16.msra.mxu0 %v1967
  %2389 = vmatprep.subr.bf16.mxu0 %v1964
  %2390 = vmatpush1.bf16.msra.mxu0 %v1963
  %2391 = vmatprep.subr.bf16.mxu0 %v1960
  %2392 = vmatpush1.bf16.msra.mxu0 %v1959
  %2393 = vmatprep.subr.bf16.mxu0 %v1956
  %2394 = vmatpush1.bf16.msra.mxu0 %v1955
  %2395 = vmatprep.subr.bf16.mxu0 %v1952
  %2396 = vmatpush1.bf16.msra.mxu0 %v1951
  %2397 = vmatprep.subr.bf16.mxu0 %v1948
  %2398 = vmatpush1.bf16.msra.mxu0 %v1947
  %2399 = vmatprep.subr.bf16.mxu0 %v1944
  %2400 = vmatpush1.bf16.msra.mxu0 %v1943
  %2401 = vmatprep.subr.bf16.mxu0 %v1940
  %2402 = vmatpush1.bf16.msra.mxu0 %v1939
  %2403 = vmatprep.subr.bf16.mxu0 0
  %2404 = vmatpush2.bf16.msra.mxu0 0
  %2405 = vmatprep.subr.bf16.mxu0 0
  %2406 = vmatpush2.bf16.msra.mxu0 0
  %2407 = vmatprep.subr.bf16.mxu0 0
  %2408 = vmatpush2.bf16.msra.mxu0 0
  %2409 = vmatprep.subr.bf16.mxu0 0
  %2410 = vmatpush2.bf16.msra.mxu0 0
  %2411 = vmatprep.subr.bf16.mxu0 0
  %2412 = vmatpush2.bf16.msra.mxu0 0
  %2413 = vmatprep.subr.bf16.mxu0 0
  %2414 = vmatpush2.bf16.msra.mxu0 0
  %2415 = vmatprep.subr.bf16.mxu0 0
  %2416 = vmatpush2.bf16.msra.mxu0 0
  %2417 = vmatprep.subr.bf16.mxu0 0
  %2418 = vmatpush2.bf16.msra.mxu0 0
  %2419 = vmatprep.mubr.bf16.mxu0 0
  %2420 = vmatmul.mubr.bf16.gmra.mxu0 %v2345
  %v2421 = vpop.f32.mrf.mxu0
  %v2422 = vadd.f32 0.0, %v2421
  %v2423 = vpop.f32.mrf.mxu0
  %v2424 = vadd.f32 0.0, %v2423
  %v2425 = vpop.f32.mrf.mxu0
  %v2426 = vpop.f32.mrf.mxu0
  %2427 = vdwg.mxu0
  %v2428 = vadd.f32 %v2341, %v2381
  %v2429 = vadd.f32 %v2342, %v2383
  %v2430 = vadd.f32 %v2343, %v2422
  %v2431 = vadd.f32 %v2344, %v2424
  %v2432 = vxor.u32 %v2428, 2147483648
  %v2433 = vxor.u32 %v2429, 2147483648
  %v2434 = vxor.u32 %v2431, 2147483648
  %v2435 = vmul.f32 %v2432, 1.442695
  %v2436 = vpow.pop %v2435
  %v2437 = vmul.f32 %v2433, 1.442695
  %v2438 = vpow.pop %v2437
  %v2439 = vmul.f32 %v2434, 1.442695
  %v2440 = vpow.pop %v2439
  %v2441 = vadd.f32 %v2436, 1.0
  %v2442 = vadd.f32 %v2438, 1.0
  %v2443 = vadd.f32 %v2440, 1.0
  %v2444 = vrcp.pop %v2441
  %v2445 = vmul.f32 1.0, %v2444
  %v2446 = vrcp.pop %v2442
  %v2447 = vmul.f32 1.0, %v2446
  %v2448 = vrcp.pop %v2443
  %v2449 = vmul.f32 1.0, %v2448
  %v2450 = vtanh.pop %v2430
  %v2451 = vmul.f32 %v2447, %v2338
  %v2452 = vmul.f32 %v2445, %v2450
  %v2453 = vadd.f32 %v2451, %v2452
  %v2454 = vtanh.pop %v2453
  %v2455 = vmul.f32 %v2449, %v2454
  %v2456 = vld [vmem:[#allocation3 + $0x80] sm:$0xff]
  %v2457 = vld [vmem:[#allocation3 + $0x88] sm:$0xff]
  %v2458 = vld [vmem:[#allocation3 + $0x90] sm:$0xff]
  %v2459 = vld [vmem:[#allocation3 + $0x98] sm:$0xff]
  %v2460 = vpack.c.bf16 %v2455, %v2455
  %2461 = vmatprep.subr.bf16.mxu0 %v1966
  %2462 = vmatpush1.bf16.msra.mxu0 %v1965
  %2463 = vmatprep.subr.bf16.mxu0 %v1962
  %2464 = vmatpush1.bf16.msra.mxu0 %v1961
  %2465 = vmatprep.subr.bf16.mxu0 %v1958
  %2466 = vmatpush1.bf16.msra.mxu0 %v1957
  %2467 = vmatprep.subr.bf16.mxu0 %v1954
  %2468 = vmatpush1.bf16.msra.mxu0 %v1953
  %2469 = vmatprep.subr.bf16.mxu0 %v1950
  %2470 = vmatpush1.bf16.msra.mxu0 %v1949
  %2471 = vmatprep.subr.bf16.mxu0 %v1946
  %2472 = vmatpush1.bf16.msra.mxu0 %v1945
  %2473 = vmatprep.subr.bf16.mxu0 %v1942
  %2474 = vmatpush1.bf16.msra.mxu0 %v1941
  %2475 = vmatprep.subr.bf16.mxu0 %v1938
  %2476 = vmatpush1.bf16.msra.mxu0 %v1937
  %2477 = vmatprep.subr.bf16.mxu0 0
  %2478 = vmatpush2.bf16.msra.mxu0 0
  %2479 = vmatprep.subr.bf16.mxu0 0
  %2480 = vmatpush2.bf16.msra.mxu0 0
  %2481 = vmatprep.subr.bf16.mxu0 0
  %2482 = vmatpush2.bf16.msra.mxu0 0
  %2483 = vmatprep.subr.bf16.mxu0 0
  %2484 = vmatpush2.bf16.msra.mxu0 0
  %2485 = vmatprep.subr.bf16.mxu0 0
  %2486 = vmatpush2.bf16.msra.mxu0 0
  %2487 = vmatprep.subr.bf16.mxu0 0
  %2488 = vmatpush2.bf16.msra.mxu0 0
  %2489 = vmatprep.subr.bf16.mxu0 0
  %2490 = vmatpush2.bf16.msra.mxu0 0
  %2491 = vmatprep.subr.bf16.mxu0 0
  %2492 = vmatpush2.bf16.msra.mxu0 0
  %2493 = vmatprep.mubr.bf16.mxu0 0
  %2494 = vmatmul.mubr.bf16.gmra.mxu0 %v2460
  %v2495 = vpop.f32.mrf.mxu0
  %v2496 = vadd.f32 0.0, %v2495
  %v2497 = vpop.f32.mrf.mxu0
  %v2498 = vadd.f32 0.0, %v2497
  %v2499 = vpop.f32.mrf.mxu0
  %v2500 = vpop.f32.mrf.mxu0
  %2501 = vdwg.mxu0
  %2502 = vmatprep.subr.bf16.mxu0 %v1968
  %2503 = vmatpush1.bf16.msra.mxu0 %v1967
  %2504 = vmatprep.subr.bf16.mxu0 %v1964
  %2505 = vmatpush1.bf16.msra.mxu0 %v1963
  %2506 = vmatprep.subr.bf16.mxu0 %v1960
  %2507 = vmatpush1.bf16.msra.mxu0 %v1959
  %2508 = vmatprep.subr.bf16.mxu0 %v1956
  %2509 = vmatpush1.bf16.msra.mxu0 %v1955
  %2510 = vmatprep.subr.bf16.mxu0 %v1952
  %2511 = vmatpush1.bf16.msra.mxu0 %v1951
  %2512 = vmatprep.subr.bf16.mxu0 %v1948
  %2513 = vmatpush1.bf16.msra.mxu0 %v1947
  %2514 = vmatprep.subr.bf16.mxu0 %v1944
  %2515 = vmatpush1.bf16.msra.mxu0 %v1943
  %2516 = vmatprep.subr.bf16.mxu0 %v1940
  %2517 = vmatpush1.bf16.msra.mxu0 %v1939
  %2518 = vmatprep.subr.bf16.mxu0 0
  %2519 = vmatpush2.bf16.msra.mxu0 0
  %2520 = vmatprep.subr.bf16.mxu0 0
  %2521 = vmatpush2.bf16.msra.mxu0 0
  %2522 = vmatprep.subr.bf16.mxu0 0
  %2523 = vmatpush2.bf16.msra.mxu0 0
  %2524 = vmatprep.subr.bf16.mxu0 0
  %2525 = vmatpush2.bf16.msra.mxu0 0
  %2526 = vmatprep.subr.bf16.mxu0 0
  %2527 = vmatpush2.bf16.msra.mxu0 0
  %2528 = vmatprep.subr.bf16.mxu0 0
  %2529 = vmatpush2.bf16.msra.mxu0 0
  %2530 = vmatprep.subr.bf16.mxu0 0
  %2531 = vmatpush2.bf16.msra.mxu0 0
  %2532 = vmatprep.subr.bf16.mxu0 0
  %2533 = vmatpush2.bf16.msra.mxu0 0
  %2534 = vmatprep.mubr.bf16.mxu0 0
  %2535 = vmatmul.mubr.bf16.gmra.mxu0 %v2460
  %v2536 = vpop.f32.mrf.mxu0
  %v2537 = vadd.f32 0.0, %v2536
  %v2538 = vpop.f32.mrf.mxu0
  %v2539 = vadd.f32 0.0, %v2538
  %v2540 = vpop.f32.mrf.mxu0
  %v2541 = vpop.f32.mrf.mxu0
  %2542 = vdwg.mxu0
  %v2543 = vadd.f32 %v2456, %v2496
  %v2544 = vadd.f32 %v2457, %v2498
  %v2545 = vadd.f32 %v2458, %v2537
  %v2546 = vadd.f32 %v2459, %v2539
  %v2547 = vxor.u32 %v2543, 2147483648
  %v2548 = vxor.u32 %v2544, 2147483648
  %v2549 = vxor.u32 %v2546, 2147483648
  %v2550 = vmul.f32 %v2547, 1.442695
  %v2551 = vpow.pop %v2550
  %v2552 = vmul.f32 %v2548, 1.442695
  %v2553 = vpow.pop %v2552
  %v2554 = vmul.f32 %v2549, 1.442695
  %v2555 = vpow.pop %v2554
  %v2556 = vadd.f32 %v2551, 1.0
  %v2557 = vadd.f32 %v2553, 1.0
  %v2558 = vadd.f32 %v2555, 1.0
  %v2559 = vrcp.pop %v2556
  %v2560 = vmul.f32 1.0, %v2559
  %v2561 = vrcp.pop %v2557
  %v2562 = vmul.f32 1.0, %v2561
  %v2563 = vrcp.pop %v2558
  %v2564 = vmul.f32 1.0, %v2563
  %v2565 = vtanh.pop %v2545
  %v2566 = vmul.f32 %v2562, %v2453
  %v2567 = vmul.f32 %v2560, %v2565
  %v2568 = vadd.f32 %v2566, %v2567
  %v2569 = vtanh.pop %v2568
  %v2570 = vmul.f32 %v2564, %v2569
  %v2571 = vld [vmem:[#allocation3 + $0xa0] sm:$0xff]
  %v2572 = vld [vmem:[#allocation3 + $0xa8] sm:$0xff]
  %v2573 = vld [vmem:[#allocation3 + $0xb0] sm:$0xff]
  %v2574 = vld [vmem:[#allocation3 + $0xb8] sm:$0xff]
  %v2575 = vpack.c.bf16 %v2570, %v2570
  %2576 = vmatprep.subr.bf16.mxu0 %v1966
  %2577 = vmatpush1.bf16.msra.mxu0 %v1965
  %2578 = vmatprep.subr.bf16.mxu0 %v1962
  %2579 = vmatpush1.bf16.msra.mxu0 %v1961
  %2580 = vmatprep.subr.bf16.mxu0 %v1958
  %2581 = vmatpush1.bf16.msra.mxu0 %v1957
  %2582 = vmatprep.subr.bf16.mxu0 %v1954
  %2583 = vmatpush1.bf16.msra.mxu0 %v1953
  %2584 = vmatprep.subr.bf16.mxu0 %v1950
  %2585 = vmatpush1.bf16.msra.mxu0 %v1949
  %2586 = vmatprep.subr.bf16.mxu0 %v1946
  %2587 = vmatpush1.bf16.msra.mxu0 %v1945
  %2588 = vmatprep.subr.bf16.mxu0 %v1942
  %2589 = vmatpush1.bf16.msra.mxu0 %v1941
  %2590 = vmatprep.subr.bf16.mxu0 %v1938
  %2591 = vmatpush1.bf16.msra.mxu0 %v1937
  %2592 = vmatprep.subr.bf16.mxu0 0
  %2593 = vmatpush2.bf16.msra.mxu0 0
  %2594 = vmatprep.subr.bf16.mxu0 0
  %2595 = vmatpush2.bf16.msra.mxu0 0
  %2596 = vmatprep.subr.bf16.mxu0 0
  %2597 = vmatpush2.bf16.msra.mxu0 0
  %2598 = vmatprep.subr.bf16.mxu0 0
  %2599 = vmatpush2.bf16.msra.mxu0 0
  %2600 = vmatprep.subr.bf16.mxu0 0
  %2601 = vmatpush2.bf16.msra.mxu0 0
  %2602 = vmatprep.subr.bf16.mxu0 0
  %2603 = vmatpush2.bf16.msra.mxu0 0
  %2604 = vmatprep.subr.bf16.mxu0 0
  %2605 = vmatpush2.bf16.msra.mxu0 0
  %2606 = vmatprep.subr.bf16.mxu0 0
  %2607 = vmatpush2.bf16.msra.mxu0 0
  %2608 = vmatprep.mubr.bf16.mxu0 0
  %2609 = vmatmul.mubr.bf16.gmra.mxu0 %v2575
  %v2610 = vpop.f32.mrf.mxu0
  %v2611 = vadd.f32 0.0, %v2610
  %v2612 = vpop.f32.mrf.mxu0
  %v2613 = vadd.f32 0.0, %v2612
  %v2614 = vpop.f32.mrf.mxu0
  %v2615 = vpop.f32.mrf.mxu0
  %2616 = vdwg.mxu0
  %2617 = vmatprep.subr.bf16.mxu0 %v1968
  %2618 = vmatpush1.bf16.msra.mxu0 %v1967
  %2619 = vmatprep.subr.bf16.mxu0 %v1964
  %2620 = vmatpush1.bf16.msra.mxu0 %v1963
  %2621 = vmatprep.subr.bf16.mxu0 %v1960
  %2622 = vmatpush1.bf16.msra.mxu0 %v1959
  %2623 = vmatprep.subr.bf16.mxu0 %v1956
  %2624 = vmatpush1.bf16.msra.mxu0 %v1955
  %2625 = vmatprep.subr.bf16.mxu0 %v1952
  %2626 = vmatpush1.bf16.msra.mxu0 %v1951
  %2627 = vmatprep.subr.bf16.mxu0 %v1948
  %2628 = vmatpush1.bf16.msra.mxu0 %v1947
  %2629 = vmatprep.subr.bf16.mxu0 %v1944
  %2630 = vmatpush1.bf16.msra.mxu0 %v1943
  %2631 = vmatprep.subr.bf16.mxu0 %v1940
  %2632 = vmatpush1.bf16.msra.mxu0 %v1939
  %2633 = vmatprep.subr.bf16.mxu0 0
  %2634 = vmatpush2.bf16.msra.mxu0 0
  %2635 = vmatprep.subr.bf16.mxu0 0
  %2636 = vmatpush2.bf16.msra.mxu0 0
  %2637 = vmatprep.subr.bf16.mxu0 0
  %2638 = vmatpush2.bf16.msra.mxu0 0
  %2639 = vmatprep.subr.bf16.mxu0 0
  %2640 = vmatpush2.bf16.msra.mxu0 0
  %2641 = vmatprep.subr.bf16.mxu0 0
  %2642 = vmatpush2.bf16.msra.mxu0 0
  %2643 = vmatprep.subr.bf16.mxu0 0
  %2644 = vmatpush2.bf16.msra.mxu0 0
  %2645 = vmatprep.subr.bf16.mxu0 0
  %2646 = vmatpush2.bf16.msra.mxu0 0
  %2647 = vmatprep.subr.bf16.mxu0 0
  %2648 = vmatpush2.bf16.msra.mxu0 0
  %2649 = vmatprep.mubr.bf16.mxu0 0
  %2650 = vmatmul.mubr.bf16.gmra.mxu0 %v2575
  %v2651 = vpop.f32.mrf.mxu0
  %v2652 = vadd.f32 0.0, %v2651
  %v2653 = vpop.f32.mrf.mxu0
  %v2654 = vadd.f32 0.0, %v2653
  %v2655 = vpop.f32.mrf.mxu0
  %v2656 = vpop.f32.mrf.mxu0
  %2657 = vdwg.mxu0
  %v2658 = vadd.f32 %v2571, %v2611
  %v2659 = vadd.f32 %v2572, %v2613
  %v2660 = vadd.f32 %v2573, %v2652
  %v2661 = vadd.f32 %v2574, %v2654
  %v2662 = vxor.u32 %v2658, 2147483648
  %v2663 = vxor.u32 %v2659, 2147483648
  %v2664 = vxor.u32 %v2661, 2147483648
  %v2665 = vmul.f32 %v2662, 1.442695
  %v2666 = vpow.pop %v2665
  %v2667 = vmul.f32 %v2663, 1.442695
  %v2668 = vpow.pop %v2667
  %v2669 = vmul.f32 %v2664, 1.442695
  %v2670 = vpow.pop %v2669
  %v2671 = vadd.f32 %v2666, 1.0
  %v2672 = vadd.f32 %v2668, 1.0
  %v2673 = vadd.f32 %v2670, 1.0
  %v2674 = vrcp.pop %v2671
  %v2675 = vmul.f32 1.0, %v2674
  %v2676 = vrcp.pop %v2672
  %v2677 = vmul.f32 1.0, %v2676
  %v2678 = vrcp.pop %v2673
  %v2679 = vmul.f32 1.0, %v2678
  %v2680 = vtanh.pop %v2660
  %v2681 = vmul.f32 %v2677, %v2568
  %v2682 = vmul.f32 %v2675, %v2680
  %v2683 = vadd.f32 %v2681, %v2682
  %v2684 = vtanh.pop %v2683
  %v2685 = vmul.f32 %v2679, %v2684
  %v2686 = vld [vmem:[#allocation3 + $0xc0] sm:$0xff]
  %v2687 = vld [vmem:[#allocation3 + $0xc8] sm:$0xff]
  %v2688 = vld [vmem:[#allocation3 + $0xd0] sm:$0xff]
  %v2689 = vld [vmem:[#allocation3 + $0xd8] sm:$0xff]
  %v2690 = vpack.c.bf16 %v2685, %v2685
  %2691 = vmatprep.subr.bf16.mxu0 %v1966
  %2692 = vmatpush1.bf16.msra.mxu0 %v1965
  %2693 = vmatprep.subr.bf16.mxu0 %v1962
  %2694 = vmatpush1.bf16.msra.mxu0 %v1961
  %2695 = vmatprep.subr.bf16.mxu0 %v1958
  %2696 = vmatpush1.bf16.msra.mxu0 %v1957
  %2697 = vmatprep.subr.bf16.mxu0 %v1954
  %2698 = vmatpush1.bf16.msra.mxu0 %v1953
  %2699 = vmatprep.subr.bf16.mxu0 %v1950
  %2700 = vmatpush1.bf16.msra.mxu0 %v1949
  %2701 = vmatprep.subr.bf16.mxu0 %v1946
  %2702 = vmatpush1.bf16.msra.mxu0 %v1945
  %2703 = vmatprep.subr.bf16.mxu0 %v1942
  %2704 = vmatpush1.bf16.msra.mxu0 %v1941
  %2705 = vmatprep.subr.bf16.mxu0 %v1938
  %2706 = vmatpush1.bf16.msra.mxu0 %v1937
  %2707 = vmatprep.subr.bf16.mxu0 0
  %2708 = vmatpush2.bf16.msra.mxu0 0
  %2709 = vmatprep.subr.bf16.mxu0 0
  %2710 = vmatpush2.bf16.msra.mxu0 0
  %2711 = vmatprep.subr.bf16.mxu0 0
  %2712 = vmatpush2.bf16.msra.mxu0 0
  %2713 = vmatprep.subr.bf16.mxu0 0
  %2714 = vmatpush2.bf16.msra.mxu0 0
  %2715 = vmatprep.subr.bf16.mxu0 0
  %2716 = vmatpush2.bf16.msra.mxu0 0
  %2717 = vmatprep.subr.bf16.mxu0 0
  %2718 = vmatpush2.bf16.msra.mxu0 0
  %2719 = vmatprep.subr.bf16.mxu0 0
  %2720 = vmatpush2.bf16.msra.mxu0 0
  %2721 = vmatprep.subr.bf16.mxu0 0
  %2722 = vmatpush2.bf16.msra.mxu0 0
  %2723 = vmatprep.mubr.bf16.mxu0 0
  %2724 = vmatmul.mubr.bf16.gmra.mxu0 %v2690
  %v2725 = vpop.f32.mrf.mxu0
  %v2726 = vadd.f32 0.0, %v2725
  %v2727 = vpop.f32.mrf.mxu0
  %v2728 = vadd.f32 0.0, %v2727
  %v2729 = vpop.f32.mrf.mxu0
  %v2730 = vpop.f32.mrf.mxu0
  %2731 = vdwg.mxu0
  %2732 = vmatprep.subr.bf16.mxu0 %v1968
  %2733 = vmatpush1.bf16.msra.mxu0 %v1967
  %2734 = vmatprep.subr.bf16.mxu0 %v1964
  %2735 = vmatpush1.bf16.msra.mxu0 %v1963
  %2736 = vmatprep.subr.bf16.mxu0 %v1960
  %2737 = vmatpush1.bf16.msra.mxu0 %v1959
  %2738 = vmatprep.subr.bf16.mxu0 %v1956
  %2739 = vmatpush1.bf16.msra.mxu0 %v1955
  %2740 = vmatprep.subr.bf16.mxu0 %v1952
  %2741 = vmatpush1.bf16.msra.mxu0 %v1951
  %2742 = vmatprep.subr.bf16.mxu0 %v1948
  %2743 = vmatpush1.bf16.msra.mxu0 %v1947
  %2744 = vmatprep.subr.bf16.mxu0 %v1944
  %2745 = vmatpush1.bf16.msra.mxu0 %v1943
  %2746 = vmatprep.subr.bf16.mxu0 %v1940
  %2747 = vmatpush1.bf16.msra.mxu0 %v1939
  %2748 = vmatprep.subr.bf16.mxu0 0
  %2749 = vmatpush2.bf16.msra.mxu0 0
  %2750 = vmatprep.subr.bf16.mxu0 0
  %2751 = vmatpush2.bf16.msra.mxu0 0
  %2752 = vmatprep.subr.bf16.mxu0 0
  %2753 = vmatpush2.bf16.msra.mxu0 0
  %2754 = vmatprep.subr.bf16.mxu0 0
  %2755 = vmatpush2.bf16.msra.mxu0 0
  %2756 = vmatprep.subr.bf16.mxu0 0
  %2757 = vmatpush2.bf16.msra.mxu0 0
  %2758 = vmatprep.subr.bf16.mxu0 0
  %2759 = vmatpush2.bf16.msra.mxu0 0
  %2760 = vmatprep.subr.bf16.mxu0 0
  %2761 = vmatpush2.bf16.msra.mxu0 0
  %2762 = vmatprep.subr.bf16.mxu0 0
  %2763 = vmatpush2.bf16.msra.mxu0 0
  %2764 = vmatprep.mubr.bf16.mxu0 0
  %2765 = vmatmul.mubr.bf16.gmra.mxu0 %v2690
  %v2766 = vpop.f32.mrf.mxu0
  %v2767 = vadd.f32 0.0, %v2766
  %v2768 = vpop.f32.mrf.mxu0
  %v2769 = vadd.f32 0.0, %v2768
  %v2770 = vpop.f32.mrf.mxu0
  %v2771 = vpop.f32.mrf.mxu0
  %2772 = vdwg.mxu0
  %v2773 = vadd.f32 %v2686, %v2726
  %v2774 = vadd.f32 %v2687, %v2728
  %v2775 = vadd.f32 %v2688, %v2767
  %v2776 = vadd.f32 %v2689, %v2769
  %v2777 = vxor.u32 %v2773, 2147483648
  %v2778 = vxor.u32 %v2774, 2147483648
  %v2779 = vxor.u32 %v2776, 2147483648
  %v2780 = vmul.f32 %v2777, 1.442695
  %v2781 = vpow.pop %v2780
  %v2782 = vmul.f32 %v2778, 1.442695
  %v2783 = vpow.pop %v2782
  %v2784 = vmul.f32 %v2779, 1.442695
  %v2785 = vpow.pop %v2784
  %v2786 = vadd.f32 %v2781, 1.0
  %v2787 = vadd.f32 %v2783, 1.0
  %v2788 = vadd.f32 %v2785, 1.0
  %v2789 = vrcp.pop %v2786
  %v2790 = vmul.f32 1.0, %v2789
  %v2791 = vrcp.pop %v2787
  %v2792 = vmul.f32 1.0, %v2791
  %v2793 = vrcp.pop %v2788
  %v2794 = vmul.f32 1.0, %v2793
  %v2795 = vtanh.pop %v2775
  %v2796 = vmul.f32 %v2792, %v2683
  %v2797 = vmul.f32 %v2790, %v2795
  %v2798 = vadd.f32 %v2796, %v2797
  %v2799 = vtanh.pop %v2798
  %v2800 = vmul.f32 %v2794, %v2799
  %v2801 = vld [vmem:[#allocation3 + $0xe0] sm:$0xff]
  %v2802 = vld [vmem:[#allocation3 + $0xe8] sm:$0xff]
  %v2803 = vld [vmem:[#allocation3 + $0xf0] sm:$0xff]
  %v2804 = vld [vmem:[#allocation3 + $0xf8] sm:$0xff]
  %v2805 = vpack.c.bf16 %v2800, %v2800
  %2806 = vmatprep.subr.bf16.mxu0 %v1966
  %2807 = vmatpush1.bf16.msra.mxu0 %v1965
  %2808 = vmatprep.subr.bf16.mxu0 %v1962
  %2809 = vmatpush1.bf16.msra.mxu0 %v1961
  %2810 = vmatprep.subr.bf16.mxu0 %v1958
  %2811 = vmatpush1.bf16.msra.mxu0 %v1957
  %2812 = vmatprep.subr.bf16.mxu0 %v1954
  %2813 = vmatpush1.bf16.msra.mxu0 %v1953
  %2814 = vmatprep.subr.bf16.mxu0 %v1950
  %2815 = vmatpush1.bf16.msra.mxu0 %v1949
  %2816 = vmatprep.subr.bf16.mxu0 %v1946
  %2817 = vmatpush1.bf16.msra.mxu0 %v1945
  %2818 = vmatprep.subr.bf16.mxu0 %v1942
  %2819 = vmatpush1.bf16.msra.mxu0 %v1941
  %2820 = vmatprep.subr.bf16.mxu0 %v1938
  %2821 = vmatpush1.bf16.msra.mxu0 %v1937
  %2822 = vmatprep.subr.bf16.mxu0 0
  %2823 = vmatpush2.bf16.msra.mxu0 0
  %2824 = vmatprep.subr.bf16.mxu0 0
  %2825 = vmatpush2.bf16.msra.mxu0 0
  %2826 = vmatprep.subr.bf16.mxu0 0
  %2827 = vmatpush2.bf16.msra.mxu0 0
  %2828 = vmatprep.subr.bf16.mxu0 0
  %2829 = vmatpush2.bf16.msra.mxu0 0
  %2830 = vmatprep.subr.bf16.mxu0 0
  %2831 = vmatpush2.bf16.msra.mxu0 0
  %2832 = vmatprep.subr.bf16.mxu0 0
  %2833 = vmatpush2.bf16.msra.mxu0 0
  %2834 = vmatprep.subr.bf16.mxu0 0
  %2835 = vmatpush2.bf16.msra.mxu0 0
  %2836 = vmatprep.subr.bf16.mxu0 0
  %2837 = vmatpush2.bf16.msra.mxu0 0
  %2838 = vmatprep.mubr.bf16.mxu0 0
  %2839 = vmatmul.mubr.bf16.gmra.mxu0 %v2805
  %v2840 = vpop.f32.mrf.mxu0
  %v2841 = vadd.f32 0.0, %v2840
  %v2842 = vpop.f32.mrf.mxu0
  %v2843 = vadd.f32 0.0, %v2842
  %v2844 = vpop.f32.mrf.mxu0
  %v2845 = vpop.f32.mrf.mxu0
  %2846 = vdwg.mxu0
  %2847 = vmatprep.subr.bf16.mxu0 %v1968
  %2848 = vmatpush1.bf16.msra.mxu0 %v1967
  %2849 = vmatprep.subr.bf16.mxu0 %v1964
  %2850 = vmatpush1.bf16.msra.mxu0 %v1963
  %2851 = vmatprep.subr.bf16.mxu0 %v1960
  %2852 = vmatpush1.bf16.msra.mxu0 %v1959
  %2853 = vmatprep.subr.bf16.mxu0 %v1956
  %2854 = vmatpush1.bf16.msra.mxu0 %v1955
  %2855 = vmatprep.subr.bf16.mxu0 %v1952
  %2856 = vmatpush1.bf16.msra.mxu0 %v1951
  %2857 = vmatprep.subr.bf16.mxu0 %v1948
  %2858 = vmatpush1.bf16.msra.mxu0 %v1947
  %2859 = vmatprep.subr.bf16.mxu0 %v1944
  %2860 = vmatpush1.bf16.msra.mxu0 %v1943
  %2861 = vmatprep.subr.bf16.mxu0 %v1940
  %2862 = vmatpush1.bf16.msra.mxu0 %v1939
  %2863 = vmatprep.subr.bf16.mxu0 0
  %2864 = vmatpush2.bf16.msra.mxu0 0
  %2865 = vmatprep.subr.bf16.mxu0 0
  %2866 = vmatpush2.bf16.msra.mxu0 0
  %2867 = vmatprep.subr.bf16.mxu0 0
  %2868 = vmatpush2.bf16.msra.mxu0 0
  %2869 = vmatprep.subr.bf16.mxu0 0
  %2870 = vmatpush2.bf16.msra.mxu0 0
  %2871 = vmatprep.subr.bf16.mxu0 0
  %2872 = vmatpush2.bf16.msra.mxu0 0
  %2873 = vmatprep.subr.bf16.mxu0 0
  %2874 = vmatpush2.bf16.msra.mxu0 0
  %2875 = vmatprep.subr.bf16.mxu0 0
  %2876 = vmatpush2.bf16.msra.mxu0 0
  %2877 = vmatprep.subr.bf16.mxu0 0
  %2878 = vmatpush2.bf16.msra.mxu0 0
  %2879 = vmatprep.mubr.bf16.mxu0 0
  %2880 = vmatmul.mubr.bf16.gmra.mxu0 %v2805
  %v2881 = vpop.f32.mrf.mxu0
  %v2882 = vadd.f32 0.0, %v2881
  %v2883 = vpop.f32.mrf.mxu0
  %v2884 = vadd.f32 0.0, %v2883
  %v2885 = vpop.f32.mrf.mxu0
  %v2886 = vpop.f32.mrf.mxu0
  %2887 = vdwg.mxu0
  %v2888 = vadd.f32 %v2801, %v2841
  %v2889 = vadd.f32 %v2802, %v2843
  %v2890 = vadd.f32 %v2803, %v2882
  %v2891 = vadd.f32 %v2804, %v2884
  %v2892 = vxor.u32 %v2888, 2147483648
  %v2893 = vxor.u32 %v2889, 2147483648
  %v2894 = vxor.u32 %v2891, 2147483648
  %v2895 = vmul.f32 %v2892, 1.442695
  %v2896 = vpow.pop %v2895
  %v2897 = vmul.f32 %v2893, 1.442695
  %v2898 = vpow.pop %v2897
  %v2899 = vmul.f32 %v2894, 1.442695
  %v2900 = vpow.pop %v2899
  %v2901 = vadd.f32 %v2896, 1.0
  %v2902 = vadd.f32 %v2898, 1.0
  %v2903 = vadd.f32 %v2900, 1.0
  %v2904 = vrcp.pop %v2901
  %v2905 = vmul.f32 1.0, %v2904
  %v2906 = vrcp.pop %v2902
  %v2907 = vmul.f32 1.0, %v2906
  %v2908 = vrcp.pop %v2903
  %v2909 = vmul.f32 1.0, %v2908
  %v2910 = vtanh.pop %v2890
  %v2911 = vmul.f32 %v2907, %v2798
  %v2912 = vmul.f32 %v2905, %v2910
  %v2913 = vadd.f32 %v2911, %v2912
  %v2914 = vtanh.pop %v2913
  %v2915 = vmul.f32 %v2909, %v2914
  %v2916 = vpack.c.bf16 %v2915, %v2915
  %v2917 = vld [vmem:[%s7] sm:$0xf]
  %v2918 = vld [vmem:[%s7 + $0x4] sm:$0xf]
  %v2919 = vld [vmem:[%s7 + $0x8] sm:$0xf]
  %v2920 = vld [vmem:[%s7 + $0xc] sm:$0xf]
  %v2921 = vld [vmem:[%s7 + $0x10] sm:$0xf]
  %v2922 = vld [vmem:[%s7 + $0x14] sm:$0xf]
  %v2923 = vld [vmem:[%s7 + $0x18] sm:$0xf]
  %v2924 = vld [vmem:[%s7 + $0x1c] sm:$0xf]
  %v2925 = vld [vmem:[%s7 + $0x20] sm:$0xf]
  %v2926 = vld [vmem:[%s7 + $0x24] sm:$0xf]
  %v2927 = vld [vmem:[%s7 + $0x28] sm:$0xf]
  %v2928 = vld [vmem:[%s7 + $0x2c] sm:$0xf]
  %v2929 = vld [vmem:[%s7 + $0x30] sm:$0xf]
  %v2930 = vld [vmem:[%s7 + $0x34] sm:$0xf]
  %v2931 = vld [vmem:[%s7 + $0x38] sm:$0xf]
  %v2932 = vld [vmem:[%s7 + $0x3c] sm:$0xf]
  %v2933 = vld [vmem:[%s8] sm:$0x1]
  %v2935 = vlaneseq
  %v2936 = vshrl.u32 %v2935, 7
  %v2937 = vsub.s32 0, %v2936
  %v2938 = vrot.slane %v2933, %v2937
  %v2956 = vunpack.c.l.b16 %v2917
  %v2957 = vunpack.c.l.b16 %v2918
  %v2958 = vunpack.c.l.b16 %v2919
  %v2959 = vunpack.c.l.b16 %v2920
  %v2960 = vunpack.c.l.b16 %v2921
  %v2961 = vunpack.c.l.b16 %v2922
  %v2962 = vunpack.c.l.b16 %v2923
  %v2963 = vunpack.c.l.b16 %v2924
  %v2964 = vunpack.c.l.b16 %v2925
  %v2965 = vunpack.c.l.b16 %v2926
  %v2966 = vunpack.c.l.b16 %v2927
  %v2967 = vunpack.c.l.b16 %v2928
  %v2968 = vunpack.c.l.b16 %v2929
  %v2969 = vunpack.c.l.b16 %v2930
  %v2970 = vunpack.c.l.b16 %v2931
  %v2971 = vunpack.c.l.b16 %v2932
  %v2972 = vpack.c.b16 %v2957, %v2956
  %v2973 = vpack.c.b16 %v2959, %v2958
  %v2974 = vpack.c.b16 %v2961, %v2960
  %v2975 = vpack.c.b16 %v2963, %v2962
  %v2976 = vpack.c.b16 %v2965, %v2964
  %v2977 = vpack.c.b16 %v2967, %v2966
  %v2978 = vpack.c.b16 %v2969, %v2968
  %v2979 = vpack.c.b16 %v2971, %v2970
  %2988 = vmatprep.subr.bf16.mxu0 0
  %2989 = vmatpush1.bf16.msra.mxu0 %v2979
  %2990 = vmatprep.subr.bf16.mxu0 0
  %2991 = vmatpush1.bf16.msra.mxu0 %v2978
  %2992 = vmatprep.subr.bf16.mxu0 0
  %2993 = vmatpush1.bf16.msra.mxu0 %v2977
  %2994 = vmatprep.subr.bf16.mxu0 0
  %2995 = vmatpush1.bf16.msra.mxu0 %v2976
  %2996 = vmatprep.subr.bf16.mxu0 0
  %2997 = vmatpush1.bf16.msra.mxu0 %v2975
  %2998 = vmatprep.subr.bf16.mxu0 0
  %2999 = vmatpush1.bf16.msra.mxu0 %v2974
  %3000 = vmatprep.subr.bf16.mxu0 0
  %3001 = vmatpush1.bf16.msra.mxu0 %v2973
  %3002 = vmatprep.subr.bf16.mxu0 0
  %3003 = vmatpush1.bf16.msra.mxu0 %v2972
  %3004 = vmatprep.subr.bf16.mxu0 0
  %3005 = vmatpush2.bf16.msra.mxu0 0
  %3006 = vmatprep.subr.bf16.mxu0 0
  %3007 = vmatpush2.bf16.msra.mxu0 0
  %3008 = vmatprep.subr.bf16.mxu0 0
  %3009 = vmatpush2.bf16.msra.mxu0 0
  %3010 = vmatprep.subr.bf16.mxu0 0
  %3011 = vmatpush2.bf16.msra.mxu0 0
  %3012 = vmatprep.subr.bf16.mxu0 0
  %3013 = vmatpush2.bf16.msra.mxu0 0
  %3014 = vmatprep.subr.bf16.mxu0 0
  %3015 = vmatpush2.bf16.msra.mxu0 0
  %3016 = vmatprep.subr.bf16.mxu0 0
  %3017 = vmatpush2.bf16.msra.mxu0 0
  %3018 = vmatprep.subr.bf16.mxu0 0
  %3019 = vmatpush2.bf16.msra.mxu0 0
  %3020 = vmatprep.mubr.bf16.mxu0 0
  %3021 = vmatmul.mubr.bf16.gmra.mxu0 %v2916
  %v3022 = vpop.f32.mrf.mxu0
  %v3023 = vadd.f32 %v2938, %v3022
  %v3024 = vpop.f32.mrf.mxu0
  %v3025 = vpop.f32.mrf.mxu0
  %v3026 = vpop.f32.mrf.mxu0
  %3027 = vdwg.mxu0
  %vm3028 = vcmask 64512
  %v3029 = vsel %vm3028, %v3023, -inf
  %3030 = vmax.xlane.f32.xlu0 %v3029
  %v3031 = vpop.xlane.xlu0 %3030
  %v3032 = vsub.f32 %v3023, %v3031
  %v3033 = vmul.f32 %v3032, 1.442695
  %v3034 = vpow.pop %v3033
  %v3035 = vsel %vm3028, %v3034, 0.0
  %3036 = vadd.xlane.f32.xlu0 %v3035
  %v3037 = vpop.xlane.xlu0 %3036
  %v3038 = vrcp.pop %v3037
  %v3039 = vmul.f32 %v3034, %v3038
  %3040 = vst.msk [vmem:[%s9] sm:$0xff] %vm3028, %v3039
  // Predicated region
  $region38: #{rnn_forward.1} parent=0 // pred_check
    _
  $region39: #{rnn_forward.1} parent=0 // pred_check_branch
    %3042 = sbr.rel (0) target = $region41
  $region40: #{rnn_forward.1} parent=0 // pred_region
    _
  $region41: #{rnn_forward.1} parent=0 // pred_fallthru
    _
  // Predicated region
  $region42: #{rnn_forward.1} parent=0 // pred_check
    _
  $region43: #{rnn_forward.1} parent=0 // pred_check_branch
    %3044 = sbr.rel (0) target = $region45
  $region44: #{rnn_forward.1} parent=0 // pred_region
    _
  $region45: #{rnn_forward.1} parent=0 // pred_fallthru
    _

</llo_original>
